<compile_context>
chip_gen: v7x
topology: tpu7x:2x2x1
jax: 0.10.0
libtpu: 0.0.40
codegen_flags: <defaults>
</compile_context>

<pallas_src>
import functools

import numpy as np
import jax
import jax.numpy as jnp
from jax.experimental import pallas as pl
from jax.experimental.pallas import tpu as pltpu

HIDDEN = 64
NUM_LAYERS = 3
INPUT_SIZE = 1
OUTPUT_SIZE = 1
D_PAD = 8  # pad the 1-wide input feature dim to 8 lanes for the MXU


# ---------------------------------------------------------------------------
# Single fused kernel: 3 LSTM layers + attention pooling + MLP head.
# ---------------------------------------------------------------------------
def fused_rnn_kernel(x_ref,
                     wih0_ref, whh0_ref, b0_ref,
                     wih1_ref, whh1_ref, b1_ref,
                     wih2_ref, whh2_ref, b2_ref,
                     aw1_ref, ab1_ref, aw2_ref,
                     fw1_ref, fb1_ref, fw2_ref, fb2_ref,
                     out_ref, hs_ref, *, T, B):
    H = whh0_ref.shape[0]

    def lstm_cell(g, c):
        # PyTorch gate order i, f, g, o.  i and f activated together as one
        # full 128-lane sigmoid (H=64 -> 2 contiguous 64-lane gates).
        if_act = jax.nn.sigmoid(g[:, :2 * H])
        g_act = jnp.tanh(g[:, 2 * H:3 * H])
        o_act = jax.nn.sigmoid(g[:, 3 * H:])
        c_new = if_act[:, H:] * c + if_act[:, :H] * g_act
        h_new = o_act * jnp.tanh(c_new)
        return h_new, c_new

    def run_hidden_layer(inp_flat, wih_ref, whh_ref, b_ref):
        # Batched, time-independent input projection with the bias folded in:
        # one (T*B, Din) @ (Din, 4H) MXU op, off the recurrent critical path.
        gates_x = (jnp.dot(inp_flat, wih_ref[...],
                           preferred_element_type=jnp.float32) + b_ref[...])
        whh = whh_ref[...]
        h = jnp.zeros((B, H), jnp.float32)   # h0 = 0
        c = jnp.zeros((B, H), jnp.float32)   # c0 = 0
        for t in range(T):  # fully unrolled (static, small T)
            g = gates_x[t * B:(t + 1) * B, :] + jnp.dot(
                h, whh, preferred_element_type=jnp.float32)      # (B, 4H)
            h, c = lstm_cell(g, c)
            # Stash h_t so the next layer can batch its input projection.
            hs_ref[t * B:(t + 1) * B, :] = h

    run_hidden_layer(x_ref[...], wih0_ref, whh0_ref, b0_ref)
    # TODO(synk): inter-layer dropout (p=0.2) is training-only; identity at inference.
    run_hidden_layer(hs_ref[...], wih1_ref, whh1_ref, b1_ref)

    # ---- last layer, with the attention score projection fused into the loop ----
    gates_x = (jnp.dot(hs_ref[...], wih2_ref[...],
                       preferred_element_type=jnp.float32) + b2_ref[...])
    whh = whh2_ref[...]
    aw1 = aw1_ref[...]           # (H, H)
    ab1 = ab1_ref[...]           # (1, H)
    aw2 = aw2_ref[...]           # (1, H) row vector -> VPU multiply + lane reduce
    h = jnp.zeros((B, H), jnp.float32)
    c = jnp.zeros((B, H), jnp.float32)
    hs_last = []
    scores = []
    for t in range(T):
        g = gates_x[t * B:(t + 1) * B, :] + jnp.dot(
            h, whh, preferred_element_type=jnp.float32)          # (B, 4H)
        h, c = lstm_cell(g, c)
        hs_last.append(h)
        # Attention score for this timestep: depends only on h_t, so it is off
        # the recurrent dependence chain and overlaps with step t+1's matmul.
        a_t = jnp.tanh(jnp.dot(h, aw1, preferred_element_type=jnp.float32) + ab1)
        scores.append(jnp.sum(a_t * aw2, axis=-1, keepdims=True))  # (B, 1)

    # ---- softmax over time + weighted sum (context) ----
    m = scores[0]
    for t in range(1, T):
        m = jnp.maximum(m, scores[t])
    denom = jnp.zeros((B, 1), jnp.float32)
    ctx = jnp.zeros((B, H), jnp.float32)
    for t in range(T):
        e = jnp.exp(scores[t] - m)
        denom = denom + e
        ctx = ctx + e * hs_last[t]
    ctx = ctx / denom                                             # (B, H)

    # ---- fc head: Linear -> ReLU -> (Dropout: identity) -> Linear ----
    h1 = jnp.maximum(
        jnp.dot(ctx, fw1_ref[...], preferred_element_type=jnp.float32)
        + fb1_ref[...], 0.0)
    out_ref[...] = (jnp.dot(h1, fw2_ref[...], preferred_element_type=jnp.float32)
                    + fb2_ref[...])


# ---------------------------------------------------------------------------
# Wrapper: layout prep in plain JAX, single pallas_call.
# ---------------------------------------------------------------------------
def rnn_forward(x_btd, params):
    # x_btd: (B, T, input_size)  -- PyTorch batch_first layout
    B, T, d_in = x_btd.shape
    x_tm = jnp.transpose(x_btd, (1, 0, 2)).astype(jnp.float32)     # (T, B, D)
    if d_in < D_PAD:  # zero-pad feature dim; layer-0 weights are padded to match
        x_tm = jnp.pad(x_tm, ((0, 0), (0, 0), (0, D_PAD - d_in)))
    x_flat = x_tm.reshape(T * B, D_PAD)                            # (T*B, D_PAD)

    args = (x_flat,
            params["wih_0"], params["whh_0"], params["b_0"],
            params["wih_1"], params["whh_1"], params["b_1"],
            params["wih_2"], params["whh_2"], params["b_2"],
            params["attn_w1"], params["attn_b1"],
            params["attn_w2"].reshape(1, HIDDEN),                  # row vector for VPU reduce
            params["fc_w1"], params["fc_b1"],
            params["fc_w2"], params["fc_b2"])

    kernel = functools.partial(fused_rnn_kernel, T=T, B=B)
    # TODO(synk): for large serving batches on v7x, shard the batch over the two
    # TensorCores (parallel batch grid axis / core_map); B=2 here so single-core.
    return pl.pallas_call(
        kernel,
        out_shape=jax.ShapeDtypeStruct((B, OUTPUT_SIZE), jnp.float32),
        in_specs=[pl.BlockSpec(memory_space=pltpu.MemorySpace.VMEM)
                  for _ in args],
        out_specs=pl.BlockSpec(memory_space=pltpu.MemorySpace.VMEM),
        scratch_shapes=[pltpu.VMEM((T * B, HIDDEN), jnp.float32)],
    )(*args)


# ---------------------------------------------------------------------------
# Pure-JAX reference (for correctness checking only).
# ---------------------------------------------------------------------------
def ref_lstm_layer(x_tm, wih_t, whh_t, b):
    T, B, _ = x_tm.shape
    H = whh_t.shape[0]

    def step(carry, x_t):
        h, c = carry
        gates = x_t @ wih_t + h @ whh_t + b
        i = jax.nn.sigmoid(gates[:, :H])
        f = jax.nn.sigmoid(gates[:, H:2 * H])
        g = jnp.tanh(gates[:, 2 * H:3 * H])
        o = jax.nn.sigmoid(gates[:, 3 * H:])
        c = f * c + i * g
        h = o * jnp.tanh(c)
        return (h, c), h

    init = (jnp.zeros((B, H), jnp.float32), jnp.zeros((B, H), jnp.float32))
    _, hs = jax.lax.scan(step, init, x_tm)
    return hs


def ref_forward(x_btd, params):
    x_tm = jnp.transpose(x_btd, (1, 0, 2)).astype(jnp.float32)
    d_in = x_tm.shape[-1]
    if d_in < D_PAD:
        x_tm = jnp.pad(x_tm, ((0, 0), (0, 0), (0, D_PAD - d_in)))
    h = x_tm
    for l in range(NUM_LAYERS):
        h = ref_lstm_layer(h, params[f"wih_{l}"], params[f"whh_{l}"], params[f"b_{l}"])
    a = jnp.tanh(h @ params["attn_w1"] + params["attn_b1"])        # (T, B, H)
    scores = a @ params["attn_w2"]                                 # (T, B, 1)
    attn = jax.nn.softmax(scores, axis=0)
    ctx = jnp.sum(attn * h, axis=0)                                # (B, H)
    h1 = jnp.maximum(ctx @ params["fc_w1"] + params["fc_b1"], 0.0)
    return h1 @ params["fc_w2"] + params["fc_b2"]


# ---------------------------------------------------------------------------
# Deterministic parameter initialization (shapes follow the PyTorch module).
# ---------------------------------------------------------------------------
def init_params(key):
    H = HIDDEN

    def u(k, shape):
        return jax.random.uniform(k, shape, jnp.float32, -0.1, 0.1)

    params = {}
    for l in range(NUM_LAYERS):
        in_dim = INPUT_SIZE if l == 0 else H
        key, k1, k2, k3, k4 = jax.random.split(key, 5)
        wih = u(k1, (4 * H, in_dim))      # PyTorch weight_ih_l{l}
        whh = u(k2, (4 * H, H))           # PyTorch weight_hh_l{l}
        bih = u(k3, (4 * H,))
        bhh = u(k4, (4 * H,))
        wih_t = wih.T                     # (in_dim, 4H)
        if l == 0 and in_dim < D_PAD:
            wih_t = jnp.pad(wih_t, ((0, D_PAD - in_dim), (0, 0)))
        params[f"wih_{l}"] = wih_t
        params[f"whh_{l}"] = whh.T
        params[f"b_{l}"] = (bih + bhh).reshape(1, 4 * H)

    key, k1, k2, k3 = jax.random.split(key, 4)
    params["attn_w1"] = u(k1, (H, H)).T           # Linear(H, H)
    params["attn_b1"] = u(k2, (1, H))
    params["attn_w2"] = u(k3, (1, H)).T           # Linear(H, 1, bias=False) -> (H, 1)

    key, k1, k2, k3, k4 = jax.random.split(key, 5)
    params["fc_w1"] = u(k1, (H // 2, H)).T        # Linear(H, H//2)
    params["fc_b1"] = u(k2, (1, H // 2))
    params["fc_w2"] = u(k3, (OUTPUT_SIZE, H // 2)).T  # Linear(H//2, 1)
    params["fc_b2"] = u(k4, (1, OUTPUT_SIZE))
    return params, key


if __name__ == "__main__":
    key = jax.random.PRNGKey(0)
    params, key = init_params(key)

    B, T = 2, 8
    key, xk = jax.random.split(key)
    x = jax.random.normal(xk, (B, T, INPUT_SIZE), dtype=jnp.float32)

    out = jax.jit(rnn_forward)(x, params)
    out = jax.block_until_ready(out)

    ref = ref_forward(x, params)
    assert out.shape == (B, OUTPUT_SIZE)
    np.testing.assert_allclose(np.asarray(out), np.asarray(ref),
                               rtol=1e-3, atol=1e-3)
    print("KERNEL_OK")
</pallas_src>

<mosaic_0001>
module attributes {stable_mosaic.version = 11 : i64} {
  func.func @fused_rnn_kernel(%arg0: memref<16x8xf32, #tpu.memory_space<vmem>>, %arg1: memref<8x256xf32, #tpu.memory_space<vmem>>, %arg2: memref<64x256xf32, #tpu.memory_space<vmem>>, %arg3: memref<1x256xf32, #tpu.memory_space<vmem>>, %arg4: memref<64x256xf32, #tpu.memory_space<vmem>>, %arg5: memref<64x256xf32, #tpu.memory_space<vmem>>, %arg6: memref<1x256xf32, #tpu.memory_space<vmem>>, %arg7: memref<64x256xf32, #tpu.memory_space<vmem>>, %arg8: memref<64x256xf32, #tpu.memory_space<vmem>>, %arg9: memref<1x256xf32, #tpu.memory_space<vmem>>, %arg10: memref<64x64xf32, #tpu.memory_space<vmem>>, %arg11: memref<1x64xf32, #tpu.memory_space<vmem>>, %arg12: memref<1x64xf32, #tpu.memory_space<vmem>>, %arg13: memref<64x32xf32, #tpu.memory_space<vmem>>, %arg14: memref<1x32xf32, #tpu.memory_space<vmem>>, %arg15: memref<32x1xf32, #tpu.memory_space<vmem>>, %arg16: memref<1x1xf32, #tpu.memory_space<vmem>>, %arg17: memref<2x1xf32, #tpu.memory_space<vmem>>, %arg18: memref<16x64xf32, #tpu.memory_space<vmem>>) attributes {dimension_semantics = [], scalar_prefetch = 0 : i64, scratch_operands = 1 : i64, tpu.core_type = #tpu.core_type<tc>} {
    %c0 = arith.constant 0 : index
    %c0_0 = arith.constant 0 : index
    %0 = vector.load %arg0[%c0, %c0_0] : memref<16x8xf32, #tpu.memory_space<vmem>>, vector<16x8xf32>
    %c0_1 = arith.constant 0 : index
    %c0_2 = arith.constant 0 : index
    %1 = vector.load %arg1[%c0_1, %c0_2] : memref<8x256xf32, #tpu.memory_space<vmem>>, vector<8x256xf32>
    %cst = arith.constant dense<0.000000e+00> : vector<16x256xf32>
    %2 = tpu.matmul %0, %1, %cst {dimension_numbers = #tpu.dot_dimension_numbers<[1], [0], [0], [1], [0, 0, 1, 1], [], []>} : vector<16x8xf32>, vector<8x256xf32>, vector<16x256xf32> -> vector<16x256xf32>
    %c0_3 = arith.constant 0 : index
    %c0_4 = arith.constant 0 : index
    %3 = vector.load %arg3[%c0_3, %c0_4] : memref<1x256xf32, #tpu.memory_space<vmem>>, vector<1x256xf32>
    %4 = vector.broadcast %3 : vector<1x256xf32> to vector<16x256xf32>
    %5 = arith.addf %2, %4 : vector<16x256xf32>
    %c0_5 = arith.constant 0 : index
    %c0_6 = arith.constant 0 : index
    %6 = vector.load %arg2[%c0_5, %c0_6] : memref<64x256xf32, #tpu.memory_space<vmem>>, vector<64x256xf32>
    %cst_7 = arith.constant 0.000000e+00 : f32
    %7 = vector.broadcast %cst_7 : f32 to vector<2x64xf32>
    %cst_8 = arith.constant 0.000000e+00 : f32
    %8 = vector.broadcast %cst_8 : f32 to vector<2x64xf32>
    %9 = vector.extract_strided_slice %5 {offsets = [0, 0], sizes = [2, 256], strides = [1, 1]} : vector<16x256xf32> to vector<2x256xf32>
    %cst_9 = arith.constant dense<0.000000e+00> : vector<2x256xf32>
    %10 = tpu.matmul %7, %6, %cst_9 {dimension_numbers = #tpu.dot_dimension_numbers<[1], [0], [0], [1], [0, 0, 1, 1], [], []>} : vector<2x64xf32>, vector<64x256xf32>, vector<2x256xf32> -> vector<2x256xf32>
    %11 = arith.addf %9, %10 : vector<2x256xf32>
    %12 = vector.extract_strided_slice %11 {offsets = [0, 0], sizes = [2, 128], strides = [1, 1]} : vector<2x256xf32> to vector<2x128xf32>
    %13 = arith.negf %12 : vector<2x128xf32>
    %14 = math.exp %13 : vector<2x128xf32>
    %cst_10 = arith.constant 1.000000e+00 : f32
    %15 = vector.broadcast %cst_10 : f32 to vector<2x128xf32>
    %16 = arith.addf %15, %14 : vector<2x128xf32>
    %17 = arith.divf %15, %16 : vector<2x128xf32>
    %18 = vector.extract_strided_slice %11 {offsets = [0, 128], sizes = [2, 64], strides = [1, 1]} : vector<2x256xf32> to vector<2x64xf32>
    %19 = math.tanh %18 : vector<2x64xf32>
    %20 = vector.extract_strided_slice %11 {offsets = [0, 192], sizes = [2, 64], strides = [1, 1]} : vector<2x256xf32> to vector<2x64xf32>
    %21 = arith.negf %20 : vector<2x64xf32>
    %22 = math.exp %21 : vector<2x64xf32>
    %cst_11 = arith.constant 1.000000e+00 : f32
    %23 = vector.broadcast %cst_11 : f32 to vector<2x64xf32>
    %24 = arith.addf %23, %22 : vector<2x64xf32>
    %25 = arith.divf %23, %24 : vector<2x64xf32>
    %26 = vector.extract_strided_slice %17 {offsets = [0, 64], sizes = [2, 64], strides = [1, 1]} : vector<2x128xf32> to vector<2x64xf32>
    %27 = arith.mulf %26, %8 : vector<2x64xf32>
    %28 = vector.extract_strided_slice %17 {offsets = [0, 0], sizes = [2, 64], strides = [1, 1]} : vector<2x128xf32> to vector<2x64xf32>
    %29 = arith.mulf %28, %19 : vector<2x64xf32>
    %30 = arith.addf %27, %29 : vector<2x64xf32>
    %31 = math.tanh %30 : vector<2x64xf32>
    %32 = arith.mulf %25, %31 : vector<2x64xf32>
    %c0_12 = arith.constant 0 : index
    %c0_13 = arith.constant 0 : index
    %33 = vector.load %arg18[%c0_12, %c0_13] : memref<16x64xf32, #tpu.memory_space<vmem>>, vector<2x64xf32>
    tpu.vector_store %arg18[%c0_12, %c0_13], %32 {strides = array<i32>} : memref<16x64xf32, #tpu.memory_space<vmem>>, vector<2x64xf32>,
    %34 = vector.extract_strided_slice %5 {offsets = [2, 0], sizes = [2, 256], strides = [1, 1]} : vector<16x256xf32> to vector<2x256xf32>
    %cst_14 = arith.constant dense<0.000000e+00> : vector<2x256xf32>
    %35 = tpu.matmul %32, %6, %cst_14 {dimension_numbers = #tpu.dot_dimension_numbers<[1], [0], [0], [1], [0, 0, 1, 1], [], []>} : vector<2x64xf32>, vector<64x256xf32>, vector<2x256xf32> -> vector<2x256xf32>
    %36 = arith.addf %34, %35 : vector<2x256xf32>
    %37 = vector.extract_strided_slice %36 {offsets = [0, 0], sizes = [2, 128], strides = [1, 1]} : vector<2x256xf32> to vector<2x128xf32>
    %38 = arith.negf %37 : vector<2x128xf32>
    %39 = math.exp %38 : vector<2x128xf32>
    %cst_15 = arith.constant 1.000000e+00 : f32
    %40 = vector.broadcast %cst_15 : f32 to vector<2x128xf32>
    %41 = arith.addf %40, %39 : vector<2x128xf32>
    %42 = arith.divf %40, %41 : vector<2x128xf32>
    %43 = vector.extract_strided_slice %36 {offsets = [0, 128], sizes = [2, 64], strides = [1, 1]} : vector<2x256xf32> to vector<2x64xf32>
    %44 = math.tanh %43 : vector<2x64xf32>
    %45 = vector.extract_strided_slice %36 {offsets = [0, 192], sizes = [2, 64], strides = [1, 1]} : vector<2x256xf32> to vector<2x64xf32>
    %46 = arith.negf %45 : vector<2x64xf32>
    %47 = math.exp %46 : vector<2x64xf32>
    %cst_16 = arith.constant 1.000000e+00 : f32
    %48 = vector.broadcast %cst_16 : f32 to vector<2x64xf32>
    %49 = arith.addf %48, %47 : vector<2x64xf32>
    %50 = arith.divf %48, %49 : vector<2x64xf32>
    %51 = vector.extract_strided_slice %42 {offsets = [0, 64], sizes = [2, 64], strides = [1, 1]} : vector<2x128xf32> to vector<2x64xf32>
    %52 = arith.mulf %51, %30 : vector<2x64xf32>
    %53 = vector.extract_strided_slice %42 {offsets = [0, 0], sizes = [2, 64], strides = [1, 1]} : vector<2x128xf32> to vector<2x64xf32>
    %54 = arith.mulf %53, %44 : vector<2x64xf32>
    %55 = arith.addf %52, %54 : vector<2x64xf32>
    %56 = math.tanh %55 : vector<2x64xf32>
    %57 = arith.mulf %50, %56 : vector<2x64xf32>
    %c2 = arith.constant 2 : index
    %c0_17 = arith.constant 0 : index
    %58 = vector.load %arg18[%c2, %c0_17] : memref<16x64xf32, #tpu.memory_space<vmem>>, vector<2x64xf32>
    tpu.vector_store %arg18[%c2, %c0_17], %57 {strides = array<i32>} : memref<16x64xf32, #tpu.memory_space<vmem>>, vector<2x64xf32>,
    %59 = vector.extract_strided_slice %5 {offsets = [4, 0], sizes = [2, 256], strides = [1, 1]} : vector<16x256xf32> to vector<2x256xf32>
    %cst_18 = arith.constant dense<0.000000e+00> : vector<2x256xf32>
    %60 = tpu.matmul %57, %6, %cst_18 {dimension_numbers = #tpu.dot_dimension_numbers<[1], [0], [0], [1], [0, 0, 1, 1], [], []>} : vector<2x64xf32>, vector<64x256xf32>, vector<2x256xf32> -> vector<2x256xf32>
    %61 = arith.addf %59, %60 : vector<2x256xf32>
    %62 = vector.extract_strided_slice %61 {offsets = [0, 0], sizes = [2, 128], strides = [1, 1]} : vector<2x256xf32> to vector<2x128xf32>
    %63 = arith.negf %62 : vector<2x128xf32>
    %64 = math.exp %63 : vector<2x128xf32>
    %cst_19 = arith.constant 1.000000e+00 : f32
    %65 = vector.broadcast %cst_19 : f32 to vector<2x128xf32>
    %66 = arith.addf %65, %64 : vector<2x128xf32>
    %67 = arith.divf %65, %66 : vector<2x128xf32>
    %68 = vector.extract_strided_slice %61 {offsets = [0, 128], sizes = [2, 64], strides = [1, 1]} : vector<2x256xf32> to vector<2x64xf32>
    %69 = math.tanh %68 : vector<2x64xf32>
    %70 = vector.extract_strided_slice %61 {offsets = [0, 192], sizes = [2, 64], strides = [1, 1]} : vector<2x256xf32> to vector<2x64xf32>
    %71 = arith.negf %70 : vector<2x64xf32>
    %72 = math.exp %71 : vector<2x64xf32>
    %cst_20 = arith.constant 1.000000e+00 : f32
    %73 = vector.broadcast %cst_20 : f32 to vector<2x64xf32>
    %74 = arith.addf %73, %72 : vector<2x64xf32>
    %75 = arith.divf %73, %74 : vector<2x64xf32>
    %76 = vector.extract_strided_slice %67 {offsets = [0, 64], sizes = [2, 64], strides = [1, 1]} : vector<2x128xf32> to vector<2x64xf32>
    %77 = arith.mulf %76, %55 : vector<2x64xf32>
    %78 = vector.extract_strided_slice %67 {offsets = [0, 0], sizes = [2, 64], strides = [1, 1]} : vector<2x128xf32> to vector<2x64xf32>
    %79 = arith.mulf %78, %69 : vector<2x64xf32>
    %80 = arith.addf %77, %79 : vector<2x64xf32>
    %81 = math.tanh %80 : vector<2x64xf32>
    %82 = arith.mulf %75, %81 : vector<2x64xf32>
    %c4 = arith.constant 4 : index
    %c0_21 = arith.constant 0 : index
    %83 = vector.load %arg18[%c4, %c0_21] : memref<16x64xf32, #tpu.memory_space<vmem>>, vector<2x64xf32>
    tpu.vector_store %arg18[%c4, %c0_21], %82 {strides = array<i32>} : memref<16x64xf32, #tpu.memory_space<vmem>>, vector<2x64xf32>,
    %84 = vector.extract_strided_slice %5 {offsets = [6, 0], sizes = [2, 256], strides = [1, 1]} : vector<16x256xf32> to vector<2x256xf32>
    %cst_22 = arith.constant dense<0.000000e+00> : vector<2x256xf32>
    %85 = tpu.matmul %82, %6, %cst_22 {dimension_numbers = #tpu.dot_dimension_numbers<[1], [0], [0], [1], [0, 0, 1, 1], [], []>} : vector<2x64xf32>, vector<64x256xf32>, vector<2x256xf32> -> vector<2x256xf32>
    %86 = arith.addf %84, %85 : vector<2x256xf32>
    %87 = vector.extract_strided_slice %86 {offsets = [0, 0], sizes = [2, 128], strides = [1, 1]} : vector<2x256xf32> to vector<2x128xf32>
    %88 = arith.negf %87 : vector<2x128xf32>
    %89 = math.exp %88 : vector<2x128xf32>
    %cst_23 = arith.constant 1.000000e+00 : f32
    %90 = vector.broadcast %cst_23 : f32 to vector<2x128xf32>
    %91 = arith.addf %90, %89 : vector<2x128xf32>
    %92 = arith.divf %90, %91 : vector<2x128xf32>
    %93 = vector.extract_strided_slice %86 {offsets = [0, 128], sizes = [2, 64], strides = [1, 1]} : vector<2x256xf32> to vector<2x64xf32>
    %94 = math.tanh %93 : vector<2x64xf32>
    %95 = vector.extract_strided_slice %86 {offsets = [0, 192], sizes = [2, 64], strides = [1, 1]} : vector<2x256xf32> to vector<2x64xf32>
    %96 = arith.negf %95 : vector<2x64xf32>
    %97 = math.exp %96 : vector<2x64xf32>
    %cst_24 = arith.constant 1.000000e+00 : f32
    %98 = vector.broadcast %cst_24 : f32 to vector<2x64xf32>
    %99 = arith.addf %98, %97 : vector<2x64xf32>
    %100 = arith.divf %98, %99 : vector<2x64xf32>
    %101 = vector.extract_strided_slice %92 {offsets = [0, 64], sizes = [2, 64], strides = [1, 1]} : vector<2x128xf32> to vector<2x64xf32>
    %102 = arith.mulf %101, %80 : vector<2x64xf32>
    %103 = vector.extract_strided_slice %92 {offsets = [0, 0], sizes = [2, 64], strides = [1, 1]} : vector<2x128xf32> to vector<2x64xf32>
    %104 = arith.mulf %103, %94 : vector<2x64xf32>
    %105 = arith.addf %102, %104 : vector<2x64xf32>
    %106 = math.tanh %105 : vector<2x64xf32>
    %107 = arith.mulf %100, %106 : vector<2x64xf32>
    %c6 = arith.constant 6 : index
    %c0_25 = arith.constant 0 : index
    %108 = vector.load %arg18[%c6, %c0_25] : memref<16x64xf32, #tpu.memory_space<vmem>>, vector<2x64xf32>
    tpu.vector_store %arg18[%c6, %c0_25], %107 {strides = array<i32>} : memref<16x64xf32, #tpu.memory_space<vmem>>, vector<2x64xf32>,
    %109 = vector.extract_strided_slice %5 {offsets = [8, 0], sizes = [2, 256], strides = [1, 1]} : vector<16x256xf32> to vector<2x256xf32>
    %cst_26 = arith.constant dense<0.000000e+00> : vector<2x256xf32>
    %110 = tpu.matmul %107, %6, %cst_26 {dimension_numbers = #tpu.dot_dimension_numbers<[1], [0], [0], [1], [0, 0, 1, 1], [], []>} : vector<2x64xf32>, vector<64x256xf32>, vector<2x256xf32> -> vector<2x256xf32>
    %111 = arith.addf %109, %110 : vector<2x256xf32>
    %112 = vector.extract_strided_slice %111 {offsets = [0, 0], sizes = [2, 128], strides = [1, 1]} : vector<2x256xf32> to vector<2x128xf32>
    %113 = arith.negf %112 : vector<2x128xf32>
    %114 = math.exp %113 : vector<2x128xf32>
    %cst_27 = arith.constant 1.000000e+00 : f32
    %115 = vector.broadcast %cst_27 : f32 to vector<2x128xf32>
    %116 = arith.addf %115, %114 : vector<2x128xf32>
    %117 = arith.divf %115, %116 : vector<2x128xf32>
    %118 = vector.extract_strided_slice %111 {offsets = [0, 128], sizes = [2, 64], strides = [1, 1]} : vector<2x256xf32> to vector<2x64xf32>
    %119 = math.tanh %118 : vector<2x64xf32>
    %120 = vector.extract_strided_slice %111 {offsets = [0, 192], sizes = [2, 64], strides = [1, 1]} : vector<2x256xf32> to vector<2x64xf32>
    %121 = arith.negf %120 : vector<2x64xf32>
    %122 = math.exp %121 : vector<2x64xf32>
    %cst_28 = arith.constant 1.000000e+00 : f32
    %123 = vector.broadcast %cst_28 : f32 to vector<2x64xf32>
    %124 = arith.addf %123, %122 : vector<2x64xf32>
    %125 = arith.divf %123, %124 : vector<2x64xf32>
    %126 = vector.extract_strided_slice %117 {offsets = [0, 64], sizes = [2, 64], strides = [1, 1]} : vector<2x128xf32> to vector<2x64xf32>
    %127 = arith.mulf %126, %105 : vector<2x64xf32>
    %128 = vector.extract_strided_slice %117 {offsets = [0, 0], sizes = [2, 64], strides = [1, 1]} : vector<2x128xf32> to vector<2x64xf32>
    %129 = arith.mulf %128, %119 : vector<2x64xf32>
    %130 = arith.addf %127, %129 : vector<2x64xf32>
    %131 = math.tanh %130 : vector<2x64xf32>
    %132 = arith.mulf %125, %131 : vector<2x64xf32>
    %c8 = arith.constant 8 : index
    %c0_29 = arith.constant 0 : index
    %133 = vector.load %arg18[%c8, %c0_29] : memref<16x64xf32, #tpu.memory_space<vmem>>, vector<2x64xf32>
    tpu.vector_store %arg18[%c8, %c0_29], %132 {strides = array<i32>} : memref<16x64xf32, #tpu.memory_space<vmem>>, vector<2x64xf32>,
    %134 = vector.extract_strided_slice %5 {offsets = [10, 0], sizes = [2, 256], strides = [1, 1]} : vector<16x256xf32> to vector<2x256xf32>
    %cst_30 = arith.constant dense<0.000000e+00> : vector<2x256xf32>
    %135 = tpu.matmul %132, %6, %cst_30 {dimension_numbers = #tpu.dot_dimension_numbers<[1], [0], [0], [1], [0, 0, 1, 1], [], []>} : vector<2x64xf32>, vector<64x256xf32>, vector<2x256xf32> -> vector<2x256xf32>
    %136 = arith.addf %134, %135 : vector<2x256xf32>
    %137 = vector.extract_strided_slice %136 {offsets = [0, 0], sizes = [2, 128], strides = [1, 1]} : vector<2x256xf32> to vector<2x128xf32>
    %138 = arith.negf %137 : vector<2x128xf32>
    %139 = math.exp %138 : vector<2x128xf32>
    %cst_31 = arith.constant 1.000000e+00 : f32
    %140 = vector.broadcast %cst_31 : f32 to vector<2x128xf32>
    %141 = arith.addf %140, %139 : vector<2x128xf32>
    %142 = arith.divf %140, %141 : vector<2x128xf32>
    %143 = vector.extract_strided_slice %136 {offsets = [0, 128], sizes = [2, 64], strides = [1, 1]} : vector<2x256xf32> to vector<2x64xf32>
    %144 = math.tanh %143 : vector<2x64xf32>
    %145 = vector.extract_strided_slice %136 {offsets = [0, 192], sizes = [2, 64], strides = [1, 1]} : vector<2x256xf32> to vector<2x64xf32>
    %146 = arith.negf %145 : vector<2x64xf32>
    %147 = math.exp %146 : vector<2x64xf32>
    %cst_32 = arith.constant 1.000000e+00 : f32
    %148 = vector.broadcast %cst_32 : f32 to vector<2x64xf32>
    %149 = arith.addf %148, %147 : vector<2x64xf32>
    %150 = arith.divf %148, %149 : vector<2x64xf32>
    %151 = vector.extract_strided_slice %142 {offsets = [0, 64], sizes = [2, 64], strides = [1, 1]} : vector<2x128xf32> to vector<2x64xf32>
    %152 = arith.mulf %151, %130 : vector<2x64xf32>
    %153 = vector.extract_strided_slice %142 {offsets = [0, 0], sizes = [2, 64], strides = [1, 1]} : vector<2x128xf32> to vector<2x64xf32>
    %154 = arith.mulf %153, %144 : vector<2x64xf32>
    %155 = arith.addf %152, %154 : vector<2x64xf32>
    %156 = math.tanh %155 : vector<2x64xf32>
    %157 = arith.mulf %150, %156 : vector<2x64xf32>
    %c10 = arith.constant 10 : index
    %c0_33 = arith.constant 0 : index
    %158 = vector.load %arg18[%c10, %c0_33] : memref<16x64xf32, #tpu.memory_space<vmem>>, vector<2x64xf32>
    tpu.vector_store %arg18[%c10, %c0_33], %157 {strides = array<i32>} : memref<16x64xf32, #tpu.memory_space<vmem>>, vector<2x64xf32>,
    %159 = vector.extract_strided_slice %5 {offsets = [12, 0], sizes = [2, 256], strides = [1, 1]} : vector<16x256xf32> to vector<2x256xf32>
    %cst_34 = arith.constant dense<0.000000e+00> : vector<2x256xf32>
    %160 = tpu.matmul %157, %6, %cst_34 {dimension_numbers = #tpu.dot_dimension_numbers<[1], [0], [0], [1], [0, 0, 1, 1], [], []>} : vector<2x64xf32>, vector<64x256xf32>, vector<2x256xf32> -> vector<2x256xf32>
    %161 = arith.addf %159, %160 : vector<2x256xf32>
    %162 = vector.extract_strided_slice %161 {offsets = [0, 0], sizes = [2, 128], strides = [1, 1]} : vector<2x256xf32> to vector<2x128xf32>
    %163 = arith.negf %162 : vector<2x128xf32>
    %164 = math.exp %163 : vector<2x128xf32>
    %cst_35 = arith.constant 1.000000e+00 : f32
    %165 = vector.broadcast %cst_35 : f32 to vector<2x128xf32>
    %166 = arith.addf %165, %164 : vector<2x128xf32>
    %167 = arith.divf %165, %166 : vector<2x128xf32>
    %168 = vector.extract_strided_slice %161 {offsets = [0, 128], sizes = [2, 64], strides = [1, 1]} : vector<2x256xf32> to vector<2x64xf32>
    %169 = math.tanh %168 : vector<2x64xf32>
    %170 = vector.extract_strided_slice %161 {offsets = [0, 192], sizes = [2, 64], strides = [1, 1]} : vector<2x256xf32> to vector<2x64xf32>
    %171 = arith.negf %170 : vector<2x64xf32>
    %172 = math.exp %171 : vector<2x64xf32>
    %cst_36 = arith.constant 1.000000e+00 : f32
    %173 = vector.broadcast %cst_36 : f32 to vector<2x64xf32>
    %174 = arith.addf %173, %172 : vector<2x64xf32>
    %175 = arith.divf %173, %174 : vector<2x64xf32>
    %176 = vector.extract_strided_slice %167 {offsets = [0, 64], sizes = [2, 64], strides = [1, 1]} : vector<2x128xf32> to vector<2x64xf32>
    %177 = arith.mulf %176, %155 : vector<2x64xf32>
    %178 = vector.extract_strided_slice %167 {offsets = [0, 0], sizes = [2, 64], strides = [1, 1]} : vector<2x128xf32> to vector<2x64xf32>
    %179 = arith.mulf %178, %169 : vector<2x64xf32>
    %180 = arith.addf %177, %179 : vector<2x64xf32>
    %181 = math.tanh %180 : vector<2x64xf32>
    %182 = arith.mulf %175, %181 : vector<2x64xf32>
    %c12 = arith.constant 12 : index
    %c0_37 = arith.constant 0 : index
    %183 = vector.load %arg18[%c12, %c0_37] : memref<16x64xf32, #tpu.memory_space<vmem>>, vector<2x64xf32>
    tpu.vector_store %arg18[%c12, %c0_37], %182 {strides = array<i32>} : memref<16x64xf32, #tpu.memory_space<vmem>>, vector<2x64xf32>,
    %184 = vector.extract_strided_slice %5 {offsets = [14, 0], sizes = [2, 256], strides = [1, 1]} : vector<16x256xf32> to vector<2x256xf32>
    %cst_38 = arith.constant dense<0.000000e+00> : vector<2x256xf32>
    %185 = tpu.matmul %182, %6, %cst_38 {dimension_numbers = #tpu.dot_dimension_numbers<[1], [0], [0], [1], [0, 0, 1, 1], [], []>} : vector<2x64xf32>, vector<64x256xf32>, vector<2x256xf32> -> vector<2x256xf32>
    %186 = arith.addf %184, %185 : vector<2x256xf32>
    %187 = vector.extract_strided_slice %186 {offsets = [0, 0], sizes = [2, 128], strides = [1, 1]} : vector<2x256xf32> to vector<2x128xf32>
    %188 = arith.negf %187 : vector<2x128xf32>
    %189 = math.exp %188 : vector<2x128xf32>
    %cst_39 = arith.constant 1.000000e+00 : f32
    %190 = vector.broadcast %cst_39 : f32 to vector<2x128xf32>
    %191 = arith.addf %190, %189 : vector<2x128xf32>
    %192 = arith.divf %190, %191 : vector<2x128xf32>
    %193 = vector.extract_strided_slice %186 {offsets = [0, 128], sizes = [2, 64], strides = [1, 1]} : vector<2x256xf32> to vector<2x64xf32>
    %194 = math.tanh %193 : vector<2x64xf32>
    %195 = vector.extract_strided_slice %186 {offsets = [0, 192], sizes = [2, 64], strides = [1, 1]} : vector<2x256xf32> to vector<2x64xf32>
    %196 = arith.negf %195 : vector<2x64xf32>
    %197 = math.exp %196 : vector<2x64xf32>
    %cst_40 = arith.constant 1.000000e+00 : f32
    %198 = vector.broadcast %cst_40 : f32 to vector<2x64xf32>
    %199 = arith.addf %198, %197 : vector<2x64xf32>
    %200 = arith.divf %198, %199 : vector<2x64xf32>
    %201 = vector.extract_strided_slice %192 {offsets = [0, 64], sizes = [2, 64], strides = [1, 1]} : vector<2x128xf32> to vector<2x64xf32>
    %202 = arith.mulf %201, %180 : vector<2x64xf32>
    %203 = vector.extract_strided_slice %192 {offsets = [0, 0], sizes = [2, 64], strides = [1, 1]} : vector<2x128xf32> to vector<2x64xf32>
    %204 = arith.mulf %203, %194 : vector<2x64xf32>
    %205 = arith.addf %202, %204 : vector<2x64xf32>
    %206 = math.tanh %205 : vector<2x64xf32>
    %207 = arith.mulf %200, %206 : vector<2x64xf32>
    %c14 = arith.constant 14 : index
    %c0_41 = arith.constant 0 : index
    %208 = vector.load %arg18[%c14, %c0_41] : memref<16x64xf32, #tpu.memory_space<vmem>>, vector<2x64xf32>
    tpu.vector_store %arg18[%c14, %c0_41], %207 {strides = array<i32>} : memref<16x64xf32, #tpu.memory_space<vmem>>, vector<2x64xf32>,
    %c0_42 = arith.constant 0 : index
    %c0_43 = arith.constant 0 : index
    %209 = vector.load %arg18[%c0_42, %c0_43] : memref<16x64xf32, #tpu.memory_space<vmem>>, vector<16x64xf32>
    %c0_44 = arith.constant 0 : index
    %c0_45 = arith.constant 0 : index
    %210 = vector.load %arg4[%c0_44, %c0_45] : memref<64x256xf32, #tpu.memory_space<vmem>>, vector<64x256xf32>
    %cst_46 = arith.constant dense<0.000000e+00> : vector<16x256xf32>
    %211 = tpu.matmul %209, %210, %cst_46 {dimension_numbers = #tpu.dot_dimension_numbers<[1], [0], [0], [1], [0, 0, 1, 1], [], []>} : vector<16x64xf32>, vector<64x256xf32>, vector<16x256xf32> -> vector<16x256xf32>
    %c0_47 = arith.constant 0 : index
    %c0_48 = arith.constant 0 : index
    %212 = vector.load %arg6[%c0_47, %c0_48] : memref<1x256xf32, #tpu.memory_space<vmem>>, vector<1x256xf32>
    %213 = vector.broadcast %212 : vector<1x256xf32> to vector<16x256xf32>
    %214 = arith.addf %211, %213 : vector<16x256xf32>
    %c0_49 = arith.constant 0 : index
    %c0_50 = arith.constant 0 : index
    %215 = vector.load %arg5[%c0_49, %c0_50] : memref<64x256xf32, #tpu.memory_space<vmem>>, vector<64x256xf32>
    %cst_51 = arith.constant 0.000000e+00 : f32
    %216 = vector.broadcast %cst_51 : f32 to vector<2x64xf32>
    %cst_52 = arith.constant 0.000000e+00 : f32
    %217 = vector.broadcast %cst_52 : f32 to vector<2x64xf32>
    %218 = vector.extract_strided_slice %214 {offsets = [0, 0], sizes = [2, 256], strides = [1, 1]} : vector<16x256xf32> to vector<2x256xf32>
    %cst_53 = arith.constant dense<0.000000e+00> : vector<2x256xf32>
    %219 = tpu.matmul %216, %215, %cst_53 {dimension_numbers = #tpu.dot_dimension_numbers<[1], [0], [0], [1], [0, 0, 1, 1], [], []>} : vector<2x64xf32>, vector<64x256xf32>, vector<2x256xf32> -> vector<2x256xf32>
    %220 = arith.addf %218, %219 : vector<2x256xf32>
    %221 = vector.extract_strided_slice %220 {offsets = [0, 0], sizes = [2, 128], strides = [1, 1]} : vector<2x256xf32> to vector<2x128xf32>
    %222 = arith.negf %221 : vector<2x128xf32>
    %223 = math.exp %222 : vector<2x128xf32>
    %cst_54 = arith.constant 1.000000e+00 : f32
    %224 = vector.broadcast %cst_54 : f32 to vector<2x128xf32>
    %225 = arith.addf %224, %223 : vector<2x128xf32>
    %226 = arith.divf %224, %225 : vector<2x128xf32>
    %227 = vector.extract_strided_slice %220 {offsets = [0, 128], sizes = [2, 64], strides = [1, 1]} : vector<2x256xf32> to vector<2x64xf32>
    %228 = math.tanh %227 : vector<2x64xf32>
    %229 = vector.extract_strided_slice %220 {offsets = [0, 192], sizes = [2, 64], strides = [1, 1]} : vector<2x256xf32> to vector<2x64xf32>
    %230 = arith.negf %229 : vector<2x64xf32>
    %231 = math.exp %230 : vector<2x64xf32>
    %cst_55 = arith.constant 1.000000e+00 : f32
    %232 = vector.broadcast %cst_55 : f32 to vector<2x64xf32>
    %233 = arith.addf %232, %231 : vector<2x64xf32>
    %234 = arith.divf %232, %233 : vector<2x64xf32>
    %235 = vector.extract_strided_slice %226 {offsets = [0, 64], sizes = [2, 64], strides = [1, 1]} : vector<2x128xf32> to vector<2x64xf32>
    %236 = arith.mulf %235, %217 : vector<2x64xf32>
    %237 = vector.extract_strided_slice %226 {offsets = [0, 0], sizes = [2, 64], strides = [1, 1]} : vector<2x128xf32> to vector<2x64xf32>
    %238 = arith.mulf %237, %228 : vector<2x64xf32>
    %239 = arith.addf %236, %238 : vector<2x64xf32>
    %240 = math.tanh %239 : vector<2x64xf32>
    %241 = arith.mulf %234, %240 : vector<2x64xf32>
    %c0_56 = arith.constant 0 : index
    %c0_57 = arith.constant 0 : index
    %242 = vector.load %arg18[%c0_56, %c0_57] : memref<16x64xf32, #tpu.memory_space<vmem>>, vector<2x64xf32>
    tpu.vector_store %arg18[%c0_56, %c0_57], %241 {strides = array<i32>} : memref<16x64xf32, #tpu.memory_space<vmem>>, vector<2x64xf32>,
    %243 = vector.extract_strided_slice %214 {offsets = [2, 0], sizes = [2, 256], strides = [1, 1]} : vector<16x256xf32> to vector<2x256xf32>
    %cst_58 = arith.constant dense<0.000000e+00> : vector<2x256xf32>
    %244 = tpu.matmul %241, %215, %cst_58 {dimension_numbers = #tpu.dot_dimension_numbers<[1], [0], [0], [1], [0, 0, 1, 1], [], []>} : vector<2x64xf32>, vector<64x256xf32>, vector<2x256xf32> -> vector<2x256xf32>
    %245 = arith.addf %243, %244 : vector<2x256xf32>
    %246 = vector.extract_strided_slice %245 {offsets = [0, 0], sizes = [2, 128], strides = [1, 1]} : vector<2x256xf32> to vector<2x128xf32>
    %247 = arith.negf %246 : vector<2x128xf32>
    %248 = math.exp %247 : vector<2x128xf32>
    %cst_59 = arith.constant 1.000000e+00 : f32
    %249 = vector.broadcast %cst_59 : f32 to vector<2x128xf32>
    %250 = arith.addf %249, %248 : vector<2x128xf32>
    %251 = arith.divf %249, %250 : vector<2x128xf32>
    %252 = vector.extract_strided_slice %245 {offsets = [0, 128], sizes = [2, 64], strides = [1, 1]} : vector<2x256xf32> to vector<2x64xf32>
    %253 = math.tanh %252 : vector<2x64xf32>
    %254 = vector.extract_strided_slice %245 {offsets = [0, 192], sizes = [2, 64], strides = [1, 1]} : vector<2x256xf32> to vector<2x64xf32>
    %255 = arith.negf %254 : vector<2x64xf32>
    %256 = math.exp %255 : vector<2x64xf32>
    %cst_60 = arith.constant 1.000000e+00 : f32
    %257 = vector.broadcast %cst_60 : f32 to vector<2x64xf32>
    %258 = arith.addf %257, %256 : vector<2x64xf32>
    %259 = arith.divf %257, %258 : vector<2x64xf32>
    %260 = vector.extract_strided_slice %251 {offsets = [0, 64], sizes = [2, 64], strides = [1, 1]} : vector<2x128xf32> to vector<2x64xf32>
    %261 = arith.mulf %260, %239 : vector<2x64xf32>
    %262 = vector.extract_strided_slice %251 {offsets = [0, 0], sizes = [2, 64], strides = [1, 1]} : vector<2x128xf32> to vector<2x64xf32>
    %263 = arith.mulf %262, %253 : vector<2x64xf32>
    %264 = arith.addf %261, %263 : vector<2x64xf32>
    %265 = math.tanh %264 : vector<2x64xf32>
    %266 = arith.mulf %259, %265 : vector<2x64xf32>
    %c2_61 = arith.constant 2 : index
    %c0_62 = arith.constant 0 : index
    %267 = vector.load %arg18[%c2_61, %c0_62] : memref<16x64xf32, #tpu.memory_space<vmem>>, vector<2x64xf32>
    tpu.vector_store %arg18[%c2_61, %c0_62], %266 {strides = array<i32>} : memref<16x64xf32, #tpu.memory_space<vmem>>, vector<2x64xf32>,
    %268 = vector.extract_strided_slice %214 {offsets = [4, 0], sizes = [2, 256], strides = [1, 1]} : vector<16x256xf32> to vector<2x256xf32>
    %cst_63 = arith.constant dense<0.000000e+00> : vector<2x256xf32>
    %269 = tpu.matmul %266, %215, %cst_63 {dimension_numbers = #tpu.dot_dimension_numbers<[1], [0], [0], [1], [0, 0, 1, 1], [], []>} : vector<2x64xf32>, vector<64x256xf32>, vector<2x256xf32> -> vector<2x256xf32>
    %270 = arith.addf %268, %269 : vector<2x256xf32>
    %271 = vector.extract_strided_slice %270 {offsets = [0, 0], sizes = [2, 128], strides = [1, 1]} : vector<2x256xf32> to vector<2x128xf32>
    %272 = arith.negf %271 : vector<2x128xf32>
    %273 = math.exp %272 : vector<2x128xf32>
    %cst_64 = arith.constant 1.000000e+00 : f32
    %274 = vector.broadcast %cst_64 : f32 to vector<2x128xf32>
    %275 = arith.addf %274, %273 : vector<2x128xf32>
    %276 = arith.divf %274, %275 : vector<2x128xf32>
    %277 = vector.extract_strided_slice %270 {offsets = [0, 128], sizes = [2, 64], strides = [1, 1]} : vector<2x256xf32> to vector<2x64xf32>
    %278 = math.tanh %277 : vector<2x64xf32>
    %279 = vector.extract_strided_slice %270 {offsets = [0, 192], sizes = [2, 64], strides = [1, 1]} : vector<2x256xf32> to vector<2x64xf32>
    %280 = arith.negf %279 : vector<2x64xf32>
    %281 = math.exp %280 : vector<2x64xf32>
    %cst_65 = arith.constant 1.000000e+00 : f32
    %282 = vector.broadcast %cst_65 : f32 to vector<2x64xf32>
    %283 = arith.addf %282, %281 : vector<2x64xf32>
    %284 = arith.divf %282, %283 : vector<2x64xf32>
    %285 = vector.extract_strided_slice %276 {offsets = [0, 64], sizes = [2, 64], strides = [1, 1]} : vector<2x128xf32> to vector<2x64xf32>
    %286 = arith.mulf %285, %264 : vector<2x64xf32>
    %287 = vector.extract_strided_slice %276 {offsets = [0, 0], sizes = [2, 64], strides = [1, 1]} : vector<2x128xf32> to vector<2x64xf32>
    %288 = arith.mulf %287, %278 : vector<2x64xf32>
    %289 = arith.addf %286, %288 : vector<2x64xf32>
    %290 = math.tanh %289 : vector<2x64xf32>
    %291 = arith.mulf %284, %290 : vector<2x64xf32>
    %c4_66 = arith.constant 4 : index
    %c0_67 = arith.constant 0 : index
    %292 = vector.load %arg18[%c4_66, %c0_67] : memref<16x64xf32, #tpu.memory_space<vmem>>, vector<2x64xf32>
    tpu.vector_store %arg18[%c4_66, %c0_67], %291 {strides = array<i32>} : memref<16x64xf32, #tpu.memory_space<vmem>>, vector<2x64xf32>,
    %293 = vector.extract_strided_slice %214 {offsets = [6, 0], sizes = [2, 256], strides = [1, 1]} : vector<16x256xf32> to vector<2x256xf32>
    %cst_68 = arith.constant dense<0.000000e+00> : vector<2x256xf32>
    %294 = tpu.matmul %291, %215, %cst_68 {dimension_numbers = #tpu.dot_dimension_numbers<[1], [0], [0], [1], [0, 0, 1, 1], [], []>} : vector<2x64xf32>, vector<64x256xf32>, vector<2x256xf32> -> vector<2x256xf32>
    %295 = arith.addf %293, %294 : vector<2x256xf32>
    %296 = vector.extract_strided_slice %295 {offsets = [0, 0], sizes = [2, 128], strides = [1, 1]} : vector<2x256xf32> to vector<2x128xf32>
    %297 = arith.negf %296 : vector<2x128xf32>
    %298 = math.exp %297 : vector<2x128xf32>
    %cst_69 = arith.constant 1.000000e+00 : f32
    %299 = vector.broadcast %cst_69 : f32 to vector<2x128xf32>
    %300 = arith.addf %299, %298 : vector<2x128xf32>
    %301 = arith.divf %299, %300 : vector<2x128xf32>
    %302 = vector.extract_strided_slice %295 {offsets = [0, 128], sizes = [2, 64], strides = [1, 1]} : vector<2x256xf32> to vector<2x64xf32>
    %303 = math.tanh %302 : vector<2x64xf32>
    %304 = vector.extract_strided_slice %295 {offsets = [0, 192], sizes = [2, 64], strides = [1, 1]} : vector<2x256xf32> to vector<2x64xf32>
    %305 = arith.negf %304 : vector<2x64xf32>
    %306 = math.exp %305 : vector<2x64xf32>
    %cst_70 = arith.constant 1.000000e+00 : f32
    %307 = vector.broadcast %cst_70 : f32 to vector<2x64xf32>
    %308 = arith.addf %307, %306 : vector<2x64xf32>
    %309 = arith.divf %307, %308 : vector<2x64xf32>
    %310 = vector.extract_strided_slice %301 {offsets = [0, 64], sizes = [2, 64], strides = [1, 1]} : vector<2x128xf32> to vector<2x64xf32>
    %311 = arith.mulf %310, %289 : vector<2x64xf32>
    %312 = vector.extract_strided_slice %301 {offsets = [0, 0], sizes = [2, 64], strides = [1, 1]} : vector<2x128xf32> to vector<2x64xf32>
    %313 = arith.mulf %312, %303 : vector<2x64xf32>
    %314 = arith.addf %311, %313 : vector<2x64xf32>
    %315 = math.tanh %314 : vector<2x64xf32>
    %316 = arith.mulf %309, %315 : vector<2x64xf32>
    %c6_71 = arith.constant 6 : index
    %c0_72 = arith.constant 0 : index
    %317 = vector.load %arg18[%c6_71, %c0_72] : memref<16x64xf32, #tpu.memory_space<vmem>>, vector<2x64xf32>
    tpu.vector_store %arg18[%c6_71, %c0_72], %316 {strides = array<i32>} : memref<16x64xf32, #tpu.memory_space<vmem>>, vector<2x64xf32>,
    %318 = vector.extract_strided_slice %214 {offsets = [8, 0], sizes = [2, 256], strides = [1, 1]} : vector<16x256xf32> to vector<2x256xf32>
    %cst_73 = arith.constant dense<0.000000e+00> : vector<2x256xf32>
    %319 = tpu.matmul %316, %215, %cst_73 {dimension_numbers = #tpu.dot_dimension_numbers<[1], [0], [0], [1], [0, 0, 1, 1], [], []>} : vector<2x64xf32>, vector<64x256xf32>, vector<2x256xf32> -> vector<2x256xf32>
    %320 = arith.addf %318, %319 : vector<2x256xf32>
    %321 = vector.extract_strided_slice %320 {offsets = [0, 0], sizes = [2, 128], strides = [1, 1]} : vector<2x256xf32> to vector<2x128xf32>
    %322 = arith.negf %321 : vector<2x128xf32>
    %323 = math.exp %322 : vector<2x128xf32>
    %cst_74 = arith.constant 1.000000e+00 : f32
    %324 = vector.broadcast %cst_74 : f32 to vector<2x128xf32>
    %325 = arith.addf %324, %323 : vector<2x128xf32>
    %326 = arith.divf %324, %325 : vector<2x128xf32>
    %327 = vector.extract_strided_slice %320 {offsets = [0, 128], sizes = [2, 64], strides = [1, 1]} : vector<2x256xf32> to vector<2x64xf32>
    %328 = math.tanh %327 : vector<2x64xf32>
    %329 = vector.extract_strided_slice %320 {offsets = [0, 192], sizes = [2, 64], strides = [1, 1]} : vector<2x256xf32> to vector<2x64xf32>
    %330 = arith.negf %329 : vector<2x64xf32>
    %331 = math.exp %330 : vector<2x64xf32>
    %cst_75 = arith.constant 1.000000e+00 : f32
    %332 = vector.broadcast %cst_75 : f32 to vector<2x64xf32>
    %333 = arith.addf %332, %331 : vector<2x64xf32>
    %334 = arith.divf %332, %333 : vector<2x64xf32>
    %335 = vector.extract_strided_slice %326 {offsets = [0, 64], sizes = [2, 64], strides = [1, 1]} : vector<2x128xf32> to vector<2x64xf32>
    %336 = arith.mulf %335, %314 : vector<2x64xf32>
    %337 = vector.extract_strided_slice %326 {offsets = [0, 0], sizes = [2, 64], strides = [1, 1]} : vector<2x128xf32> to vector<2x64xf32>
    %338 = arith.mulf %337, %328 : vector<2x64xf32>
    %339 = arith.addf %336, %338 : vector<2x64xf32>
    %340 = math.tanh %339 : vector<2x64xf32>
    %341 = arith.mulf %334, %340 : vector<2x64xf32>
    %c8_76 = arith.constant 8 : index
    %c0_77 = arith.constant 0 : index
    %342 = vector.load %arg18[%c8_76, %c0_77] : memref<16x64xf32, #tpu.memory_space<vmem>>, vector<2x64xf32>
    tpu.vector_store %arg18[%c8_76, %c0_77], %341 {strides = array<i32>} : memref<16x64xf32, #tpu.memory_space<vmem>>, vector<2x64xf32>,
    %343 = vector.extract_strided_slice %214 {offsets = [10, 0], sizes = [2, 256], strides = [1, 1]} : vector<16x256xf32> to vector<2x256xf32>
    %cst_78 = arith.constant dense<0.000000e+00> : vector<2x256xf32>
    %344 = tpu.matmul %341, %215, %cst_78 {dimension_numbers = #tpu.dot_dimension_numbers<[1], [0], [0], [1], [0, 0, 1, 1], [], []>} : vector<2x64xf32>, vector<64x256xf32>, vector<2x256xf32> -> vector<2x256xf32>
    %345 = arith.addf %343, %344 : vector<2x256xf32>
    %346 = vector.extract_strided_slice %345 {offsets = [0, 0], sizes = [2, 128], strides = [1, 1]} : vector<2x256xf32> to vector<2x128xf32>
    %347 = arith.negf %346 : vector<2x128xf32>
    %348 = math.exp %347 : vector<2x128xf32>
    %cst_79 = arith.constant 1.000000e+00 : f32
    %349 = vector.broadcast %cst_79 : f32 to vector<2x128xf32>
    %350 = arith.addf %349, %348 : vector<2x128xf32>
    %351 = arith.divf %349, %350 : vector<2x128xf32>
    %352 = vector.extract_strided_slice %345 {offsets = [0, 128], sizes = [2, 64], strides = [1, 1]} : vector<2x256xf32> to vector<2x64xf32>
    %353 = math.tanh %352 : vector<2x64xf32>
    %354 = vector.extract_strided_slice %345 {offsets = [0, 192], sizes = [2, 64], strides = [1, 1]} : vector<2x256xf32> to vector<2x64xf32>
    %355 = arith.negf %354 : vector<2x64xf32>
    %356 = math.exp %355 : vector<2x64xf32>
    %cst_80 = arith.constant 1.000000e+00 : f32
    %357 = vector.broadcast %cst_80 : f32 to vector<2x64xf32>
    %358 = arith.addf %357, %356 : vector<2x64xf32>
    %359 = arith.divf %357, %358 : vector<2x64xf32>
    %360 = vector.extract_strided_slice %351 {offsets = [0, 64], sizes = [2, 64], strides = [1, 1]} : vector<2x128xf32> to vector<2x64xf32>
    %361 = arith.mulf %360, %339 : vector<2x64xf32>
    %362 = vector.extract_strided_slice %351 {offsets = [0, 0], sizes = [2, 64], strides = [1, 1]} : vector<2x128xf32> to vector<2x64xf32>
    %363 = arith.mulf %362, %353 : vector<2x64xf32>
    %364 = arith.addf %361, %363 : vector<2x64xf32>
    %365 = math.tanh %364 : vector<2x64xf32>
    %366 = arith.mulf %359, %365 : vector<2x64xf32>
    %c10_81 = arith.constant 10 : index
    %c0_82 = arith.constant 0 : index
    %367 = vector.load %arg18[%c10_81, %c0_82] : memref<16x64xf32, #tpu.memory_space<vmem>>, vector<2x64xf32>
    tpu.vector_store %arg18[%c10_81, %c0_82], %366 {strides = array<i32>} : memref<16x64xf32, #tpu.memory_space<vmem>>, vector<2x64xf32>,
    %368 = vector.extract_strided_slice %214 {offsets = [12, 0], sizes = [2, 256], strides = [1, 1]} : vector<16x256xf32> to vector<2x256xf32>
    %cst_83 = arith.constant dense<0.000000e+00> : vector<2x256xf32>
    %369 = tpu.matmul %366, %215, %cst_83 {dimension_numbers = #tpu.dot_dimension_numbers<[1], [0], [0], [1], [0, 0, 1, 1], [], []>} : vector<2x64xf32>, vector<64x256xf32>, vector<2x256xf32> -> vector<2x256xf32>
    %370 = arith.addf %368, %369 : vector<2x256xf32>
    %371 = vector.extract_strided_slice %370 {offsets = [0, 0], sizes = [2, 128], strides = [1, 1]} : vector<2x256xf32> to vector<2x128xf32>
    %372 = arith.negf %371 : vector<2x128xf32>
    %373 = math.exp %372 : vector<2x128xf32>
    %cst_84 = arith.constant 1.000000e+00 : f32
    %374 = vector.broadcast %cst_84 : f32 to vector<2x128xf32>
    %375 = arith.addf %374, %373 : vector<2x128xf32>
    %376 = arith.divf %374, %375 : vector<2x128xf32>
    %377 = vector.extract_strided_slice %370 {offsets = [0, 128], sizes = [2, 64], strides = [1, 1]} : vector<2x256xf32> to vector<2x64xf32>
    %378 = math.tanh %377 : vector<2x64xf32>
    %379 = vector.extract_strided_slice %370 {offsets = [0, 192], sizes = [2, 64], strides = [1, 1]} : vector<2x256xf32> to vector<2x64xf32>
    %380 = arith.negf %379 : vector<2x64xf32>
    %381 = math.exp %380 : vector<2x64xf32>
    %cst_85 = arith.constant 1.000000e+00 : f32
    %382 = vector.broadcast %cst_85 : f32 to vector<2x64xf32>
    %383 = arith.addf %382, %381 : vector<2x64xf32>
    %384 = arith.divf %382, %383 : vector<2x64xf32>
    %385 = vector.extract_strided_slice %376 {offsets = [0, 64], sizes = [2, 64], strides = [1, 1]} : vector<2x128xf32> to vector<2x64xf32>
    %386 = arith.mulf %385, %364 : vector<2x64xf32>
    %387 = vector.extract_strided_slice %376 {offsets = [0, 0], sizes = [2, 64], strides = [1, 1]} : vector<2x128xf32> to vector<2x64xf32>
    %388 = arith.mulf %387, %378 : vector<2x64xf32>
    %389 = arith.addf %386, %388 : vector<2x64xf32>
    %390 = math.tanh %389 : vector<2x64xf32>
    %391 = arith.mulf %384, %390 : vector<2x64xf32>
    %c12_86 = arith.constant 12 : index
    %c0_87 = arith.constant 0 : index
    %392 = vector.load %arg18[%c12_86, %c0_87] : memref<16x64xf32, #tpu.memory_space<vmem>>, vector<2x64xf32>
    tpu.vector_store %arg18[%c12_86, %c0_87], %391 {strides = array<i32>} : memref<16x64xf32, #tpu.memory_space<vmem>>, vector<2x64xf32>,
    %393 = vector.extract_strided_slice %214 {offsets = [14, 0], sizes = [2, 256], strides = [1, 1]} : vector<16x256xf32> to vector<2x256xf32>
    %cst_88 = arith.constant dense<0.000000e+00> : vector<2x256xf32>
    %394 = tpu.matmul %391, %215, %cst_88 {dimension_numbers = #tpu.dot_dimension_numbers<[1], [0], [0], [1], [0, 0, 1, 1], [], []>} : vector<2x64xf32>, vector<64x256xf32>, vector<2x256xf32> -> vector<2x256xf32>
    %395 = arith.addf %393, %394 : vector<2x256xf32>
    %396 = vector.extract_strided_slice %395 {offsets = [0, 0], sizes = [2, 128], strides = [1, 1]} : vector<2x256xf32> to vector<2x128xf32>
    %397 = arith.negf %396 : vector<2x128xf32>
    %398 = math.exp %397 : vector<2x128xf32>
    %cst_89 = arith.constant 1.000000e+00 : f32
    %399 = vector.broadcast %cst_89 : f32 to vector<2x128xf32>
    %400 = arith.addf %399, %398 : vector<2x128xf32>
    %401 = arith.divf %399, %400 : vector<2x128xf32>
    %402 = vector.extract_strided_slice %395 {offsets = [0, 128], sizes = [2, 64], strides = [1, 1]} : vector<2x256xf32> to vector<2x64xf32>
    %403 = math.tanh %402 : vector<2x64xf32>
    %404 = vector.extract_strided_slice %395 {offsets = [0, 192], sizes = [2, 64], strides = [1, 1]} : vector<2x256xf32> to vector<2x64xf32>
    %405 = arith.negf %404 : vector<2x64xf32>
    %406 = math.exp %405 : vector<2x64xf32>
    %cst_90 = arith.constant 1.000000e+00 : f32
    %407 = vector.broadcast %cst_90 : f32 to vector<2x64xf32>
    %408 = arith.addf %407, %406 : vector<2x64xf32>
    %409 = arith.divf %407, %408 : vector<2x64xf32>
    %410 = vector.extract_strided_slice %401 {offsets = [0, 64], sizes = [2, 64], strides = [1, 1]} : vector<2x128xf32> to vector<2x64xf32>
    %411 = arith.mulf %410, %389 : vector<2x64xf32>
    %412 = vector.extract_strided_slice %401 {offsets = [0, 0], sizes = [2, 64], strides = [1, 1]} : vector<2x128xf32> to vector<2x64xf32>
    %413 = arith.mulf %412, %403 : vector<2x64xf32>
    %414 = arith.addf %411, %413 : vector<2x64xf32>
    %415 = math.tanh %414 : vector<2x64xf32>
    %416 = arith.mulf %409, %415 : vector<2x64xf32>
    %c14_91 = arith.constant 14 : index
    %c0_92 = arith.constant 0 : index
    %417 = vector.load %arg18[%c14_91, %c0_92] : memref<16x64xf32, #tpu.memory_space<vmem>>, vector<2x64xf32>
    tpu.vector_store %arg18[%c14_91, %c0_92], %416 {strides = array<i32>} : memref<16x64xf32, #tpu.memory_space<vmem>>, vector<2x64xf32>,
    %c0_93 = arith.constant 0 : index
    %c0_94 = arith.constant 0 : index
    %418 = vector.load %arg18[%c0_93, %c0_94] : memref<16x64xf32, #tpu.memory_space<vmem>>, vector<16x64xf32>
    %c0_95 = arith.constant 0 : index
    %c0_96 = arith.constant 0 : index
    %419 = vector.load %arg7[%c0_95, %c0_96] : memref<64x256xf32, #tpu.memory_space<vmem>>, vector<64x256xf32>
    %cst_97 = arith.constant dense<0.000000e+00> : vector<16x256xf32>
    %420 = tpu.matmul %418, %419, %cst_97 {dimension_numbers = #tpu.dot_dimension_numbers<[1], [0], [0], [1], [0, 0, 1, 1], [], []>} : vector<16x64xf32>, vector<64x256xf32>, vector<16x256xf32> -> vector<16x256xf32>
    %c0_98 = arith.constant 0 : index
    %c0_99 = arith.constant 0 : index
    %421 = vector.load %arg9[%c0_98, %c0_99] : memref<1x256xf32, #tpu.memory_space<vmem>>, vector<1x256xf32>
    %422 = vector.broadcast %421 : vector<1x256xf32> to vector<16x256xf32>
    %423 = arith.addf %420, %422 : vector<16x256xf32>
    %c0_100 = arith.constant 0 : index
    %c0_101 = arith.constant 0 : index
    %424 = vector.load %arg8[%c0_100, %c0_101] : memref<64x256xf32, #tpu.memory_space<vmem>>, vector<64x256xf32>
    %c0_102 = arith.constant 0 : index
    %c0_103 = arith.constant 0 : index
    %425 = vector.load %arg10[%c0_102, %c0_103] : memref<64x64xf32, #tpu.memory_space<vmem>>, vector<64x64xf32>
    %c0_104 = arith.constant 0 : index
    %c0_105 = arith.constant 0 : index
    %426 = vector.load %arg11[%c0_104, %c0_105] : memref<1x64xf32, #tpu.memory_space<vmem>>, vector<1x64xf32>
    %c0_106 = arith.constant 0 : index
    %c0_107 = arith.constant 0 : index
    %427 = vector.load %arg12[%c0_106, %c0_107] : memref<1x64xf32, #tpu.memory_space<vmem>>, vector<1x64xf32>
    %cst_108 = arith.constant 0.000000e+00 : f32
    %428 = vector.broadcast %cst_108 : f32 to vector<2x64xf32>
    %cst_109 = arith.constant 0.000000e+00 : f32
    %429 = vector.broadcast %cst_109 : f32 to vector<2x64xf32>
    %430 = vector.extract_strided_slice %423 {offsets = [0, 0], sizes = [2, 256], strides = [1, 1]} : vector<16x256xf32> to vector<2x256xf32>
    %cst_110 = arith.constant dense<0.000000e+00> : vector<2x256xf32>
    %431 = tpu.matmul %428, %424, %cst_110 {dimension_numbers = #tpu.dot_dimension_numbers<[1], [0], [0], [1], [0, 0, 1, 1], [], []>} : vector<2x64xf32>, vector<64x256xf32>, vector<2x256xf32> -> vector<2x256xf32>
    %432 = arith.addf %430, %431 : vector<2x256xf32>
    %433 = vector.extract_strided_slice %432 {offsets = [0, 0], sizes = [2, 128], strides = [1, 1]} : vector<2x256xf32> to vector<2x128xf32>
    %434 = arith.negf %433 : vector<2x128xf32>
    %435 = math.exp %434 : vector<2x128xf32>
    %cst_111 = arith.constant 1.000000e+00 : f32
    %436 = vector.broadcast %cst_111 : f32 to vector<2x128xf32>
    %437 = arith.addf %436, %435 : vector<2x128xf32>
    %438 = arith.divf %436, %437 : vector<2x128xf32>
    %439 = vector.extract_strided_slice %432 {offsets = [0, 128], sizes = [2, 64], strides = [1, 1]} : vector<2x256xf32> to vector<2x64xf32>
    %440 = math.tanh %439 : vector<2x64xf32>
    %441 = vector.extract_strided_slice %432 {offsets = [0, 192], sizes = [2, 64], strides = [1, 1]} : vector<2x256xf32> to vector<2x64xf32>
    %442 = arith.negf %441 : vector<2x64xf32>
    %443 = math.exp %442 : vector<2x64xf32>
    %cst_112 = arith.constant 1.000000e+00 : f32
    %444 = vector.broadcast %cst_112 : f32 to vector<2x64xf32>
    %445 = arith.addf %444, %443 : vector<2x64xf32>
    %446 = arith.divf %444, %445 : vector<2x64xf32>
    %447 = vector.extract_strided_slice %438 {offsets = [0, 64], sizes = [2, 64], strides = [1, 1]} : vector<2x128xf32> to vector<2x64xf32>
    %448 = arith.mulf %447, %429 : vector<2x64xf32>
    %449 = vector.extract_strided_slice %438 {offsets = [0, 0], sizes = [2, 64], strides = [1, 1]} : vector<2x128xf32> to vector<2x64xf32>
    %450 = arith.mulf %449, %440 : vector<2x64xf32>
    %451 = arith.addf %448, %450 : vector<2x64xf32>
    %452 = math.tanh %451 : vector<2x64xf32>
    %453 = arith.mulf %446, %452 : vector<2x64xf32>
    %cst_113 = arith.constant dense<0.000000e+00> : vector<2x64xf32>
    %454 = tpu.matmul %453, %425, %cst_113 {dimension_numbers = #tpu.dot_dimension_numbers<[1], [0], [0], [1], [0, 0, 1, 1], [], []>} : vector<2x64xf32>, vector<64x64xf32>, vector<2x64xf32> -> vector<2x64xf32>
    %455 = vector.broadcast %426 : vector<1x64xf32> to vector<2x64xf32>
    %456 = arith.addf %454, %455 : vector<2x64xf32>
    %457 = math.tanh %456 : vector<2x64xf32>
    %458 = vector.broadcast %427 : vector<1x64xf32> to vector<2x64xf32>
    %459 = arith.mulf %457, %458 : vector<2x64xf32>
    %cst_114 = arith.constant dense<0.000000e+00> : vector<2xf32>
    %460 = vector.multi_reduction <add>, %459, %cst_114 [1] : vector<2x64xf32> to vector<2xf32>
    %461 = vector.shape_cast %460 : vector<2xf32> to vector<2x1xf32>
    %462 = vector.extract_strided_slice %423 {offsets = [2, 0], sizes = [2, 256], strides = [1, 1]} : vector<16x256xf32> to vector<2x256xf32>
    %cst_115 = arith.constant dense<0.000000e+00> : vector<2x256xf32>
    %463 = tpu.matmul %453, %424, %cst_115 {dimension_numbers = #tpu.dot_dimension_numbers<[1], [0], [0], [1], [0, 0, 1, 1], [], []>} : vector<2x64xf32>, vector<64x256xf32>, vector<2x256xf32> -> vector<2x256xf32>
    %464 = arith.addf %462, %463 : vector<2x256xf32>
    %465 = vector.extract_strided_slice %464 {offsets = [0, 0], sizes = [2, 128], strides = [1, 1]} : vector<2x256xf32> to vector<2x128xf32>
    %466 = arith.negf %465 : vector<2x128xf32>
    %467 = math.exp %466 : vector<2x128xf32>
    %cst_116 = arith.constant 1.000000e+00 : f32
    %468 = vector.broadcast %cst_116 : f32 to vector<2x128xf32>
    %469 = arith.addf %468, %467 : vector<2x128xf32>
    %470 = arith.divf %468, %469 : vector<2x128xf32>
    %471 = vector.extract_strided_slice %464 {offsets = [0, 128], sizes = [2, 64], strides = [1, 1]} : vector<2x256xf32> to vector<2x64xf32>
    %472 = math.tanh %471 : vector<2x64xf32>
    %473 = vector.extract_strided_slice %464 {offsets = [0, 192], sizes = [2, 64], strides = [1, 1]} : vector<2x256xf32> to vector<2x64xf32>
    %474 = arith.negf %473 : vector<2x64xf32>
    %475 = math.exp %474 : vector<2x64xf32>
    %cst_117 = arith.constant 1.000000e+00 : f32
    %476 = vector.broadcast %cst_117 : f32 to vector<2x64xf32>
    %477 = arith.addf %476, %475 : vector<2x64xf32>
    %478 = arith.divf %476, %477 : vector<2x64xf32>
    %479 = vector.extract_strided_slice %470 {offsets = [0, 64], sizes = [2, 64], strides = [1, 1]} : vector<2x128xf32> to vector<2x64xf32>
    %480 = arith.mulf %479, %451 : vector<2x64xf32>
    %481 = vector.extract_strided_slice %470 {offsets = [0, 0], sizes = [2, 64], strides = [1, 1]} : vector<2x128xf32> to vector<2x64xf32>
    %482 = arith.mulf %481, %472 : vector<2x64xf32>
    %483 = arith.addf %480, %482 : vector<2x64xf32>
    %484 = math.tanh %483 : vector<2x64xf32>
    %485 = arith.mulf %478, %484 : vector<2x64xf32>
    %cst_118 = arith.constant dense<0.000000e+00> : vector<2x64xf32>
    %486 = tpu.matmul %485, %425, %cst_118 {dimension_numbers = #tpu.dot_dimension_numbers<[1], [0], [0], [1], [0, 0, 1, 1], [], []>} : vector<2x64xf32>, vector<64x64xf32>, vector<2x64xf32> -> vector<2x64xf32>
    %487 = vector.broadcast %426 : vector<1x64xf32> to vector<2x64xf32>
    %488 = arith.addf %486, %487 : vector<2x64xf32>
    %489 = math.tanh %488 : vector<2x64xf32>
    %490 = vector.broadcast %427 : vector<1x64xf32> to vector<2x64xf32>
    %491 = arith.mulf %489, %490 : vector<2x64xf32>
    %cst_119 = arith.constant dense<0.000000e+00> : vector<2xf32>
    %492 = vector.multi_reduction <add>, %491, %cst_119 [1] : vector<2x64xf32> to vector<2xf32>
    %493 = vector.shape_cast %492 : vector<2xf32> to vector<2x1xf32>
    %494 = vector.extract_strided_slice %423 {offsets = [4, 0], sizes = [2, 256], strides = [1, 1]} : vector<16x256xf32> to vector<2x256xf32>
    %cst_120 = arith.constant dense<0.000000e+00> : vector<2x256xf32>
    %495 = tpu.matmul %485, %424, %cst_120 {dimension_numbers = #tpu.dot_dimension_numbers<[1], [0], [0], [1], [0, 0, 1, 1], [], []>} : vector<2x64xf32>, vector<64x256xf32>, vector<2x256xf32> -> vector<2x256xf32>
    %496 = arith.addf %494, %495 : vector<2x256xf32>
    %497 = vector.extract_strided_slice %496 {offsets = [0, 0], sizes = [2, 128], strides = [1, 1]} : vector<2x256xf32> to vector<2x128xf32>
    %498 = arith.negf %497 : vector<2x128xf32>
    %499 = math.exp %498 : vector<2x128xf32>
    %cst_121 = arith.constant 1.000000e+00 : f32
    %500 = vector.broadcast %cst_121 : f32 to vector<2x128xf32>
    %501 = arith.addf %500, %499 : vector<2x128xf32>
    %502 = arith.divf %500, %501 : vector<2x128xf32>
    %503 = vector.extract_strided_slice %496 {offsets = [0, 128], sizes = [2, 64], strides = [1, 1]} : vector<2x256xf32> to vector<2x64xf32>
    %504 = math.tanh %503 : vector<2x64xf32>
    %505 = vector.extract_strided_slice %496 {offsets = [0, 192], sizes = [2, 64], strides = [1, 1]} : vector<2x256xf32> to vector<2x64xf32>
    %506 = arith.negf %505 : vector<2x64xf32>
    %507 = math.exp %506 : vector<2x64xf32>
    %cst_122 = arith.constant 1.000000e+00 : f32
    %508 = vector.broadcast %cst_122 : f32 to vector<2x64xf32>
    %509 = arith.addf %508, %507 : vector<2x64xf32>
    %510 = arith.divf %508, %509 : vector<2x64xf32>
    %511 = vector.extract_strided_slice %502 {offsets = [0, 64], sizes = [2, 64], strides = [1, 1]} : vector<2x128xf32> to vector<2x64xf32>
    %512 = arith.mulf %511, %483 : vector<2x64xf32>
    %513 = vector.extract_strided_slice %502 {offsets = [0, 0], sizes = [2, 64], strides = [1, 1]} : vector<2x128xf32> to vector<2x64xf32>
    %514 = arith.mulf %513, %504 : vector<2x64xf32>
    %515 = arith.addf %512, %514 : vector<2x64xf32>
    %516 = math.tanh %515 : vector<2x64xf32>
    %517 = arith.mulf %510, %516 : vector<2x64xf32>
    %cst_123 = arith.constant dense<0.000000e+00> : vector<2x64xf32>
    %518 = tpu.matmul %517, %425, %cst_123 {dimension_numbers = #tpu.dot_dimension_numbers<[1], [0], [0], [1], [0, 0, 1, 1], [], []>} : vector<2x64xf32>, vector<64x64xf32>, vector<2x64xf32> -> vector<2x64xf32>
    %519 = vector.broadcast %426 : vector<1x64xf32> to vector<2x64xf32>
    %520 = arith.addf %518, %519 : vector<2x64xf32>
    %521 = math.tanh %520 : vector<2x64xf32>
    %522 = vector.broadcast %427 : vector<1x64xf32> to vector<2x64xf32>
    %523 = arith.mulf %521, %522 : vector<2x64xf32>
    %cst_124 = arith.constant dense<0.000000e+00> : vector<2xf32>
    %524 = vector.multi_reduction <add>, %523, %cst_124 [1] : vector<2x64xf32> to vector<2xf32>
    %525 = vector.shape_cast %524 : vector<2xf32> to vector<2x1xf32>
    %526 = vector.extract_strided_slice %423 {offsets = [6, 0], sizes = [2, 256], strides = [1, 1]} : vector<16x256xf32> to vector<2x256xf32>
    %cst_125 = arith.constant dense<0.000000e+00> : vector<2x256xf32>
    %527 = tpu.matmul %517, %424, %cst_125 {dimension_numbers = #tpu.dot_dimension_numbers<[1], [0], [0], [1], [0, 0, 1, 1], [], []>} : vector<2x64xf32>, vector<64x256xf32>, vector<2x256xf32> -> vector<2x256xf32>
    %528 = arith.addf %526, %527 : vector<2x256xf32>
    %529 = vector.extract_strided_slice %528 {offsets = [0, 0], sizes = [2, 128], strides = [1, 1]} : vector<2x256xf32> to vector<2x128xf32>
    %530 = arith.negf %529 : vector<2x128xf32>
    %531 = math.exp %530 : vector<2x128xf32>
    %cst_126 = arith.constant 1.000000e+00 : f32
    %532 = vector.broadcast %cst_126 : f32 to vector<2x128xf32>
    %533 = arith.addf %532, %531 : vector<2x128xf32>
    %534 = arith.divf %532, %533 : vector<2x128xf32>
    %535 = vector.extract_strided_slice %528 {offsets = [0, 128], sizes = [2, 64], strides = [1, 1]} : vector<2x256xf32> to vector<2x64xf32>
    %536 = math.tanh %535 : vector<2x64xf32>
    %537 = vector.extract_strided_slice %528 {offsets = [0, 192], sizes = [2, 64], strides = [1, 1]} : vector<2x256xf32> to vector<2x64xf32>
    %538 = arith.negf %537 : vector<2x64xf32>
    %539 = math.exp %538 : vector<2x64xf32>
    %cst_127 = arith.constant 1.000000e+00 : f32
    %540 = vector.broadcast %cst_127 : f32 to vector<2x64xf32>
    %541 = arith.addf %540, %539 : vector<2x64xf32>
    %542 = arith.divf %540, %541 : vector<2x64xf32>
    %543 = vector.extract_strided_slice %534 {offsets = [0, 64], sizes = [2, 64], strides = [1, 1]} : vector<2x128xf32> to vector<2x64xf32>
    %544 = arith.mulf %543, %515 : vector<2x64xf32>
    %545 = vector.extract_strided_slice %534 {offsets = [0, 0], sizes = [2, 64], strides = [1, 1]} : vector<2x128xf32> to vector<2x64xf32>
    %546 = arith.mulf %545, %536 : vector<2x64xf32>
    %547 = arith.addf %544, %546 : vector<2x64xf32>
    %548 = math.tanh %547 : vector<2x64xf32>
    %549 = arith.mulf %542, %548 : vector<2x64xf32>
    %cst_128 = arith.constant dense<0.000000e+00> : vector<2x64xf32>
    %550 = tpu.matmul %549, %425, %cst_128 {dimension_numbers = #tpu.dot_dimension_numbers<[1], [0], [0], [1], [0, 0, 1, 1], [], []>} : vector<2x64xf32>, vector<64x64xf32>, vector<2x64xf32> -> vector<2x64xf32>
    %551 = vector.broadcast %426 : vector<1x64xf32> to vector<2x64xf32>
    %552 = arith.addf %550, %551 : vector<2x64xf32>
    %553 = math.tanh %552 : vector<2x64xf32>
    %554 = vector.broadcast %427 : vector<1x64xf32> to vector<2x64xf32>
    %555 = arith.mulf %553, %554 : vector<2x64xf32>
    %cst_129 = arith.constant dense<0.000000e+00> : vector<2xf32>
    %556 = vector.multi_reduction <add>, %555, %cst_129 [1] : vector<2x64xf32> to vector<2xf32>
    %557 = vector.shape_cast %556 : vector<2xf32> to vector<2x1xf32>
    %558 = vector.extract_strided_slice %423 {offsets = [8, 0], sizes = [2, 256], strides = [1, 1]} : vector<16x256xf32> to vector<2x256xf32>
    %cst_130 = arith.constant dense<0.000000e+00> : vector<2x256xf32>
    %559 = tpu.matmul %549, %424, %cst_130 {dimension_numbers = #tpu.dot_dimension_numbers<[1], [0], [0], [1], [0, 0, 1, 1], [], []>} : vector<2x64xf32>, vector<64x256xf32>, vector<2x256xf32> -> vector<2x256xf32>
    %560 = arith.addf %558, %559 : vector<2x256xf32>
    %561 = vector.extract_strided_slice %560 {offsets = [0, 0], sizes = [2, 128], strides = [1, 1]} : vector<2x256xf32> to vector<2x128xf32>
    %562 = arith.negf %561 : vector<2x128xf32>
    %563 = math.exp %562 : vector<2x128xf32>
    %cst_131 = arith.constant 1.000000e+00 : f32
    %564 = vector.broadcast %cst_131 : f32 to vector<2x128xf32>
    %565 = arith.addf %564, %563 : vector<2x128xf32>
    %566 = arith.divf %564, %565 : vector<2x128xf32>
    %567 = vector.extract_strided_slice %560 {offsets = [0, 128], sizes = [2, 64], strides = [1, 1]} : vector<2x256xf32> to vector<2x64xf32>
    %568 = math.tanh %567 : vector<2x64xf32>
    %569 = vector.extract_strided_slice %560 {offsets = [0, 192], sizes = [2, 64], strides = [1, 1]} : vector<2x256xf32> to vector<2x64xf32>
    %570 = arith.negf %569 : vector<2x64xf32>
    %571 = math.exp %570 : vector<2x64xf32>
    %cst_132 = arith.constant 1.000000e+00 : f32
    %572 = vector.broadcast %cst_132 : f32 to vector<2x64xf32>
    %573 = arith.addf %572, %571 : vector<2x64xf32>
    %574 = arith.divf %572, %573 : vector<2x64xf32>
    %575 = vector.extract_strided_slice %566 {offsets = [0, 64], sizes = [2, 64], strides = [1, 1]} : vector<2x128xf32> to vector<2x64xf32>
    %576 = arith.mulf %575, %547 : vector<2x64xf32>
    %577 = vector.extract_strided_slice %566 {offsets = [0, 0], sizes = [2, 64], strides = [1, 1]} : vector<2x128xf32> to vector<2x64xf32>
    %578 = arith.mulf %577, %568 : vector<2x64xf32>
    %579 = arith.addf %576, %578 : vector<2x64xf32>
    %580 = math.tanh %579 : vector<2x64xf32>
    %581 = arith.mulf %574, %580 : vector<2x64xf32>
    %cst_133 = arith.constant dense<0.000000e+00> : vector<2x64xf32>
    %582 = tpu.matmul %581, %425, %cst_133 {dimension_numbers = #tpu.dot_dimension_numbers<[1], [0], [0], [1], [0, 0, 1, 1], [], []>} : vector<2x64xf32>, vector<64x64xf32>, vector<2x64xf32> -> vector<2x64xf32>
    %583 = vector.broadcast %426 : vector<1x64xf32> to vector<2x64xf32>
    %584 = arith.addf %582, %583 : vector<2x64xf32>
    %585 = math.tanh %584 : vector<2x64xf32>
    %586 = vector.broadcast %427 : vector<1x64xf32> to vector<2x64xf32>
    %587 = arith.mulf %585, %586 : vector<2x64xf32>
    %cst_134 = arith.constant dense<0.000000e+00> : vector<2xf32>
    %588 = vector.multi_reduction <add>, %587, %cst_134 [1] : vector<2x64xf32> to vector<2xf32>
    %589 = vector.shape_cast %588 : vector<2xf32> to vector<2x1xf32>
    %590 = vector.extract_strided_slice %423 {offsets = [10, 0], sizes = [2, 256], strides = [1, 1]} : vector<16x256xf32> to vector<2x256xf32>
    %cst_135 = arith.constant dense<0.000000e+00> : vector<2x256xf32>
    %591 = tpu.matmul %581, %424, %cst_135 {dimension_numbers = #tpu.dot_dimension_numbers<[1], [0], [0], [1], [0, 0, 1, 1], [], []>} : vector<2x64xf32>, vector<64x256xf32>, vector<2x256xf32> -> vector<2x256xf32>
    %592 = arith.addf %590, %591 : vector<2x256xf32>
    %593 = vector.extract_strided_slice %592 {offsets = [0, 0], sizes = [2, 128], strides = [1, 1]} : vector<2x256xf32> to vector<2x128xf32>
    %594 = arith.negf %593 : vector<2x128xf32>
    %595 = math.exp %594 : vector<2x128xf32>
    %cst_136 = arith.constant 1.000000e+00 : f32
    %596 = vector.broadcast %cst_136 : f32 to vector<2x128xf32>
    %597 = arith.addf %596, %595 : vector<2x128xf32>
    %598 = arith.divf %596, %597 : vector<2x128xf32>
    %599 = vector.extract_strided_slice %592 {offsets = [0, 128], sizes = [2, 64], strides = [1, 1]} : vector<2x256xf32> to vector<2x64xf32>
    %600 = math.tanh %599 : vector<2x64xf32>
    %601 = vector.extract_strided_slice %592 {offsets = [0, 192], sizes = [2, 64], strides = [1, 1]} : vector<2x256xf32> to vector<2x64xf32>
    %602 = arith.negf %601 : vector<2x64xf32>
    %603 = math.exp %602 : vector<2x64xf32>
    %cst_137 = arith.constant 1.000000e+00 : f32
    %604 = vector.broadcast %cst_137 : f32 to vector<2x64xf32>
    %605 = arith.addf %604, %603 : vector<2x64xf32>
    %606 = arith.divf %604, %605 : vector<2x64xf32>
    %607 = vector.extract_strided_slice %598 {offsets = [0, 64], sizes = [2, 64], strides = [1, 1]} : vector<2x128xf32> to vector<2x64xf32>
    %608 = arith.mulf %607, %579 : vector<2x64xf32>
    %609 = vector.extract_strided_slice %598 {offsets = [0, 0], sizes = [2, 64], strides = [1, 1]} : vector<2x128xf32> to vector<2x64xf32>
    %610 = arith.mulf %609, %600 : vector<2x64xf32>
    %611 = arith.addf %608, %610 : vector<2x64xf32>
    %612 = math.tanh %611 : vector<2x64xf32>
    %613 = arith.mulf %606, %612 : vector<2x64xf32>
    %cst_138 = arith.constant dense<0.000000e+00> : vector<2x64xf32>
    %614 = tpu.matmul %613, %425, %cst_138 {dimension_numbers = #tpu.dot_dimension_numbers<[1], [0], [0], [1], [0, 0, 1, 1], [], []>} : vector<2x64xf32>, vector<64x64xf32>, vector<2x64xf32> -> vector<2x64xf32>
    %615 = vector.broadcast %426 : vector<1x64xf32> to vector<2x64xf32>
    %616 = arith.addf %614, %615 : vector<2x64xf32>
    %617 = math.tanh %616 : vector<2x64xf32>
    %618 = vector.broadcast %427 : vector<1x64xf32> to vector<2x64xf32>
    %619 = arith.mulf %617, %618 : vector<2x64xf32>
    %cst_139 = arith.constant dense<0.000000e+00> : vector<2xf32>
    %620 = vector.multi_reduction <add>, %619, %cst_139 [1] : vector<2x64xf32> to vector<2xf32>
    %621 = vector.shape_cast %620 : vector<2xf32> to vector<2x1xf32>
    %622 = vector.extract_strided_slice %423 {offsets = [12, 0], sizes = [2, 256], strides = [1, 1]} : vector<16x256xf32> to vector<2x256xf32>
    %cst_140 = arith.constant dense<0.000000e+00> : vector<2x256xf32>
    %623 = tpu.matmul %613, %424, %cst_140 {dimension_numbers = #tpu.dot_dimension_numbers<[1], [0], [0], [1], [0, 0, 1, 1], [], []>} : vector<2x64xf32>, vector<64x256xf32>, vector<2x256xf32> -> vector<2x256xf32>
    %624 = arith.addf %622, %623 : vector<2x256xf32>
    %625 = vector.extract_strided_slice %624 {offsets = [0, 0], sizes = [2, 128], strides = [1, 1]} : vector<2x256xf32> to vector<2x128xf32>
    %626 = arith.negf %625 : vector<2x128xf32>
    %627 = math.exp %626 : vector<2x128xf32>
    %cst_141 = arith.constant 1.000000e+00 : f32
    %628 = vector.broadcast %cst_141 : f32 to vector<2x128xf32>
    %629 = arith.addf %628, %627 : vector<2x128xf32>
    %630 = arith.divf %628, %629 : vector<2x128xf32>
    %631 = vector.extract_strided_slice %624 {offsets = [0, 128], sizes = [2, 64], strides = [1, 1]} : vector<2x256xf32> to vector<2x64xf32>
    %632 = math.tanh %631 : vector<2x64xf32>
    %633 = vector.extract_strided_slice %624 {offsets = [0, 192], sizes = [2, 64], strides = [1, 1]} : vector<2x256xf32> to vector<2x64xf32>
    %634 = arith.negf %633 : vector<2x64xf32>
    %635 = math.exp %634 : vector<2x64xf32>
    %cst_142 = arith.constant 1.000000e+00 : f32
    %636 = vector.broadcast %cst_142 : f32 to vector<2x64xf32>
    %637 = arith.addf %636, %635 : vector<2x64xf32>
    %638 = arith.divf %636, %637 : vector<2x64xf32>
    %639 = vector.extract_strided_slice %630 {offsets = [0, 64], sizes = [2, 64], strides = [1, 1]} : vector<2x128xf32> to vector<2x64xf32>
    %640 = arith.mulf %639, %611 : vector<2x64xf32>
    %641 = vector.extract_strided_slice %630 {offsets = [0, 0], sizes = [2, 64], strides = [1, 1]} : vector<2x128xf32> to vector<2x64xf32>
    %642 = arith.mulf %641, %632 : vector<2x64xf32>
    %643 = arith.addf %640, %642 : vector<2x64xf32>
    %644 = math.tanh %643 : vector<2x64xf32>
    %645 = arith.mulf %638, %644 : vector<2x64xf32>
    %cst_143 = arith.constant dense<0.000000e+00> : vector<2x64xf32>
    %646 = tpu.matmul %645, %425, %cst_143 {dimension_numbers = #tpu.dot_dimension_numbers<[1], [0], [0], [1], [0, 0, 1, 1], [], []>} : vector<2x64xf32>, vector<64x64xf32>, vector<2x64xf32> -> vector<2x64xf32>
    %647 = vector.broadcast %426 : vector<1x64xf32> to vector<2x64xf32>
    %648 = arith.addf %646, %647 : vector<2x64xf32>
    %649 = math.tanh %648 : vector<2x64xf32>
    %650 = vector.broadcast %427 : vector<1x64xf32> to vector<2x64xf32>
    %651 = arith.mulf %649, %650 : vector<2x64xf32>
    %cst_144 = arith.constant dense<0.000000e+00> : vector<2xf32>
    %652 = vector.multi_reduction <add>, %651, %cst_144 [1] : vector<2x64xf32> to vector<2xf32>
    %653 = vector.shape_cast %652 : vector<2xf32> to vector<2x1xf32>
    %654 = vector.extract_strided_slice %423 {offsets = [14, 0], sizes = [2, 256], strides = [1, 1]} : vector<16x256xf32> to vector<2x256xf32>
    %cst_145 = arith.constant dense<0.000000e+00> : vector<2x256xf32>
    %655 = tpu.matmul %645, %424, %cst_145 {dimension_numbers = #tpu.dot_dimension_numbers<[1], [0], [0], [1], [0, 0, 1, 1], [], []>} : vector<2x64xf32>, vector<64x256xf32>, vector<2x256xf32> -> vector<2x256xf32>
    %656 = arith.addf %654, %655 : vector<2x256xf32>
    %657 = vector.extract_strided_slice %656 {offsets = [0, 0], sizes = [2, 128], strides = [1, 1]} : vector<2x256xf32> to vector<2x128xf32>
    %658 = arith.negf %657 : vector<2x128xf32>
    %659 = math.exp %658 : vector<2x128xf32>
    %cst_146 = arith.constant 1.000000e+00 : f32
    %660 = vector.broadcast %cst_146 : f32 to vector<2x128xf32>
    %661 = arith.addf %660, %659 : vector<2x128xf32>
    %662 = arith.divf %660, %661 : vector<2x128xf32>
    %663 = vector.extract_strided_slice %656 {offsets = [0, 128], sizes = [2, 64], strides = [1, 1]} : vector<2x256xf32> to vector<2x64xf32>
    %664 = math.tanh %663 : vector<2x64xf32>
    %665 = vector.extract_strided_slice %656 {offsets = [0, 192], sizes = [2, 64], strides = [1, 1]} : vector<2x256xf32> to vector<2x64xf32>
    %666 = arith.negf %665 : vector<2x64xf32>
    %667 = math.exp %666 : vector<2x64xf32>
    %cst_147 = arith.constant 1.000000e+00 : f32
    %668 = vector.broadcast %cst_147 : f32 to vector<2x64xf32>
    %669 = arith.addf %668, %667 : vector<2x64xf32>
    %670 = arith.divf %668, %669 : vector<2x64xf32>
    %671 = vector.extract_strided_slice %662 {offsets = [0, 64], sizes = [2, 64], strides = [1, 1]} : vector<2x128xf32> to vector<2x64xf32>
    %672 = arith.mulf %671, %643 : vector<2x64xf32>
    %673 = vector.extract_strided_slice %662 {offsets = [0, 0], sizes = [2, 64], strides = [1, 1]} : vector<2x128xf32> to vector<2x64xf32>
    %674 = arith.mulf %673, %664 : vector<2x64xf32>
    %675 = arith.addf %672, %674 : vector<2x64xf32>
    %676 = math.tanh %675 : vector<2x64xf32>
    %677 = arith.mulf %670, %676 : vector<2x64xf32>
    %cst_148 = arith.constant dense<0.000000e+00> : vector<2x64xf32>
    %678 = tpu.matmul %677, %425, %cst_148 {dimension_numbers = #tpu.dot_dimension_numbers<[1], [0], [0], [1], [0, 0, 1, 1], [], []>} : vector<2x64xf32>, vector<64x64xf32>, vector<2x64xf32> -> vector<2x64xf32>
    %679 = vector.broadcast %426 : vector<1x64xf32> to vector<2x64xf32>
    %680 = arith.addf %678, %679 : vector<2x64xf32>
    %681 = math.tanh %680 : vector<2x64xf32>
    %682 = vector.broadcast %427 : vector<1x64xf32> to vector<2x64xf32>
    %683 = arith.mulf %681, %682 : vector<2x64xf32>
    %cst_149 = arith.constant dense<0.000000e+00> : vector<2xf32>
    %684 = vector.multi_reduction <add>, %683, %cst_149 [1] : vector<2x64xf32> to vector<2xf32>
    %685 = vector.shape_cast %684 : vector<2xf32> to vector<2x1xf32>
    %686 = arith.maximumf %461, %493 : vector<2x1xf32>
    %687 = arith.maximumf %686, %525 : vector<2x1xf32>
    %688 = arith.maximumf %687, %557 : vector<2x1xf32>
    %689 = arith.maximumf %688, %589 : vector<2x1xf32>
    %690 = arith.maximumf %689, %621 : vector<2x1xf32>
    %691 = arith.maximumf %690, %653 : vector<2x1xf32>
    %692 = arith.maximumf %691, %685 : vector<2x1xf32>
    %cst_150 = arith.constant 0.000000e+00 : f32
    %693 = vector.broadcast %cst_150 : f32 to vector<2x1xf32>
    %cst_151 = arith.constant 0.000000e+00 : f32
    %694 = vector.broadcast %cst_151 : f32 to vector<2x64xf32>
    %695 = arith.subf %461, %692 : vector<2x1xf32>
    %696 = math.exp %695 : vector<2x1xf32>
    %697 = arith.addf %693, %696 : vector<2x1xf32>
    %698 = vector.broadcast %696 : vector<2x1xf32> to vector<2x64xf32>
    %699 = arith.mulf %698, %453 : vector<2x64xf32>
    %700 = arith.addf %694, %699 : vector<2x64xf32>
    %701 = arith.subf %493, %692 : vector<2x1xf32>
    %702 = math.exp %701 : vector<2x1xf32>
    %703 = arith.addf %697, %702 : vector<2x1xf32>
    %704 = vector.broadcast %702 : vector<2x1xf32> to vector<2x64xf32>
    %705 = arith.mulf %704, %485 : vector<2x64xf32>
    %706 = arith.addf %700, %705 : vector<2x64xf32>
    %707 = arith.subf %525, %692 : vector<2x1xf32>
    %708 = math.exp %707 : vector<2x1xf32>
    %709 = arith.addf %703, %708 : vector<2x1xf32>
    %710 = vector.broadcast %708 : vector<2x1xf32> to vector<2x64xf32>
    %711 = arith.mulf %710, %517 : vector<2x64xf32>
    %712 = arith.addf %706, %711 : vector<2x64xf32>
    %713 = arith.subf %557, %692 : vector<2x1xf32>
    %714 = math.exp %713 : vector<2x1xf32>
    %715 = arith.addf %709, %714 : vector<2x1xf32>
    %716 = vector.broadcast %714 : vector<2x1xf32> to vector<2x64xf32>
    %717 = arith.mulf %716, %549 : vector<2x64xf32>
    %718 = arith.addf %712, %717 : vector<2x64xf32>
    %719 = arith.subf %589, %692 : vector<2x1xf32>
    %720 = math.exp %719 : vector<2x1xf32>
    %721 = arith.addf %715, %720 : vector<2x1xf32>
    %722 = vector.broadcast %720 : vector<2x1xf32> to vector<2x64xf32>
    %723 = arith.mulf %722, %581 : vector<2x64xf32>
    %724 = arith.addf %718, %723 : vector<2x64xf32>
    %725 = arith.subf %621, %692 : vector<2x1xf32>
    %726 = math.exp %725 : vector<2x1xf32>
    %727 = arith.addf %721, %726 : vector<2x1xf32>
    %728 = vector.broadcast %726 : vector<2x1xf32> to vector<2x64xf32>
    %729 = arith.mulf %728, %613 : vector<2x64xf32>
    %730 = arith.addf %724, %729 : vector<2x64xf32>
    %731 = arith.subf %653, %692 : vector<2x1xf32>
    %732 = math.exp %731 : vector<2x1xf32>
    %733 = arith.addf %727, %732 : vector<2x1xf32>
    %734 = vector.broadcast %732 : vector<2x1xf32> to vector<2x64xf32>
    %735 = arith.mulf %734, %645 : vector<2x64xf32>
    %736 = arith.addf %730, %735 : vector<2x64xf32>
    %737 = arith.subf %685, %692 : vector<2x1xf32>
    %738 = math.exp %737 : vector<2x1xf32>
    %739 = arith.addf %733, %738 : vector<2x1xf32>
    %740 = vector.broadcast %738 : vector<2x1xf32> to vector<2x64xf32>
    %741 = arith.mulf %740, %677 : vector<2x64xf32>
    %742 = arith.addf %736, %741 : vector<2x64xf32>
    %743 = vector.broadcast %739 : vector<2x1xf32> to vector<2x64xf32>
    %744 = arith.divf %742, %743 : vector<2x64xf32>
    %c0_152 = arith.constant 0 : index
    %c0_153 = arith.constant 0 : index
    %745 = vector.load %arg13[%c0_152, %c0_153] : memref<64x32xf32, #tpu.memory_space<vmem>>, vector<64x32xf32>
    %cst_154 = arith.constant dense<0.000000e+00> : vector<2x32xf32>
    %746 = tpu.matmul %744, %745, %cst_154 {dimension_numbers = #tpu.dot_dimension_numbers<[1], [0], [0], [1], [0, 0, 1, 1], [], []>} : vector<2x64xf32>, vector<64x32xf32>, vector<2x32xf32> -> vector<2x32xf32>
    %c0_155 = arith.constant 0 : index
    %c0_156 = arith.constant 0 : index
    %747 = vector.load %arg14[%c0_155, %c0_156] : memref<1x32xf32, #tpu.memory_space<vmem>>, vector<1x32xf32>
    %748 = vector.broadcast %747 : vector<1x32xf32> to vector<2x32xf32>
    %749 = arith.addf %746, %748 : vector<2x32xf32>
    %cst_157 = arith.constant 0.000000e+00 : f32
    %750 = vector.broadcast %cst_157 : f32 to vector<2x32xf32>
    %751 = arith.maximumf %749, %750 : vector<2x32xf32>
    %c0_158 = arith.constant 0 : index
    %c0_159 = arith.constant 0 : index
    %752 = vector.load %arg15[%c0_158, %c0_159] : memref<32x1xf32, #tpu.memory_space<vmem>>, vector<32x1xf32>
    %cst_160 = arith.constant dense<0.000000e+00> : vector<2x1xf32>
    %753 = tpu.matmul %751, %752, %cst_160 {dimension_numbers = #tpu.dot_dimension_numbers<[1], [0], [0], [1], [0, 0, 1, 1], [], []>} : vector<2x32xf32>, vector<32x1xf32>, vector<2x1xf32> -> vector<2x1xf32>
    %c0_161 = arith.constant 0 : index
    %c0_162 = arith.constant 0 : index
    %754 = vector.load %arg16[%c0_161, %c0_162] : memref<1x1xf32, #tpu.memory_space<vmem>>, vector<1x1xf32>
    %755 = vector.broadcast %754 : vector<1x1xf32> to vector<2x1xf32>
    %756 = arith.addf %753, %755 : vector<2x1xf32>
    %c0_163 = arith.constant 0 : index
    %c0_164 = arith.constant 0 : index
    %757 = vector.load %arg17[%c0_163, %c0_164] : memref<2x1xf32, #tpu.memory_space<vmem>>, vector<2x1xf32>
    tpu.vector_store %arg17[%c0_163, %c0_164], %756 {strides = array<i32>} : memref<2x1xf32, #tpu.memory_space<vmem>>, vector<2x1xf32>,
    return
  }
}

</mosaic_0001>

<llo_original>
// kernel: rnn_forward.1
$region0: #{rnn_forward.1}
  #allocation0 [shape = 'u32[]', space=smem, size = 0x4, offset = 0x4, fixed_abs, tag = 'smem constant byte address 0x4 - core index']
  #allocation1 [shape = 'u32[144,128]{1,0:T(1,128)}', space=vmem, size = 0x12000, scoped, tag = 'internal scratch']
  #allocation2 [shape = 'f32[16,64]{1,0:T(8,128)}', space=vmem, size = 0x2000, scoped, tag = 'scratch operand']
  #allocation3 [shape = 'f32[1,1]{1,0:T(1,128)S(1)}', space=vmem, size = 0x200, scoped, tag = 'scoped memory for rnn_forward.1']
  %s0 = inlined_call_operand.vmem [shape: f32[16,8], index: 0, kind: input, shape index: {}]
  %s1 = inlined_call_operand.vmem [shape: f32[8,256], index: 1, kind: input, shape index: {}]
  %s2 = inlined_call_operand.vmem [shape: f32[64,256], index: 2, kind: input, shape index: {}]
  %s3 = inlined_call_operand.vmem [shape: f32[1,256], index: 3, kind: input, shape index: {}]
  %s4 = inlined_call_operand.hbm [shape: f32[64,256], index: 4, kind: input, shape index: {}]
  %s5 = inlined_call_operand.hbm [shape: f32[64,256], index: 5, kind: input, shape index: {}]
  %s6 = inlined_call_operand.vmem [shape: f32[1,256], index: 6, kind: input, shape index: {}]
  %s7 = inlined_call_operand.hbm [shape: f32[64,256], index: 7, kind: input, shape index: {}]
  %s8 = inlined_call_operand.hbm [shape: f32[64,256], index: 8, kind: input, shape index: {}]
  %s9 = inlined_call_operand.vmem [shape: f32[1,256], index: 9, kind: input, shape index: {}]
  %s10 = inlined_call_operand.vmem [shape: f32[64,64], index: 10, kind: input, shape index: {}]
  %s11 = inlined_call_operand.vmem [shape: f32[1,64], index: 11, kind: input, shape index: {}]
  %s12 = inlined_call_operand.vmem [shape: f32[1,64], index: 12, kind: input, shape index: {}]
  %s13 = inlined_call_operand.vmem [shape: f32[64,32], index: 13, kind: input, shape index: {}]
  %s14 = inlined_call_operand.vmem [shape: f32[1,32], index: 14, kind: input, shape index: {}]
  %s15 = inlined_call_operand.vmem [shape: f32[32,1], index: 15, kind: input, shape index: {}]
  %s16 = inlined_call_operand.<no memory space> [shape: f32[1,1], index: 16, kind: input, shape index: {}]
  %s17 = inlined_call_operand.vmem [shape: f32[2,1], index: 17, kind: output, shape index: {}]
  %s18 = sld [smem:[#allocation0]]
  $region94: #{rnn_forward.1} parent=0
    _
  %s20 = ssub.s32 1, %s18
  %s21 = scalar_select 0, %s20, %s18
  %v22 = vstv %s16
  %23 = vst [vmem:[#allocation3] sm:$0x1] %v22
  $region1: #{rnn_forward.1} parent=0
    #allocation4 [shape = 'u8[65536]{0}', space=vmem, size = 0x10000, scoped, tag = 'input window, operand 4, single buffered']
    #allocation5 [shape = 's32[1]{0}', space=sflag, size = 0x4, scoped, tag = 'scoped memory for rnn_forward.1']
    #allocation6 [shape = 'u8[65536]{0}', space=vmem, size = 0x10000, scoped, tag = 'input window, operand 5, single buffered']
    #allocation7 [shape = 's32[1]{0}', space=sflag, size = 0x4, scoped, tag = 'scoped memory for rnn_forward.1']
    #allocation8 [shape = 'u8[65536]{0}', space=vmem, size = 0x10000, scoped, tag = 'input window, operand 7, single buffered']
    #allocation9 [shape = 'u8[65536]{0}', space=vmem, size = 0x10000, scoped, tag = 'input window, operand 8, single buffered']
    #allocation10 [shape = 's32[1]{0}', space=sflag, size = 0x4, scoped, tag = 'scoped memory for rnn_forward.1']
    %24 = vsyncpa [#allocation5], 0
    %25 = vsyncpa [#allocation7], 0
    %26 = vsyncpa [#allocation10], 0
    // Predicated region
    $region2: #{rnn_forward.1} parent=1 // pred_check
      _
    $region3: #{rnn_forward.1} parent=1 // pred_check_branch
      %28 = sbr.rel (0) target = $region5
    $region4: #{rnn_forward.1} parent=1 // pred_region
      _
    $region5: #{rnn_forward.1} parent=1 // pred_fallthru
      _
    // Predicated region
    $region6: #{rnn_forward.1} parent=1 // pred_check
      _
    $region7: #{rnn_forward.1} parent=1 // pred_check_branch
      %30 = sbr.rel (0) target = $region9
    $region8: #{rnn_forward.1} parent=1 // pred_region
      _
    $region9: #{rnn_forward.1} parent=1 // pred_fallthru
      _
    // Predicated region
    $region10: #{rnn_forward.1} parent=1 // pred_check
      _
    $region11: #{rnn_forward.1} parent=1 // pred_check_branch
      %32 = sbr.rel (0) target = $region13
    $region12: #{rnn_forward.1} parent=1 // pred_region
      _
    $region13: #{rnn_forward.1} parent=1 // pred_fallthru
      _
    // Predicated region
    $region14: #{rnn_forward.1} parent=1 // pred_check
      _
    $region15: #{rnn_forward.1} parent=1 // pred_check_branch
      %34 = sbr.rel (0) target = $region17
    $region16: #{rnn_forward.1} parent=1 // pred_region
      _
    $region17: #{rnn_forward.1} parent=1 // pred_fallthru
      _
    // Predicated region
    $region18: #{rnn_forward.1} parent=1 // pred_check
      _
    $region19: #{rnn_forward.1} parent=1 // pred_check_branch
      %36 = sbr.rel (0) target = $region21
    $region20: #{rnn_forward.1} parent=1 // pred_region
      %s38 = ssub.s32 2048, 2048
      %39 = vsyncadd [#allocation5], %s38
      %s40 = sshll.u32 [#allocation4], 4
      %s41 = int_to_ptr.vmem [resolvable:$true] %s40
      %46 = dma.hbm_to_vmem [thread:$0]  %s4, 2048, %s41, [#allocation5], 256, 256, 16
    $region21: #{rnn_forward.1} parent=1 // pred_fallthru
      _
    // Predicated region
    $region22: #{rnn_forward.1} parent=1 // pred_check
      _
    $region23: #{rnn_forward.1} parent=1 // pred_check_branch
      %48 = sbr.rel (0) target = $region25
    $region24: #{rnn_forward.1} parent=1 // pred_region
      %s50 = ssub.s32 2048, 2048
      %51 = vsyncadd [#allocation7], %s50
      %s52 = sshll.u32 [#allocation6], 4
      %s53 = int_to_ptr.vmem [resolvable:$true] %s52
      %58 = dma.hbm_to_vmem [thread:$0]  %s5, 2048, %s53, [#allocation7], 256, 256, 16
    $region25: #{rnn_forward.1} parent=1 // pred_fallthru
      _
    // Predicated region
    $region26: #{rnn_forward.1} parent=1 // pred_check
      _
    $region27: #{rnn_forward.1} parent=1 // pred_check_branch
      %60 = sbr.rel (0) target = $region29
    $region28: #{rnn_forward.1} parent=1 // pred_region
      _
    $region29: #{rnn_forward.1} parent=1 // pred_fallthru
      _
    // Predicated region
    $region30: #{rnn_forward.1} parent=1 // pred_check
      _
    $region31: #{rnn_forward.1} parent=1 // pred_check_branch
      %62 = sbr.rel (0) target = $region33
    $region32: #{rnn_forward.1} parent=1 // pred_region
      %s64 = ssub.s32 2048, 2048
      %65 = vsyncadd [#allocation7], %s64
      %s66 = sshll.u32 [#allocation8], 4
      %s67 = int_to_ptr.vmem [resolvable:$true] %s66
      %72 = dma.hbm_to_vmem [thread:$0]  %s7, 2048, %s67, [#allocation7], 256, 256, 16
    $region33: #{rnn_forward.1} parent=1 // pred_fallthru
      _
    // Predicated region
    $region34: #{rnn_forward.1} parent=1 // pred_check
      _
    $region35: #{rnn_forward.1} parent=1 // pred_check_branch
      %74 = sbr.rel (0) target = $region37
    $region36: #{rnn_forward.1} parent=1 // pred_region
      %s76 = ssub.s32 2048, 2048
      %77 = vsyncadd [#allocation10], %s76
      %s78 = sshll.u32 [#allocation9], 4
      %s79 = int_to_ptr.vmem [resolvable:$true] %s78
      %84 = dma.hbm_to_vmem [thread:$0]  %s8, 2048, %s79, [#allocation10], 256, 256, 16
    $region37: #{rnn_forward.1} parent=1 // pred_fallthru
      _
    // Predicated region
    $region38: #{rnn_forward.1} parent=1 // pred_check
      _
    $region39: #{rnn_forward.1} parent=1 // pred_check_branch
      %86 = sbr.rel (0) target = $region41
    $region40: #{rnn_forward.1} parent=1 // pred_region
      _
    $region41: #{rnn_forward.1} parent=1 // pred_fallthru
      _
    // Predicated region
    $region42: #{rnn_forward.1} parent=1 // pred_check
      _
    $region43: #{rnn_forward.1} parent=1 // pred_check_branch
      %88 = sbr.rel (0) target = $region45
    $region44: #{rnn_forward.1} parent=1 // pred_region
      _
    $region45: #{rnn_forward.1} parent=1 // pred_fallthru
      _
    // Predicated region
    $region46: #{rnn_forward.1} parent=1 // pred_check
      _
    $region47: #{rnn_forward.1} parent=1 // pred_check_branch
      %90 = sbr.rel (0) target = $region49
    $region48: #{rnn_forward.1} parent=1 // pred_region
      _
    $region49: #{rnn_forward.1} parent=1 // pred_fallthru
      _
    // Predicated region
    $region50: #{rnn_forward.1} parent=1 // pred_check
      _
    $region51: #{rnn_forward.1} parent=1 // pred_check_branch
      %92 = sbr.rel (0) target = $region53
    $region52: #{rnn_forward.1} parent=1 // pred_region
      _
    $region53: #{rnn_forward.1} parent=1 // pred_fallthru
      _
    // Predicated region
    $region54: #{rnn_forward.1} parent=1 // pred_check
      _
    $region55: #{rnn_forward.1} parent=1 // pred_check_branch
      %94 = sbr.rel (0) target = $region57
    $region56: #{rnn_forward.1} parent=1 // pred_region
      _
    $region57: #{rnn_forward.1} parent=1 // pred_fallthru
      _
    // Predicated region
    $region58: #{rnn_forward.1} parent=1 // pred_check
      _
    $region59: #{rnn_forward.1} parent=1 // pred_check_branch
      %96 = sbr.rel (0) target = $region61
    $region60: #{rnn_forward.1} parent=1 // pred_region
      _
    $region61: #{rnn_forward.1} parent=1 // pred_fallthru
      _
    // Predicated region
    $region62: #{rnn_forward.1} parent=1 // pred_check
      _
    $region63: #{rnn_forward.1} parent=1 // pred_check_branch
      %98 = sbr.rel (0) target = $region65
    $region64: #{rnn_forward.1} parent=1 // pred_region
      _
    $region65: #{rnn_forward.1} parent=1 // pred_fallthru
      _
    // Predicated region
    $region66: #{rnn_forward.1} parent=1 // pred_check
      _
    $region67: #{rnn_forward.1} parent=1 // pred_check_branch
      %100 = sbr.rel (0) target = $region69
    $region68: #{rnn_forward.1} parent=1 // pred_region
      _
    $region69: #{rnn_forward.1} parent=1 // pred_fallthru
      _
    // Predicated region
    $region70: #{rnn_forward.1} parent=1 // pred_check
      _
    $region71: #{rnn_forward.1} parent=1 // pred_check_branch
      %102 = sbr.rel (0) target = $region73
    $region72: #{rnn_forward.1} parent=1 // pred_region
      %103 = dma.done [#allocation5], 2048
    $region73: #{rnn_forward.1} parent=1 // pred_fallthru
      _
    // Predicated region
    $region74: #{rnn_forward.1} parent=1 // pred_check
      _
    $region75: #{rnn_forward.1} parent=1 // pred_check_branch
      %105 = sbr.rel (0) target = $region77
    $region76: #{rnn_forward.1} parent=1 // pred_region
      %106 = dma.done [#allocation7], 2048
    $region77: #{rnn_forward.1} parent=1 // pred_fallthru
      _
    // Predicated region
    $region78: #{rnn_forward.1} parent=1 // pred_check
      _
    $region79: #{rnn_forward.1} parent=1 // pred_check_branch
      %108 = sbr.rel (0) target = $region81
    $region80: #{rnn_forward.1} parent=1 // pred_region
      %109 = dma.done [#allocation7], 2048
    $region81: #{rnn_forward.1} parent=1 // pred_fallthru
      _
    // Predicated region
    $region82: #{rnn_forward.1} parent=1 // pred_check
      _
    $region83: #{rnn_forward.1} parent=1 // pred_check_branch
      %111 = sbr.rel (0) target = $region85
    $region84: #{rnn_forward.1} parent=1 // pred_region
      %112 = dma.done [#allocation10], 2048
    $region85: #{rnn_forward.1} parent=1 // pred_fallthru
      _
    %v113 = vld [vmem:[%s0] sm:$0xff]
    %v114 = vld [vmem:[%s0 + $0x8] sm:$0xff]
    %v115 = vld [vmem:[%s1] sm:$0xff]
    %v116 = vld [vmem:[%s1 + $0x8] sm:$0xff]
    %v117 = vld [vmem:[%s3] sm:$0x3]
    %v119 = vlaneseq
    %v120 = vshrl.u32 %v119, 7
    %v121 = vsub.s32 0, %v120
    %v122 = vrot.slane %v117, %v121
    %v123 = vlaneseq
    %v124 = vshrl.u32 %v123, 7
    %v125 = vsub.s32 1, %v124
    %v126 = vrot.slane %v117, %v125
    %vm129 = vcmask 64512
    %v131 = vsel %vm129, %v113, 0
    %v134 = vsel %vm129, %v114, 0
    %136 = vmatprep.subr.mxu0 %v116
    %137 = vmatpush1.msra.mxu0 %v115
    %138 = vmatprep.subr.mxu0 0.0
    %139 = vmatpush1.msra.mxu0 0.0
    %140 = vmatprep.subr.mxu0 0.0
    %141 = vmatpush1.msra.mxu0 0.0
    %142 = vmatprep.subr.mxu0 0.0
    %143 = vmatpush1.msra.mxu0 0.0
    %144 = vmatprep.subr.mxu0 0.0
    %145 = vmatpush1.msra.mxu0 0.0
    %146 = vmatprep.subr.mxu0 0.0
    %147 = vmatpush1.msra.mxu0 0.0
    %148 = vmatprep.subr.mxu0 0.0
    %149 = vmatpush1.msra.mxu0 0.0
    %150 = vmatprep.subr.mxu0 0.0
    %151 = vmatpush1.msra.mxu0 0.0
    %152 = vmatprep.subr.mxu0 0.0
    %153 = vmatpush1.msra.mxu0 0.0
    %154 = vmatprep.subr.mxu0 0.0
    %155 = vmatpush1.msra.mxu0 0.0
    %156 = vmatprep.subr.mxu0 0.0
    %157 = vmatpush1.msra.mxu0 0.0
    %158 = vmatprep.subr.mxu0 0.0
    %159 = vmatpush1.msra.mxu0 0.0
    %160 = vmatprep.subr.mxu0 0.0
    %161 = vmatpush1.msra.mxu0 0.0
    %162 = vmatprep.subr.mxu0 0.0
    %163 = vmatpush1.msra.mxu0 0.0
    %164 = vmatprep.subr.mxu0 0.0
    %165 = vmatpush1.msra.mxu0 0.0
    %166 = vmatprep.subr.mxu0 0.0
    %167 = vmatpush1.msra.mxu0 0.0
    %168 = vmatprep.subr.mxu0 0.0
    %169 = vmatpush1.msra.mxu0 0.0
    %170 = vmatprep.subr.mxu0 0.0
    %171 = vmatpush1.msra.mxu0 0.0
    %172 = vmatprep.subr.mxu0 0.0
    %173 = vmatpush1.msra.mxu0 0.0
    %174 = vmatprep.subr.mxu0 0.0
    %175 = vmatpush1.msra.mxu0 0.0
    %176 = vmatprep.subr.mxu0 0.0
    %177 = vmatpush1.msra.mxu0 0.0
    %178 = vmatprep.subr.mxu0 0.0
    %179 = vmatpush1.msra.mxu0 0.0
    %180 = vmatprep.subr.mxu0 0.0
    %181 = vmatpush1.msra.mxu0 0.0
    %182 = vmatprep.subr.mxu0 0.0
    %183 = vmatpush1.msra.mxu0 0.0
    %184 = vmatprep.subr.mxu0 0.0
    %185 = vmatpush1.msra.mxu0 0.0
    %186 = vmatprep.subr.mxu0 0.0
    %187 = vmatpush1.msra.mxu0 0.0
    %188 = vmatprep.subr.mxu0 0.0
    %189 = vmatpush1.msra.mxu0 0.0
    %190 = vmatprep.subr.mxu0 0.0
    %191 = vmatpush1.msra.mxu0 0.0
    %192 = vmatprep.subr.mxu0 0.0
    %193 = vmatpush1.msra.mxu0 0.0
    %194 = vmatprep.subr.mxu0 0.0
    %195 = vmatpush1.msra.mxu0 0.0
    %196 = vmatprep.subr.mxu0 0.0
    %197 = vmatpush1.msra.mxu0 0.0
    %198 = vmatprep.subr.mxu0 0.0
    %199 = vmatpush1.msra.mxu0 0.0
    %200 = vmatprep.mubr.f32.mxu0 0.0
    %201 = vmatmul.mubr.f32.gmra.mrb[0].mxu0 %v131
    %v202 = vpop.f32.mrb[0].mxu0
    %v203 = vadd.f32 %v122, %v202
    %v204 = vpop.f32.mrb[0].mxu0
    %v205 = vadd.f32 %v126, %v204
    %206 = vmatprep.mubr.f32.mxu0 0.0
    %207 = vmatmul.mubr.f32.gmra.mrb[0].mxu0 %v134
    %v208 = vpop.f32.mrb[0].mxu0
    %v209 = vadd.f32 %v122, %v208
    %v210 = vpop.f32.mrb[0].mxu0
    %v211 = vadd.f32 %v126, %v210
    %212 = vdwg.mxu0
    %v213 = vld [vmem:[%s2] sm:$0xff]
    %v214 = vld [vmem:[%s2 + $0x8] sm:$0xff]
    %v215 = vld [vmem:[%s2 + $0x10] sm:$0xff]
    %v216 = vld [vmem:[%s2 + $0x18] sm:$0xff]
    %v217 = vld [vmem:[%s2 + $0x20] sm:$0xff]
    %v218 = vld [vmem:[%s2 + $0x28] sm:$0xff]
    %v219 = vld [vmem:[%s2 + $0x30] sm:$0xff]
    %v220 = vld [vmem:[%s2 + $0x38] sm:$0xff]
    %v221 = vld [vmem:[%s2 + $0x40] sm:$0xff]
    %v222 = vld [vmem:[%s2 + $0x48] sm:$0xff]
    %v223 = vld [vmem:[%s2 + $0x50] sm:$0xff]
    %v224 = vld [vmem:[%s2 + $0x58] sm:$0xff]
    %v225 = vld [vmem:[%s2 + $0x60] sm:$0xff]
    %v226 = vld [vmem:[%s2 + $0x68] sm:$0xff]
    %v227 = vld [vmem:[%s2 + $0x70] sm:$0xff]
    %v228 = vld [vmem:[%s2 + $0x78] sm:$0xff]
    %vm229 = vcmask 523264
    %v231 = vsel %vm229, 0.0, 0
    %233 = vmatprep.subr.mxu0 %v214
    %234 = vmatpush1.msra.mxu0 %v213
    %235 = vmatprep.subr.mxu0 %v216
    %236 = vmatpush1.msra.mxu0 %v215
    %237 = vmatprep.subr.mxu0 %v218
    %238 = vmatpush1.msra.mxu0 %v217
    %239 = vmatprep.subr.mxu0 %v220
    %240 = vmatpush1.msra.mxu0 %v219
    %241 = vmatprep.subr.mxu0 %v222
    %242 = vmatpush1.msra.mxu0 %v221
    %243 = vmatprep.subr.mxu0 %v224
    %244 = vmatpush1.msra.mxu0 %v223
    %245 = vmatprep.subr.mxu0 %v226
    %246 = vmatpush1.msra.mxu0 %v225
    %247 = vmatprep.subr.mxu0 %v228
    %248 = vmatpush1.msra.mxu0 %v227
    %249 = vmatprep.subr.mxu0 0.0
    %250 = vmatpush1.msra.mxu0 0.0
    %251 = vmatprep.subr.mxu0 0.0
    %252 = vmatpush1.msra.mxu0 0.0
    %253 = vmatprep.subr.mxu0 0.0
    %254 = vmatpush1.msra.mxu0 0.0
    %255 = vmatprep.subr.mxu0 0.0
    %256 = vmatpush1.msra.mxu0 0.0
    %257 = vmatprep.subr.mxu0 0.0
    %258 = vmatpush1.msra.mxu0 0.0
    %259 = vmatprep.subr.mxu0 0.0
    %260 = vmatpush1.msra.mxu0 0.0
    %261 = vmatprep.subr.mxu0 0.0
    %262 = vmatpush1.msra.mxu0 0.0
    %263 = vmatprep.subr.mxu0 0.0
    %264 = vmatpush1.msra.mxu0 0.0
    %265 = vmatprep.subr.mxu0 0.0
    %266 = vmatpush1.msra.mxu0 0.0
    %267 = vmatprep.subr.mxu0 0.0
    %268 = vmatpush1.msra.mxu0 0.0
    %269 = vmatprep.subr.mxu0 0.0
    %270 = vmatpush1.msra.mxu0 0.0
    %271 = vmatprep.subr.mxu0 0.0
    %272 = vmatpush1.msra.mxu0 0.0
    %273 = vmatprep.subr.mxu0 0.0
    %274 = vmatpush1.msra.mxu0 0.0
    %275 = vmatprep.subr.mxu0 0.0
    %276 = vmatpush1.msra.mxu0 0.0
    %277 = vmatprep.subr.mxu0 0.0
    %278 = vmatpush1.msra.mxu0 0.0
    %279 = vmatprep.subr.mxu0 0.0
    %280 = vmatpush1.msra.mxu0 0.0
    %281 = vmatprep.subr.mxu0 0.0
    %282 = vmatpush1.msra.mxu0 0.0
    %283 = vmatprep.subr.mxu0 0.0
    %284 = vmatpush1.msra.mxu0 0.0
    %285 = vmatprep.subr.mxu0 0.0
    %286 = vmatpush1.msra.mxu0 0.0
    %287 = vmatprep.subr.mxu0 0.0
    %288 = vmatpush1.msra.mxu0 0.0
    %289 = vmatprep.subr.mxu0 0.0
    %290 = vmatpush1.msra.mxu0 0.0
    %291 = vmatprep.subr.mxu0 0.0
    %292 = vmatpush1.msra.mxu0 0.0
    %293 = vmatprep.subr.mxu0 0.0
    %294 = vmatpush1.msra.mxu0 0.0
    %295 = vmatprep.subr.mxu0 0.0
    %296 = vmatpush1.msra.mxu0 0.0
    %297 = vmatprep.mubr.f32.mxu0 0.0
    %298 = vmatmul.mubr.f32.gmra.mrb[0].mxu0 %v231
    %v299 = vpop.f32.mrb[0].mxu0
    %v300 = vadd.f32 0.0, %v299
    %v301 = vpop.f32.mrb[0].mxu0
    %v302 = vadd.f32 0.0, %v301
    %303 = vdwg.mxu0
    %v304 = vadd.f32 %v203, %v300
    %v305 = vadd.f32 %v205, %v302
    %v306 = vxor.u32 %v304, 2147483648
    %v307 = vmul.f32 %v306, 1.442695
    %v308 = vpow.pop %v307
    %v309 = vadd.f32 %v308, 1.0
    %v310 = vrcp.pop %v309
    %v311 = vmul.f32 1.0, %v310
    %v312 = vtanh.pop %v305
    %v313 = vxor.u32 %v305, 2147483648
    %v314 = vmul.f32 %v313, 1.442695
    %v315 = vpow.pop %v314
    %v316 = vadd.f32 %v315, 1.0
    %v317 = vrcp.pop %v316
    %v318 = vmul.f32 1.0, %v317
    %v319 = vmul.f32 %v311, 0.0
    %v320 = vmul.f32 %v311, %v312
    %322 = vrot.lane.b32.xlu0 %v320, 64
    %v323 = vpop.permute.xlu0 %322
    %v325 = vadd.f32 %v319, %v323
    %v326 = vtanh.pop %v325
    %v327 = vmul.f32 %v318, %v326
    %329 = vrot.lane.b32.xlu0 %v327, 64
    %v330 = vpop.permute.xlu0 %329
    %vm332 = vcmask 517120
    %333 = vst.msk [vmem:[#allocation2] sm:$0x3] %vm332, %v330
    %v334 = vsel %vm229, %v330, 0
    %336 = vmatprep.subr.mxu0 %v214
    %337 = vmatpush1.msra.mxu0 %v213
    %338 = vmatprep.subr.mxu0 %v216
    %339 = vmatpush1.msra.mxu0 %v215
    %340 = vmatprep.subr.mxu0 %v218
    %341 = vmatpush1.msra.mxu0 %v217
    %342 = vmatprep.subr.mxu0 %v220
    %343 = vmatpush1.msra.mxu0 %v219
    %344 = vmatprep.subr.mxu0 %v222
    %345 = vmatpush1.msra.mxu0 %v221
    %346 = vmatprep.subr.mxu0 %v224
    %347 = vmatpush1.msra.mxu0 %v223
    %348 = vmatprep.subr.mxu0 %v226
    %349 = vmatpush1.msra.mxu0 %v225
    %350 = vmatprep.subr.mxu0 %v228
    %351 = vmatpush1.msra.mxu0 %v227
    %352 = vmatprep.subr.mxu0 0.0
    %353 = vmatpush1.msra.mxu0 0.0
    %354 = vmatprep.subr.mxu0 0.0
    %355 = vmatpush1.msra.mxu0 0.0
    %356 = vmatprep.subr.mxu0 0.0
    %357 = vmatpush1.msra.mxu0 0.0
    %358 = vmatprep.subr.mxu0 0.0
    %359 = vmatpush1.msra.mxu0 0.0
    %360 = vmatprep.subr.mxu0 0.0
    %361 = vmatpush1.msra.mxu0 0.0
    %362 = vmatprep.subr.mxu0 0.0
    %363 = vmatpush1.msra.mxu0 0.0
    %364 = vmatprep.subr.mxu0 0.0
    %365 = vmatpush1.msra.mxu0 0.0
    %366 = vmatprep.subr.mxu0 0.0
    %367 = vmatpush1.msra.mxu0 0.0
    %368 = vmatprep.subr.mxu0 0.0
    %369 = vmatpush1.msra.mxu0 0.0
    %370 = vmatprep.subr.mxu0 0.0
    %371 = vmatpush1.msra.mxu0 0.0
    %372 = vmatprep.subr.mxu0 0.0
    %373 = vmatpush1.msra.mxu0 0.0
    %374 = vmatprep.subr.mxu0 0.0
    %375 = vmatpush1.msra.mxu0 0.0
    %376 = vmatprep.subr.mxu0 0.0
    %377 = vmatpush1.msra.mxu0 0.0
    %378 = vmatprep.subr.mxu0 0.0
    %379 = vmatpush1.msra.mxu0 0.0
    %380 = vmatprep.subr.mxu0 0.0
    %381 = vmatpush1.msra.mxu0 0.0
    %382 = vmatprep.subr.mxu0 0.0
    %383 = vmatpush1.msra.mxu0 0.0
    %384 = vmatprep.subr.mxu0 0.0
    %385 = vmatpush1.msra.mxu0 0.0
    %386 = vmatprep.subr.mxu0 0.0
    %387 = vmatpush1.msra.mxu0 0.0
    %388 = vmatprep.subr.mxu0 0.0
    %389 = vmatpush1.msra.mxu0 0.0
    %390 = vmatprep.subr.mxu0 0.0
    %391 = vmatpush1.msra.mxu0 0.0
    %392 = vmatprep.subr.mxu0 0.0
    %393 = vmatpush1.msra.mxu0 0.0
    %394 = vmatprep.subr.mxu0 0.0
    %395 = vmatpush1.msra.mxu0 0.0
    %396 = vmatprep.subr.mxu0 0.0
    %397 = vmatpush1.msra.mxu0 0.0
    %398 = vmatprep.subr.mxu0 0.0
    %399 = vmatpush1.msra.mxu0 0.0
    %400 = vmatprep.mubr.f32.mxu0 0.0
    %401 = vmatmul.mubr.f32.gmra.mrb[0].mxu0 %v334
    %v402 = vpop.f32.mrb[0].mxu0
    %v403 = vadd.f32 0.0, %v402
    %v404 = vpop.f32.mrb[0].mxu0
    %v405 = vadd.f32 0.0, %v404
    %406 = vdwg.mxu0
    %v409 = vrot.slane %v403, 6
    %v410 = vrot.slane %v405, 6
    %v413 = vadd.f32 %v203, %v409
    %v414 = vadd.f32 %v205, %v410
    %v415 = vxor.u32 %v413, 2147483648
    %v416 = vmul.f32 %v415, 1.442695
    %v417 = vpow.pop %v416
    %v418 = vadd.f32 %v417, 1.0
    %v419 = vrcp.pop %v418
    %v420 = vmul.f32 1.0, %v419
    %v421 = vtanh.pop %v414
    %v422 = vxor.u32 %v414, 2147483648
    %v423 = vmul.f32 %v422, 1.442695
    %v424 = vpow.pop %v423
    %v425 = vadd.f32 %v424, 1.0
    %v426 = vrcp.pop %v425
    %v427 = vmul.f32 1.0, %v426
    %v429 = vrot.slane %v325, 6
    %v431 = vmul.f32 %v420, %v429
    %v432 = vmul.f32 %v420, %v421
    %434 = vrot.lane.b32.xlu0 %v432, 64
    %v435 = vpop.permute.xlu0 %434
    %v437 = vadd.f32 %v431, %v435
    %v438 = vtanh.pop %v437
    %v439 = vmul.f32 %v427, %v438
    %441 = vrot.lane.b32.xlu0 %v439, 64
    %v442 = vpop.permute.xlu0 %441
    %vm444 = vcmask 519170
    %445 = vst.msk [vmem:[#allocation2] sm:$0xc] %vm444, %v442
    %v446 = vrot.slane %v439, 2
    %447 = vrot.lane.b32.xlu0 %v446, 64
    %v448 = vpop.permute.xlu0 %447
    %v449 = vsel %vm229, %v448, 0
    %451 = vmatprep.subr.mxu0 %v214
    %452 = vmatpush1.msra.mxu0 %v213
    %453 = vmatprep.subr.mxu0 %v216
    %454 = vmatpush1.msra.mxu0 %v215
    %455 = vmatprep.subr.mxu0 %v218
    %456 = vmatpush1.msra.mxu0 %v217
    %457 = vmatprep.subr.mxu0 %v220
    %458 = vmatpush1.msra.mxu0 %v219
    %459 = vmatprep.subr.mxu0 %v222
    %460 = vmatpush1.msra.mxu0 %v221
    %461 = vmatprep.subr.mxu0 %v224
    %462 = vmatpush1.msra.mxu0 %v223
    %463 = vmatprep.subr.mxu0 %v226
    %464 = vmatpush1.msra.mxu0 %v225
    %465 = vmatprep.subr.mxu0 %v228
    %466 = vmatpush1.msra.mxu0 %v227
    %467 = vmatprep.subr.mxu0 0.0
    %468 = vmatpush1.msra.mxu0 0.0
    %469 = vmatprep.subr.mxu0 0.0
    %470 = vmatpush1.msra.mxu0 0.0
    %471 = vmatprep.subr.mxu0 0.0
    %472 = vmatpush1.msra.mxu0 0.0
    %473 = vmatprep.subr.mxu0 0.0
    %474 = vmatpush1.msra.mxu0 0.0
    %475 = vmatprep.subr.mxu0 0.0
    %476 = vmatpush1.msra.mxu0 0.0
    %477 = vmatprep.subr.mxu0 0.0
    %478 = vmatpush1.msra.mxu0 0.0
    %479 = vmatprep.subr.mxu0 0.0
    %480 = vmatpush1.msra.mxu0 0.0
    %481 = vmatprep.subr.mxu0 0.0
    %482 = vmatpush1.msra.mxu0 0.0
    %483 = vmatprep.subr.mxu0 0.0
    %484 = vmatpush1.msra.mxu0 0.0
    %485 = vmatprep.subr.mxu0 0.0
    %486 = vmatpush1.msra.mxu0 0.0
    %487 = vmatprep.subr.mxu0 0.0
    %488 = vmatpush1.msra.mxu0 0.0
    %489 = vmatprep.subr.mxu0 0.0
    %490 = vmatpush1.msra.mxu0 0.0
    %491 = vmatprep.subr.mxu0 0.0
    %492 = vmatpush1.msra.mxu0 0.0
    %493 = vmatprep.subr.mxu0 0.0
    %494 = vmatpush1.msra.mxu0 0.0
    %495 = vmatprep.subr.mxu0 0.0
    %496 = vmatpush1.msra.mxu0 0.0
    %497 = vmatprep.subr.mxu0 0.0
    %498 = vmatpush1.msra.mxu0 0.0
    %499 = vmatprep.subr.mxu0 0.0
    %500 = vmatpush1.msra.mxu0 0.0
    %501 = vmatprep.subr.mxu0 0.0
    %502 = vmatpush1.msra.mxu0 0.0
    %503 = vmatprep.subr.mxu0 0.0
    %504 = vmatpush1.msra.mxu0 0.0
    %505 = vmatprep.subr.mxu0 0.0
    %506 = vmatpush1.msra.mxu0 0.0
    %507 = vmatprep.subr.mxu0 0.0
    %508 = vmatpush1.msra.mxu0 0.0
    %509 = vmatprep.subr.mxu0 0.0
    %510 = vmatpush1.msra.mxu0 0.0
    %511 = vmatprep.subr.mxu0 0.0
    %512 = vmatpush1.msra.mxu0 0.0
    %513 = vmatprep.subr.mxu0 0.0
    %514 = vmatpush1.msra.mxu0 0.0
    %515 = vmatprep.mubr.f32.mxu0 0.0
    %516 = vmatmul.mubr.f32.gmra.mrb[0].mxu0 %v449
    %v517 = vpop.f32.mrb[0].mxu0
    %v518 = vadd.f32 0.0, %v517
    %v519 = vpop.f32.mrb[0].mxu0
    %v520 = vadd.f32 0.0, %v519
    %521 = vdwg.mxu0
    %v524 = vrot.slane %v518, 4
    %v525 = vrot.slane %v520, 4
    %v528 = vadd.f32 %v203, %v524
    %v529 = vadd.f32 %v205, %v525
    %v530 = vxor.u32 %v528, 2147483648
    %v531 = vmul.f32 %v530, 1.442695
    %v532 = vpow.pop %v531
    %v533 = vadd.f32 %v532, 1.0
    %v534 = vrcp.pop %v533
    %v535 = vmul.f32 1.0, %v534
    %v536 = vtanh.pop %v529
    %v537 = vxor.u32 %v529, 2147483648
    %v538 = vmul.f32 %v537, 1.442695
    %v539 = vpow.pop %v538
    %v540 = vadd.f32 %v539, 1.0
    %v541 = vrcp.pop %v540
    %v542 = vmul.f32 1.0, %v541
    %v544 = vrot.slane %v437, 6
    %v546 = vmul.f32 %v535, %v544
    %v547 = vmul.f32 %v535, %v536
    %549 = vrot.lane.b32.xlu0 %v547, 64
    %v550 = vpop.permute.xlu0 %549
    %v552 = vadd.f32 %v546, %v550
    %v553 = vtanh.pop %v552
    %v554 = vmul.f32 %v542, %v553
    %556 = vrot.lane.b32.xlu0 %v554, 64
    %v557 = vpop.permute.xlu0 %556
    %vm559 = vcmask 521220
    %560 = vst.msk [vmem:[#allocation2] sm:$0x30] %vm559, %v557
    %v561 = vrot.slane %v554, 4
    %562 = vrot.lane.b32.xlu0 %v561, 64
    %v563 = vpop.permute.xlu0 %562
    %v564 = vsel %vm229, %v563, 0
    %566 = vmatprep.subr.mxu0 %v214
    %567 = vmatpush1.msra.mxu0 %v213
    %568 = vmatprep.subr.mxu0 %v216
    %569 = vmatpush1.msra.mxu0 %v215
    %570 = vmatprep.subr.mxu0 %v218
    %571 = vmatpush1.msra.mxu0 %v217
    %572 = vmatprep.subr.mxu0 %v220
    %573 = vmatpush1.msra.mxu0 %v219
    %574 = vmatprep.subr.mxu0 %v222
    %575 = vmatpush1.msra.mxu0 %v221
    %576 = vmatprep.subr.mxu0 %v224
    %577 = vmatpush1.msra.mxu0 %v223
    %578 = vmatprep.subr.mxu0 %v226
    %579 = vmatpush1.msra.mxu0 %v225
    %580 = vmatprep.subr.mxu0 %v228
    %581 = vmatpush1.msra.mxu0 %v227
    %582 = vmatprep.subr.mxu0 0.0
    %583 = vmatpush1.msra.mxu0 0.0
    %584 = vmatprep.subr.mxu0 0.0
    %585 = vmatpush1.msra.mxu0 0.0
    %586 = vmatprep.subr.mxu0 0.0
    %587 = vmatpush1.msra.mxu0 0.0
    %588 = vmatprep.subr.mxu0 0.0
    %589 = vmatpush1.msra.mxu0 0.0
    %590 = vmatprep.subr.mxu0 0.0
    %591 = vmatpush1.msra.mxu0 0.0
    %592 = vmatprep.subr.mxu0 0.0
    %593 = vmatpush1.msra.mxu0 0.0
    %594 = vmatprep.subr.mxu0 0.0
    %595 = vmatpush1.msra.mxu0 0.0
    %596 = vmatprep.subr.mxu0 0.0
    %597 = vmatpush1.msra.mxu0 0.0
    %598 = vmatprep.subr.mxu0 0.0
    %599 = vmatpush1.msra.mxu0 0.0
    %600 = vmatprep.subr.mxu0 0.0
    %601 = vmatpush1.msra.mxu0 0.0
    %602 = vmatprep.subr.mxu0 0.0
    %603 = vmatpush1.msra.mxu0 0.0
    %604 = vmatprep.subr.mxu0 0.0
    %605 = vmatpush1.msra.mxu0 0.0
    %606 = vmatprep.subr.mxu0 0.0
    %607 = vmatpush1.msra.mxu0 0.0
    %608 = vmatprep.subr.mxu0 0.0
    %609 = vmatpush1.msra.mxu0 0.0
    %610 = vmatprep.subr.mxu0 0.0
    %611 = vmatpush1.msra.mxu0 0.0
    %612 = vmatprep.subr.mxu0 0.0
    %613 = vmatpush1.msra.mxu0 0.0
    %614 = vmatprep.subr.mxu0 0.0
    %615 = vmatpush1.msra.mxu0 0.0
    %616 = vmatprep.subr.mxu0 0.0
    %617 = vmatpush1.msra.mxu0 0.0
    %618 = vmatprep.subr.mxu0 0.0
    %619 = vmatpush1.msra.mxu0 0.0
    %620 = vmatprep.subr.mxu0 0.0
    %621 = vmatpush1.msra.mxu0 0.0
    %622 = vmatprep.subr.mxu0 0.0
    %623 = vmatpush1.msra.mxu0 0.0
    %624 = vmatprep.subr.mxu0 0.0
    %625 = vmatpush1.msra.mxu0 0.0
    %626 = vmatprep.subr.mxu0 0.0
    %627 = vmatpush1.msra.mxu0 0.0
    %628 = vmatprep.subr.mxu0 0.0
    %629 = vmatpush1.msra.mxu0 0.0
    %630 = vmatprep.mubr.f32.mxu0 0.0
    %631 = vmatmul.mubr.f32.gmra.mrb[0].mxu0 %v564
    %v632 = vpop.f32.mrb[0].mxu0
    %v633 = vadd.f32 0.0, %v632
    %v634 = vpop.f32.mrb[0].mxu0
    %v635 = vadd.f32 0.0, %v634
    %636 = vdwg.mxu0
    %v639 = vrot.slane %v633, 2
    %v640 = vrot.slane %v635, 2
    %v643 = vadd.f32 %v203, %v639
    %v644 = vadd.f32 %v205, %v640
    %v645 = vxor.u32 %v643, 2147483648
    %v646 = vmul.f32 %v645, 1.442695
    %v647 = vpow.pop %v646
    %v648 = vadd.f32 %v647, 1.0
    %v649 = vrcp.pop %v648
    %v650 = vmul.f32 1.0, %v649
    %v651 = vtanh.pop %v644
    %v652 = vxor.u32 %v644, 2147483648
    %v653 = vmul.f32 %v652, 1.442695
    %v654 = vpow.pop %v653
    %v655 = vadd.f32 %v654, 1.0
    %v656 = vrcp.pop %v655
    %v657 = vmul.f32 1.0, %v656
    %v659 = vrot.slane %v552, 6
    %v661 = vmul.f32 %v650, %v659
    %v662 = vmul.f32 %v650, %v651
    %664 = vrot.lane.b32.xlu0 %v662, 64
    %v665 = vpop.permute.xlu0 %664
    %v667 = vadd.f32 %v661, %v665
    %v668 = vtanh.pop %v667
    %v669 = vmul.f32 %v657, %v668
    %671 = vrot.lane.b32.xlu0 %v669, 64
    %v672 = vpop.permute.xlu0 %671
    %vm674 = vcmask 523270
    %675 = vst.msk [vmem:[#allocation2] sm:$0xc0] %vm674, %v672
    %v676 = vrot.slane %v669, 6
    %677 = vrot.lane.b32.xlu0 %v676, 64
    %v678 = vpop.permute.xlu0 %677
    %v679 = vsel %vm229, %v678, 0
    %681 = vmatprep.subr.mxu0 %v214
    %682 = vmatpush1.msra.mxu0 %v213
    %683 = vmatprep.subr.mxu0 %v216
    %684 = vmatpush1.msra.mxu0 %v215
    %685 = vmatprep.subr.mxu0 %v218
    %686 = vmatpush1.msra.mxu0 %v217
    %687 = vmatprep.subr.mxu0 %v220
    %688 = vmatpush1.msra.mxu0 %v219
    %689 = vmatprep.subr.mxu0 %v222
    %690 = vmatpush1.msra.mxu0 %v221
    %691 = vmatprep.subr.mxu0 %v224
    %692 = vmatpush1.msra.mxu0 %v223
    %693 = vmatprep.subr.mxu0 %v226
    %694 = vmatpush1.msra.mxu0 %v225
    %695 = vmatprep.subr.mxu0 %v228
    %696 = vmatpush1.msra.mxu0 %v227
    %697 = vmatprep.subr.mxu0 0.0
    %698 = vmatpush1.msra.mxu0 0.0
    %699 = vmatprep.subr.mxu0 0.0
    %700 = vmatpush1.msra.mxu0 0.0
    %701 = vmatprep.subr.mxu0 0.0
    %702 = vmatpush1.msra.mxu0 0.0
    %703 = vmatprep.subr.mxu0 0.0
    %704 = vmatpush1.msra.mxu0 0.0
    %705 = vmatprep.subr.mxu0 0.0
    %706 = vmatpush1.msra.mxu0 0.0
    %707 = vmatprep.subr.mxu0 0.0
    %708 = vmatpush1.msra.mxu0 0.0
    %709 = vmatprep.subr.mxu0 0.0
    %710 = vmatpush1.msra.mxu0 0.0
    %711 = vmatprep.subr.mxu0 0.0
    %712 = vmatpush1.msra.mxu0 0.0
    %713 = vmatprep.subr.mxu0 0.0
    %714 = vmatpush1.msra.mxu0 0.0
    %715 = vmatprep.subr.mxu0 0.0
    %716 = vmatpush1.msra.mxu0 0.0
    %717 = vmatprep.subr.mxu0 0.0
    %718 = vmatpush1.msra.mxu0 0.0
    %719 = vmatprep.subr.mxu0 0.0
    %720 = vmatpush1.msra.mxu0 0.0
    %721 = vmatprep.subr.mxu0 0.0
    %722 = vmatpush1.msra.mxu0 0.0
    %723 = vmatprep.subr.mxu0 0.0
    %724 = vmatpush1.msra.mxu0 0.0
    %725 = vmatprep.subr.mxu0 0.0
    %726 = vmatpush1.msra.mxu0 0.0
    %727 = vmatprep.subr.mxu0 0.0
    %728 = vmatpush1.msra.mxu0 0.0
    %729 = vmatprep.subr.mxu0 0.0
    %730 = vmatpush1.msra.mxu0 0.0
    %731 = vmatprep.subr.mxu0 0.0
    %732 = vmatpush1.msra.mxu0 0.0
    %733 = vmatprep.subr.mxu0 0.0
    %734 = vmatpush1.msra.mxu0 0.0
    %735 = vmatprep.subr.mxu0 0.0
    %736 = vmatpush1.msra.mxu0 0.0
    %737 = vmatprep.subr.mxu0 0.0
    %738 = vmatpush1.msra.mxu0 0.0
    %739 = vmatprep.subr.mxu0 0.0
    %740 = vmatpush1.msra.mxu0 0.0
    %741 = vmatprep.subr.mxu0 0.0
    %742 = vmatpush1.msra.mxu0 0.0
    %743 = vmatprep.subr.mxu0 0.0
    %744 = vmatpush1.msra.mxu0 0.0
    %745 = vmatprep.mubr.f32.mxu0 0.0
    %746 = vmatmul.mubr.f32.gmra.mrb[0].mxu0 %v679
    %v747 = vpop.f32.mrb[0].mxu0
    %v748 = vadd.f32 0.0, %v747
    %v749 = vpop.f32.mrb[0].mxu0
    %v750 = vadd.f32 0.0, %v749
    %751 = vdwg.mxu0
    %v752 = vadd.f32 %v209, %v748
    %v753 = vadd.f32 %v211, %v750
    %v754 = vxor.u32 %v752, 2147483648
    %v755 = vmul.f32 %v754, 1.442695
    %v756 = vpow.pop %v755
    %v757 = vadd.f32 %v756, 1.0
    %v758 = vrcp.pop %v757
    %v759 = vmul.f32 1.0, %v758
    %v760 = vtanh.pop %v753
    %v761 = vxor.u32 %v753, 2147483648
    %v762 = vmul.f32 %v761, 1.442695
    %v763 = vpow.pop %v762
    %v764 = vadd.f32 %v763, 1.0
    %v765 = vrcp.pop %v764
    %v766 = vmul.f32 1.0, %v765
    %v768 = vrot.slane %v667, 6
    %v770 = vmul.f32 %v759, %v768
    %v771 = vmul.f32 %v759, %v760
    %773 = vrot.lane.b32.xlu0 %v771, 64
    %v774 = vpop.permute.xlu0 %773
    %v776 = vadd.f32 %v770, %v774
    %v777 = vtanh.pop %v776
    %v778 = vmul.f32 %v766, %v777
    %780 = vrot.lane.b32.xlu0 %v778, 64
    %v781 = vpop.permute.xlu0 %780
    %783 = vst.msk [vmem:[#allocation2 + $0x8] sm:$0x3] %vm332, %v781
    %v784 = vsel %vm229, %v781, 0
    %786 = vmatprep.subr.mxu0 %v214
    %787 = vmatpush1.msra.mxu0 %v213
    %788 = vmatprep.subr.mxu0 %v216
    %789 = vmatpush1.msra.mxu0 %v215
    %790 = vmatprep.subr.mxu0 %v218
    %791 = vmatpush1.msra.mxu0 %v217
    %792 = vmatprep.subr.mxu0 %v220
    %793 = vmatpush1.msra.mxu0 %v219
    %794 = vmatprep.subr.mxu0 %v222
    %795 = vmatpush1.msra.mxu0 %v221
    %796 = vmatprep.subr.mxu0 %v224
    %797 = vmatpush1.msra.mxu0 %v223
    %798 = vmatprep.subr.mxu0 %v226
    %799 = vmatpush1.msra.mxu0 %v225
    %800 = vmatprep.subr.mxu0 %v228
    %801 = vmatpush1.msra.mxu0 %v227
    %802 = vmatprep.subr.mxu0 0.0
    %803 = vmatpush1.msra.mxu0 0.0
    %804 = vmatprep.subr.mxu0 0.0
    %805 = vmatpush1.msra.mxu0 0.0
    %806 = vmatprep.subr.mxu0 0.0
    %807 = vmatpush1.msra.mxu0 0.0
    %808 = vmatprep.subr.mxu0 0.0
    %809 = vmatpush1.msra.mxu0 0.0
    %810 = vmatprep.subr.mxu0 0.0
    %811 = vmatpush1.msra.mxu0 0.0
    %812 = vmatprep.subr.mxu0 0.0
    %813 = vmatpush1.msra.mxu0 0.0
    %814 = vmatprep.subr.mxu0 0.0
    %815 = vmatpush1.msra.mxu0 0.0
    %816 = vmatprep.subr.mxu0 0.0
    %817 = vmatpush1.msra.mxu0 0.0
    %818 = vmatprep.subr.mxu0 0.0
    %819 = vmatpush1.msra.mxu0 0.0
    %820 = vmatprep.subr.mxu0 0.0
    %821 = vmatpush1.msra.mxu0 0.0
    %822 = vmatprep.subr.mxu0 0.0
    %823 = vmatpush1.msra.mxu0 0.0
    %824 = vmatprep.subr.mxu0 0.0
    %825 = vmatpush1.msra.mxu0 0.0
    %826 = vmatprep.subr.mxu0 0.0
    %827 = vmatpush1.msra.mxu0 0.0
    %828 = vmatprep.subr.mxu0 0.0
    %829 = vmatpush1.msra.mxu0 0.0
    %830 = vmatprep.subr.mxu0 0.0
    %831 = vmatpush1.msra.mxu0 0.0
    %832 = vmatprep.subr.mxu0 0.0
    %833 = vmatpush1.msra.mxu0 0.0
    %834 = vmatprep.subr.mxu0 0.0
    %835 = vmatpush1.msra.mxu0 0.0
    %836 = vmatprep.subr.mxu0 0.0
    %837 = vmatpush1.msra.mxu0 0.0
    %838 = vmatprep.subr.mxu0 0.0
    %839 = vmatpush1.msra.mxu0 0.0
    %840 = vmatprep.subr.mxu0 0.0
    %841 = vmatpush1.msra.mxu0 0.0
    %842 = vmatprep.subr.mxu0 0.0
    %843 = vmatpush1.msra.mxu0 0.0
    %844 = vmatprep.subr.mxu0 0.0
    %845 = vmatpush1.msra.mxu0 0.0
    %846 = vmatprep.subr.mxu0 0.0
    %847 = vmatpush1.msra.mxu0 0.0
    %848 = vmatprep.subr.mxu0 0.0
    %849 = vmatpush1.msra.mxu0 0.0
    %850 = vmatprep.mubr.f32.mxu0 0.0
    %851 = vmatmul.mubr.f32.gmra.mrb[0].mxu0 %v784
    %v852 = vpop.f32.mrb[0].mxu0
    %v853 = vadd.f32 0.0, %v852
    %v854 = vpop.f32.mrb[0].mxu0
    %v855 = vadd.f32 0.0, %v854
    %856 = vdwg.mxu0
    %v859 = vrot.slane %v853, 6
    %v860 = vrot.slane %v855, 6
    %v863 = vadd.f32 %v209, %v859
    %v864 = vadd.f32 %v211, %v860
    %v865 = vxor.u32 %v863, 2147483648
    %v866 = vmul.f32 %v865, 1.442695
    %v867 = vpow.pop %v866
    %v868 = vadd.f32 %v867, 1.0
    %v869 = vrcp.pop %v868
    %v870 = vmul.f32 1.0, %v869
    %v871 = vtanh.pop %v864
    %v872 = vxor.u32 %v864, 2147483648
    %v873 = vmul.f32 %v872, 1.442695
    %v874 = vpow.pop %v873
    %v875 = vadd.f32 %v874, 1.0
    %v876 = vrcp.pop %v875
    %v877 = vmul.f32 1.0, %v876
    %v879 = vrot.slane %v776, 6
    %v881 = vmul.f32 %v870, %v879
    %v882 = vmul.f32 %v870, %v871
    %884 = vrot.lane.b32.xlu0 %v882, 64
    %v885 = vpop.permute.xlu0 %884
    %v887 = vadd.f32 %v881, %v885
    %v888 = vtanh.pop %v887
    %v889 = vmul.f32 %v877, %v888
    %891 = vrot.lane.b32.xlu0 %v889, 64
    %v892 = vpop.permute.xlu0 %891
    %894 = vst.msk [vmem:[#allocation2 + $0x8] sm:$0xc] %vm444, %v892
    %v895 = vrot.slane %v889, 2
    %896 = vrot.lane.b32.xlu0 %v895, 64
    %v897 = vpop.permute.xlu0 %896
    %v898 = vsel %vm229, %v897, 0
    %900 = vmatprep.subr.mxu0 %v214
    %901 = vmatpush1.msra.mxu0 %v213
    %902 = vmatprep.subr.mxu0 %v216
    %903 = vmatpush1.msra.mxu0 %v215
    %904 = vmatprep.subr.mxu0 %v218
    %905 = vmatpush1.msra.mxu0 %v217
    %906 = vmatprep.subr.mxu0 %v220
    %907 = vmatpush1.msra.mxu0 %v219
    %908 = vmatprep.subr.mxu0 %v222
    %909 = vmatpush1.msra.mxu0 %v221
    %910 = vmatprep.subr.mxu0 %v224
    %911 = vmatpush1.msra.mxu0 %v223
    %912 = vmatprep.subr.mxu0 %v226
    %913 = vmatpush1.msra.mxu0 %v225
    %914 = vmatprep.subr.mxu0 %v228
    %915 = vmatpush1.msra.mxu0 %v227
    %916 = vmatprep.subr.mxu0 0.0
    %917 = vmatpush1.msra.mxu0 0.0
    %918 = vmatprep.subr.mxu0 0.0
    %919 = vmatpush1.msra.mxu0 0.0
    %920 = vmatprep.subr.mxu0 0.0
    %921 = vmatpush1.msra.mxu0 0.0
    %922 = vmatprep.subr.mxu0 0.0
    %923 = vmatpush1.msra.mxu0 0.0
    %924 = vmatprep.subr.mxu0 0.0
    %925 = vmatpush1.msra.mxu0 0.0
    %926 = vmatprep.subr.mxu0 0.0
    %927 = vmatpush1.msra.mxu0 0.0
    %928 = vmatprep.subr.mxu0 0.0
    %929 = vmatpush1.msra.mxu0 0.0
    %930 = vmatprep.subr.mxu0 0.0
    %931 = vmatpush1.msra.mxu0 0.0
    %932 = vmatprep.subr.mxu0 0.0
    %933 = vmatpush1.msra.mxu0 0.0
    %934 = vmatprep.subr.mxu0 0.0
    %935 = vmatpush1.msra.mxu0 0.0
    %936 = vmatprep.subr.mxu0 0.0
    %937 = vmatpush1.msra.mxu0 0.0
    %938 = vmatprep.subr.mxu0 0.0
    %939 = vmatpush1.msra.mxu0 0.0
    %940 = vmatprep.subr.mxu0 0.0
    %941 = vmatpush1.msra.mxu0 0.0
    %942 = vmatprep.subr.mxu0 0.0
    %943 = vmatpush1.msra.mxu0 0.0
    %944 = vmatprep.subr.mxu0 0.0
    %945 = vmatpush1.msra.mxu0 0.0
    %946 = vmatprep.subr.mxu0 0.0
    %947 = vmatpush1.msra.mxu0 0.0
    %948 = vmatprep.subr.mxu0 0.0
    %949 = vmatpush1.msra.mxu0 0.0
    %950 = vmatprep.subr.mxu0 0.0
    %951 = vmatpush1.msra.mxu0 0.0
    %952 = vmatprep.subr.mxu0 0.0
    %953 = vmatpush1.msra.mxu0 0.0
    %954 = vmatprep.subr.mxu0 0.0
    %955 = vmatpush1.msra.mxu0 0.0
    %956 = vmatprep.subr.mxu0 0.0
    %957 = vmatpush1.msra.mxu0 0.0
    %958 = vmatprep.subr.mxu0 0.0
    %959 = vmatpush1.msra.mxu0 0.0
    %960 = vmatprep.subr.mxu0 0.0
    %961 = vmatpush1.msra.mxu0 0.0
    %962 = vmatprep.subr.mxu0 0.0
    %963 = vmatpush1.msra.mxu0 0.0
    %964 = vmatprep.mubr.f32.mxu0 0.0
    %965 = vmatmul.mubr.f32.gmra.mrb[0].mxu0 %v898
    %v966 = vpop.f32.mrb[0].mxu0
    %v967 = vadd.f32 0.0, %v966
    %v968 = vpop.f32.mrb[0].mxu0
    %v969 = vadd.f32 0.0, %v968
    %970 = vdwg.mxu0
    %v973 = vrot.slane %v967, 4
    %v974 = vrot.slane %v969, 4
    %v977 = vadd.f32 %v209, %v973
    %v978 = vadd.f32 %v211, %v974
    %v979 = vxor.u32 %v977, 2147483648
    %v980 = vmul.f32 %v979, 1.442695
    %v981 = vpow.pop %v980
    %v982 = vadd.f32 %v981, 1.0
    %v983 = vrcp.pop %v982
    %v984 = vmul.f32 1.0, %v983
    %v985 = vtanh.pop %v978
    %v986 = vxor.u32 %v978, 2147483648
    %v987 = vmul.f32 %v986, 1.442695
    %v988 = vpow.pop %v987
    %v989 = vadd.f32 %v988, 1.0
    %v990 = vrcp.pop %v989
    %v991 = vmul.f32 1.0, %v990
    %v993 = vrot.slane %v887, 6
    %v995 = vmul.f32 %v984, %v993
    %v996 = vmul.f32 %v984, %v985
    %998 = vrot.lane.b32.xlu0 %v996, 64
    %v999 = vpop.permute.xlu0 %998
    %v1001 = vadd.f32 %v995, %v999
    %v1002 = vtanh.pop %v1001
    %v1003 = vmul.f32 %v991, %v1002
    %1005 = vrot.lane.b32.xlu0 %v1003, 64
    %v1006 = vpop.permute.xlu0 %1005
    %1008 = vst.msk [vmem:[#allocation2 + $0x8] sm:$0x30] %vm559, %v1006
    %v1009 = vrot.slane %v1003, 4
    %1010 = vrot.lane.b32.xlu0 %v1009, 64
    %v1011 = vpop.permute.xlu0 %1010
    %v1012 = vsel %vm229, %v1011, 0
    %1014 = vmatprep.subr.mxu0 %v214
    %1015 = vmatpush1.msra.mxu0 %v213
    %1016 = vmatprep.subr.mxu0 %v216
    %1017 = vmatpush1.msra.mxu0 %v215
    %1018 = vmatprep.subr.mxu0 %v218
    %1019 = vmatpush1.msra.mxu0 %v217
    %1020 = vmatprep.subr.mxu0 %v220
    %1021 = vmatpush1.msra.mxu0 %v219
    %1022 = vmatprep.subr.mxu0 %v222
    %1023 = vmatpush1.msra.mxu0 %v221
    %1024 = vmatprep.subr.mxu0 %v224
    %1025 = vmatpush1.msra.mxu0 %v223
    %1026 = vmatprep.subr.mxu0 %v226
    %1027 = vmatpush1.msra.mxu0 %v225
    %1028 = vmatprep.subr.mxu0 %v228
    %1029 = vmatpush1.msra.mxu0 %v227
    %1030 = vmatprep.subr.mxu0 0.0
    %1031 = vmatpush1.msra.mxu0 0.0
    %1032 = vmatprep.subr.mxu0 0.0
    %1033 = vmatpush1.msra.mxu0 0.0
    %1034 = vmatprep.subr.mxu0 0.0
    %1035 = vmatpush1.msra.mxu0 0.0
    %1036 = vmatprep.subr.mxu0 0.0
    %1037 = vmatpush1.msra.mxu0 0.0
    %1038 = vmatprep.subr.mxu0 0.0
    %1039 = vmatpush1.msra.mxu0 0.0
    %1040 = vmatprep.subr.mxu0 0.0
    %1041 = vmatpush1.msra.mxu0 0.0
    %1042 = vmatprep.subr.mxu0 0.0
    %1043 = vmatpush1.msra.mxu0 0.0
    %1044 = vmatprep.subr.mxu0 0.0
    %1045 = vmatpush1.msra.mxu0 0.0
    %1046 = vmatprep.subr.mxu0 0.0
    %1047 = vmatpush1.msra.mxu0 0.0
    %1048 = vmatprep.subr.mxu0 0.0
    %1049 = vmatpush1.msra.mxu0 0.0
    %1050 = vmatprep.subr.mxu0 0.0
    %1051 = vmatpush1.msra.mxu0 0.0
    %1052 = vmatprep.subr.mxu0 0.0
    %1053 = vmatpush1.msra.mxu0 0.0
    %1054 = vmatprep.subr.mxu0 0.0
    %1055 = vmatpush1.msra.mxu0 0.0
    %1056 = vmatprep.subr.mxu0 0.0
    %1057 = vmatpush1.msra.mxu0 0.0
    %1058 = vmatprep.subr.mxu0 0.0
    %1059 = vmatpush1.msra.mxu0 0.0
    %1060 = vmatprep.subr.mxu0 0.0
    %1061 = vmatpush1.msra.mxu0 0.0
    %1062 = vmatprep.subr.mxu0 0.0
    %1063 = vmatpush1.msra.mxu0 0.0
    %1064 = vmatprep.subr.mxu0 0.0
    %1065 = vmatpush1.msra.mxu0 0.0
    %1066 = vmatprep.subr.mxu0 0.0
    %1067 = vmatpush1.msra.mxu0 0.0
    %1068 = vmatprep.subr.mxu0 0.0
    %1069 = vmatpush1.msra.mxu0 0.0
    %1070 = vmatprep.subr.mxu0 0.0
    %1071 = vmatpush1.msra.mxu0 0.0
    %1072 = vmatprep.subr.mxu0 0.0
    %1073 = vmatpush1.msra.mxu0 0.0
    %1074 = vmatprep.subr.mxu0 0.0
    %1075 = vmatpush1.msra.mxu0 0.0
    %1076 = vmatprep.subr.mxu0 0.0
    %1077 = vmatpush1.msra.mxu0 0.0
    %1078 = vmatprep.mubr.f32.mxu0 0.0
    %1079 = vmatmul.mubr.f32.gmra.mrb[0].mxu0 %v1012
    %v1080 = vpop.f32.mrb[0].mxu0
    %v1081 = vadd.f32 0.0, %v1080
    %v1082 = vpop.f32.mrb[0].mxu0
    %v1083 = vadd.f32 0.0, %v1082
    %1084 = vdwg.mxu0
    %v1087 = vrot.slane %v1081, 2
    %v1088 = vrot.slane %v1083, 2
    %v1091 = vadd.f32 %v209, %v1087
    %v1092 = vadd.f32 %v211, %v1088
    %v1093 = vxor.u32 %v1091, 2147483648
    %v1094 = vmul.f32 %v1093, 1.442695
    %v1095 = vpow.pop %v1094
    %v1096 = vadd.f32 %v1095, 1.0
    %v1097 = vrcp.pop %v1096
    %v1098 = vmul.f32 1.0, %v1097
    %v1099 = vtanh.pop %v1092
    %v1100 = vxor.u32 %v1092, 2147483648
    %v1101 = vmul.f32 %v1100, 1.442695
    %v1102 = vpow.pop %v1101
    %v1103 = vadd.f32 %v1102, 1.0
    %v1104 = vrcp.pop %v1103
    %v1105 = vmul.f32 1.0, %v1104
    %v1107 = vrot.slane %v1001, 6
    %v1109 = vmul.f32 %v1098, %v1107
    %v1110 = vmul.f32 %v1098, %v1099
    %1112 = vrot.lane.b32.xlu0 %v1110, 64
    %v1113 = vpop.permute.xlu0 %1112
    %v1115 = vadd.f32 %v1109, %v1113
    %v1116 = vtanh.pop %v1115
    %v1117 = vmul.f32 %v1105, %v1116
    %1119 = vrot.lane.b32.xlu0 %v1117, 64
    %v1120 = vpop.permute.xlu0 %1119
    %1122 = vst.msk [vmem:[#allocation2 + $0x8] sm:$0xc0] %vm674, %v1120
    %v1123 = vld [vmem:[#allocation2] sm:$0xff]
    %v1124 = vld [vmem:[#allocation2 + $0x8] sm:$0xff]
    %v1125 = vld [vmem:[#allocation4] sm:$0xff]
    %v1126 = vld [vmem:[#allocation4 + $0x8] sm:$0xff]
    %v1127 = vld [vmem:[#allocation4 + $0x10] sm:$0xff]
    %v1128 = vld [vmem:[#allocation4 + $0x18] sm:$0xff]
    %v1129 = vld [vmem:[#allocation4 + $0x20] sm:$0xff]
    %v1130 = vld [vmem:[#allocation4 + $0x28] sm:$0xff]
    %v1131 = vld [vmem:[#allocation4 + $0x30] sm:$0xff]
    %v1132 = vld [vmem:[#allocation4 + $0x38] sm:$0xff]
    %v1133 = vld [vmem:[#allocation4 + $0x40] sm:$0xff]
    %v1134 = vld [vmem:[#allocation4 + $0x48] sm:$0xff]
    %v1135 = vld [vmem:[#allocation4 + $0x50] sm:$0xff]
    %v1136 = vld [vmem:[#allocation4 + $0x58] sm:$0xff]
    %v1137 = vld [vmem:[#allocation4 + $0x60] sm:$0xff]
    %v1138 = vld [vmem:[#allocation4 + $0x68] sm:$0xff]
    %v1139 = vld [vmem:[#allocation4 + $0x70] sm:$0xff]
    %v1140 = vld [vmem:[#allocation4 + $0x78] sm:$0xff]
    %v1141 = vld [vmem:[%s6] sm:$0x3]
    %v1143 = vlaneseq
    %v1144 = vshrl.u32 %v1143, 7
    %v1145 = vsub.s32 0, %v1144
    %v1146 = vrot.slane %v1141, %v1145
    %v1147 = vlaneseq
    %v1148 = vshrl.u32 %v1147, 7
    %v1149 = vsub.s32 1, %v1148
    %v1150 = vrot.slane %v1141, %v1149
    %v1154 = vsel %vm229, %v1123, 0
    %v1157 = vsel %vm229, %v1124, 0
    %1159 = vmatprep.subr.mxu0 %v1126
    %1160 = vmatpush1.msra.mxu0 %v1125
    %1161 = vmatprep.subr.mxu0 %v1128
    %1162 = vmatpush1.msra.mxu0 %v1127
    %1163 = vmatprep.subr.mxu0 %v1130
    %1164 = vmatpush1.msra.mxu0 %v1129
    %1165 = vmatprep.subr.mxu0 %v1132
    %1166 = vmatpush1.msra.mxu0 %v1131
    %1167 = vmatprep.subr.mxu0 %v1134
    %1168 = vmatpush1.msra.mxu0 %v1133
    %1169 = vmatprep.subr.mxu0 %v1136
    %1170 = vmatpush1.msra.mxu0 %v1135
    %1171 = vmatprep.subr.mxu0 %v1138
    %1172 = vmatpush1.msra.mxu0 %v1137
    %1173 = vmatprep.subr.mxu0 %v1140
    %1174 = vmatpush1.msra.mxu0 %v1139
    %1175 = vmatprep.subr.mxu0 0.0
    %1176 = vmatpush1.msra.mxu0 0.0
    %1177 = vmatprep.subr.mxu0 0.0
    %1178 = vmatpush1.msra.mxu0 0.0
    %1179 = vmatprep.subr.mxu0 0.0
    %1180 = vmatpush1.msra.mxu0 0.0
    %1181 = vmatprep.subr.mxu0 0.0
    %1182 = vmatpush1.msra.mxu0 0.0
    %1183 = vmatprep.subr.mxu0 0.0
    %1184 = vmatpush1.msra.mxu0 0.0
    %1185 = vmatprep.subr.mxu0 0.0
    %1186 = vmatpush1.msra.mxu0 0.0
    %1187 = vmatprep.subr.mxu0 0.0
    %1188 = vmatpush1.msra.mxu0 0.0
    %1189 = vmatprep.subr.mxu0 0.0
    %1190 = vmatpush1.msra.mxu0 0.0
    %1191 = vmatprep.subr.mxu0 0.0
    %1192 = vmatpush1.msra.mxu0 0.0
    %1193 = vmatprep.subr.mxu0 0.0
    %1194 = vmatpush1.msra.mxu0 0.0
    %1195 = vmatprep.subr.mxu0 0.0
    %1196 = vmatpush1.msra.mxu0 0.0
    %1197 = vmatprep.subr.mxu0 0.0
    %1198 = vmatpush1.msra.mxu0 0.0
    %1199 = vmatprep.subr.mxu0 0.0
    %1200 = vmatpush1.msra.mxu0 0.0
    %1201 = vmatprep.subr.mxu0 0.0
    %1202 = vmatpush1.msra.mxu0 0.0
    %1203 = vmatprep.subr.mxu0 0.0
    %1204 = vmatpush1.msra.mxu0 0.0
    %1205 = vmatprep.subr.mxu0 0.0
    %1206 = vmatpush1.msra.mxu0 0.0
    %1207 = vmatprep.subr.mxu0 0.0
    %1208 = vmatpush1.msra.mxu0 0.0
    %1209 = vmatprep.subr.mxu0 0.0
    %1210 = vmatpush1.msra.mxu0 0.0
    %1211 = vmatprep.subr.mxu0 0.0
    %1212 = vmatpush1.msra.mxu0 0.0
    %1213 = vmatprep.subr.mxu0 0.0
    %1214 = vmatpush1.msra.mxu0 0.0
    %1215 = vmatprep.subr.mxu0 0.0
    %1216 = vmatpush1.msra.mxu0 0.0
    %1217 = vmatprep.subr.mxu0 0.0
    %1218 = vmatpush1.msra.mxu0 0.0
    %1219 = vmatprep.subr.mxu0 0.0
    %1220 = vmatpush1.msra.mxu0 0.0
    %1221 = vmatprep.subr.mxu0 0.0
    %1222 = vmatpush1.msra.mxu0 0.0
    %1223 = vmatprep.mubr.f32.mxu0 0.0
    %1224 = vmatmul.mubr.f32.gmra.mrb[0].mxu0 %v1154
    %v1225 = vpop.f32.mrb[0].mxu0
    %v1226 = vadd.f32 %v1146, %v1225
    %v1227 = vpop.f32.mrb[0].mxu0
    %v1228 = vadd.f32 %v1150, %v1227
    %1229 = vmatprep.mubr.f32.mxu0 0.0
    %1230 = vmatmul.mubr.f32.gmra.mrb[0].mxu0 %v1157
    %v1231 = vpop.f32.mrb[0].mxu0
    %v1232 = vadd.f32 %v1146, %v1231
    %v1233 = vpop.f32.mrb[0].mxu0
    %v1234 = vadd.f32 %v1150, %v1233
    %1235 = vdwg.mxu0
    %v1236 = vld [vmem:[#allocation6] sm:$0xff]
    %v1237 = vld [vmem:[#allocation6 + $0x8] sm:$0xff]
    %v1238 = vld [vmem:[#allocation6 + $0x10] sm:$0xff]
    %v1239 = vld [vmem:[#allocation6 + $0x18] sm:$0xff]
    %v1240 = vld [vmem:[#allocation6 + $0x20] sm:$0xff]
    %v1241 = vld [vmem:[#allocation6 + $0x28] sm:$0xff]
    %v1242 = vld [vmem:[#allocation6 + $0x30] sm:$0xff]
    %v1243 = vld [vmem:[#allocation6 + $0x38] sm:$0xff]
    %v1244 = vld [vmem:[#allocation6 + $0x40] sm:$0xff]
    %v1245 = vld [vmem:[#allocation6 + $0x48] sm:$0xff]
    %v1246 = vld [vmem:[#allocation6 + $0x50] sm:$0xff]
    %v1247 = vld [vmem:[#allocation6 + $0x58] sm:$0xff]
    %v1248 = vld [vmem:[#allocation6 + $0x60] sm:$0xff]
    %v1249 = vld [vmem:[#allocation6 + $0x68] sm:$0xff]
    %v1250 = vld [vmem:[#allocation6 + $0x70] sm:$0xff]
    %v1251 = vld [vmem:[#allocation6 + $0x78] sm:$0xff]
    %1252 = vmatprep.subr.mxu0 %v1237
    %1253 = vmatpush1.msra.mxu0 %v1236
    %1254 = vmatprep.subr.mxu0 %v1239
    %1255 = vmatpush1.msra.mxu0 %v1238
    %1256 = vmatprep.subr.mxu0 %v1241
    %1257 = vmatpush1.msra.mxu0 %v1240
    %1258 = vmatprep.subr.mxu0 %v1243
    %1259 = vmatpush1.msra.mxu0 %v1242
    %1260 = vmatprep.subr.mxu0 %v1245
    %1261 = vmatpush1.msra.mxu0 %v1244
    %1262 = vmatprep.subr.mxu0 %v1247
    %1263 = vmatpush1.msra.mxu0 %v1246
    %1264 = vmatprep.subr.mxu0 %v1249
    %1265 = vmatpush1.msra.mxu0 %v1248
    %1266 = vmatprep.subr.mxu0 %v1251
    %1267 = vmatpush1.msra.mxu0 %v1250
    %1268 = vmatprep.subr.mxu0 0.0
    %1269 = vmatpush1.msra.mxu0 0.0
    %1270 = vmatprep.subr.mxu0 0.0
    %1271 = vmatpush1.msra.mxu0 0.0
    %1272 = vmatprep.subr.mxu0 0.0
    %1273 = vmatpush1.msra.mxu0 0.0
    %1274 = vmatprep.subr.mxu0 0.0
    %1275 = vmatpush1.msra.mxu0 0.0
    %1276 = vmatprep.subr.mxu0 0.0
    %1277 = vmatpush1.msra.mxu0 0.0
    %1278 = vmatprep.subr.mxu0 0.0
    %1279 = vmatpush1.msra.mxu0 0.0
    %1280 = vmatprep.subr.mxu0 0.0
    %1281 = vmatpush1.msra.mxu0 0.0
    %1282 = vmatprep.subr.mxu0 0.0
    %1283 = vmatpush1.msra.mxu0 0.0
    %1284 = vmatprep.subr.mxu0 0.0
    %1285 = vmatpush1.msra.mxu0 0.0
    %1286 = vmatprep.subr.mxu0 0.0
    %1287 = vmatpush1.msra.mxu0 0.0
    %1288 = vmatprep.subr.mxu0 0.0
    %1289 = vmatpush1.msra.mxu0 0.0
    %1290 = vmatprep.subr.mxu0 0.0
    %1291 = vmatpush1.msra.mxu0 0.0
    %1292 = vmatprep.subr.mxu0 0.0
    %1293 = vmatpush1.msra.mxu0 0.0
    %1294 = vmatprep.subr.mxu0 0.0
    %1295 = vmatpush1.msra.mxu0 0.0
    %1296 = vmatprep.subr.mxu0 0.0
    %1297 = vmatpush1.msra.mxu0 0.0
    %1298 = vmatprep.subr.mxu0 0.0
    %1299 = vmatpush1.msra.mxu0 0.0
    %1300 = vmatprep.subr.mxu0 0.0
    %1301 = vmatpush1.msra.mxu0 0.0
    %1302 = vmatprep.subr.mxu0 0.0
    %1303 = vmatpush1.msra.mxu0 0.0
    %1304 = vmatprep.subr.mxu0 0.0
    %1305 = vmatpush1.msra.mxu0 0.0
    %1306 = vmatprep.subr.mxu0 0.0
    %1307 = vmatpush1.msra.mxu0 0.0
    %1308 = vmatprep.subr.mxu0 0.0
    %1309 = vmatpush1.msra.mxu0 0.0
    %1310 = vmatprep.subr.mxu0 0.0
    %1311 = vmatpush1.msra.mxu0 0.0
    %1312 = vmatprep.subr.mxu0 0.0
    %1313 = vmatpush1.msra.mxu0 0.0
    %1314 = vmatprep.subr.mxu0 0.0
    %1315 = vmatpush1.msra.mxu0 0.0
    %1316 = vmatprep.mubr.f32.mxu0 0.0
    %1317 = vmatmul.mubr.f32.gmra.mrb[0].mxu0 %v231
    %v1318 = vpop.f32.mrb[0].mxu0
    %v1319 = vadd.f32 0.0, %v1318
    %v1320 = vpop.f32.mrb[0].mxu0
    %v1321 = vadd.f32 0.0, %v1320
    %1322 = vdwg.mxu0
    %v1323 = vadd.f32 %v1226, %v1319
    %v1324 = vadd.f32 %v1228, %v1321
    %v1325 = vxor.u32 %v1323, 2147483648
    %v1326 = vmul.f32 %v1325, 1.442695
    %v1327 = vpow.pop %v1326
    %v1328 = vadd.f32 %v1327, 1.0
    %v1329 = vrcp.pop %v1328
    %v1330 = vmul.f32 1.0, %v1329
    %v1331 = vtanh.pop %v1324
    %v1332 = vxor.u32 %v1324, 2147483648
    %v1333 = vmul.f32 %v1332, 1.442695
    %v1334 = vpow.pop %v1333
    %v1335 = vadd.f32 %v1334, 1.0
    %v1336 = vrcp.pop %v1335
    %v1337 = vmul.f32 1.0, %v1336
    %v1338 = vmul.f32 %v1330, 0.0
    %v1339 = vmul.f32 %v1330, %v1331
    %1341 = vrot.lane.b32.xlu0 %v1339, 64
    %v1342 = vpop.permute.xlu0 %1341
    %v1344 = vadd.f32 %v1338, %v1342
    %v1345 = vtanh.pop %v1344
    %v1346 = vmul.f32 %v1337, %v1345
    %1348 = vrot.lane.b32.xlu0 %v1346, 64
    %v1349 = vpop.permute.xlu0 %1348
    %1351 = vst.msk [vmem:[#allocation2] sm:$0x3] %vm332, %v1349
    %v1352 = vsel %vm229, %v1349, 0
    %1354 = vmatprep.subr.mxu0 %v1237
    %1355 = vmatpush1.msra.mxu0 %v1236
    %1356 = vmatprep.subr.mxu0 %v1239
    %1357 = vmatpush1.msra.mxu0 %v1238
    %1358 = vmatprep.subr.mxu0 %v1241
    %1359 = vmatpush1.msra.mxu0 %v1240
    %1360 = vmatprep.subr.mxu0 %v1243
    %1361 = vmatpush1.msra.mxu0 %v1242
    %1362 = vmatprep.subr.mxu0 %v1245
    %1363 = vmatpush1.msra.mxu0 %v1244
    %1364 = vmatprep.subr.mxu0 %v1247
    %1365 = vmatpush1.msra.mxu0 %v1246
    %1366 = vmatprep.subr.mxu0 %v1249
    %1367 = vmatpush1.msra.mxu0 %v1248
    %1368 = vmatprep.subr.mxu0 %v1251
    %1369 = vmatpush1.msra.mxu0 %v1250
    %1370 = vmatprep.subr.mxu0 0.0
    %1371 = vmatpush1.msra.mxu0 0.0
    %1372 = vmatprep.subr.mxu0 0.0
    %1373 = vmatpush1.msra.mxu0 0.0
    %1374 = vmatprep.subr.mxu0 0.0
    %1375 = vmatpush1.msra.mxu0 0.0
    %1376 = vmatprep.subr.mxu0 0.0
    %1377 = vmatpush1.msra.mxu0 0.0
    %1378 = vmatprep.subr.mxu0 0.0
    %1379 = vmatpush1.msra.mxu0 0.0
    %1380 = vmatprep.subr.mxu0 0.0
    %1381 = vmatpush1.msra.mxu0 0.0
    %1382 = vmatprep.subr.mxu0 0.0
    %1383 = vmatpush1.msra.mxu0 0.0
    %1384 = vmatprep.subr.mxu0 0.0
    %1385 = vmatpush1.msra.mxu0 0.0
    %1386 = vmatprep.subr.mxu0 0.0
    %1387 = vmatpush1.msra.mxu0 0.0
    %1388 = vmatprep.subr.mxu0 0.0
    %1389 = vmatpush1.msra.mxu0 0.0
    %1390 = vmatprep.subr.mxu0 0.0
    %1391 = vmatpush1.msra.mxu0 0.0
    %1392 = vmatprep.subr.mxu0 0.0
    %1393 = vmatpush1.msra.mxu0 0.0
    %1394 = vmatprep.subr.mxu0 0.0
    %1395 = vmatpush1.msra.mxu0 0.0
    %1396 = vmatprep.subr.mxu0 0.0
    %1397 = vmatpush1.msra.mxu0 0.0
    %1398 = vmatprep.subr.mxu0 0.0
    %1399 = vmatpush1.msra.mxu0 0.0
    %1400 = vmatprep.subr.mxu0 0.0
    %1401 = vmatpush1.msra.mxu0 0.0
    %1402 = vmatprep.subr.mxu0 0.0
    %1403 = vmatpush1.msra.mxu0 0.0
    %1404 = vmatprep.subr.mxu0 0.0
    %1405 = vmatpush1.msra.mxu0 0.0
    %1406 = vmatprep.subr.mxu0 0.0
    %1407 = vmatpush1.msra.mxu0 0.0
    %1408 = vmatprep.subr.mxu0 0.0
    %1409 = vmatpush1.msra.mxu0 0.0
    %1410 = vmatprep.subr.mxu0 0.0
    %1411 = vmatpush1.msra.mxu0 0.0
    %1412 = vmatprep.subr.mxu0 0.0
    %1413 = vmatpush1.msra.mxu0 0.0
    %1414 = vmatprep.subr.mxu0 0.0
    %1415 = vmatpush1.msra.mxu0 0.0
    %1416 = vmatprep.subr.mxu0 0.0
    %1417 = vmatpush1.msra.mxu0 0.0
    %1418 = vmatprep.mubr.f32.mxu0 0.0
    %1419 = vmatmul.mubr.f32.gmra.mrb[0].mxu0 %v1352
    %v1420 = vpop.f32.mrb[0].mxu0
    %v1421 = vadd.f32 0.0, %v1420
    %v1422 = vpop.f32.mrb[0].mxu0
    %v1423 = vadd.f32 0.0, %v1422
    %1424 = vdwg.mxu0
    %v1427 = vrot.slane %v1421, 6
    %v1428 = vrot.slane %v1423, 6
    %v1431 = vadd.f32 %v1226, %v1427
    %v1432 = vadd.f32 %v1228, %v1428
    %v1433 = vxor.u32 %v1431, 2147483648
    %v1434 = vmul.f32 %v1433, 1.442695
    %v1435 = vpow.pop %v1434
    %v1436 = vadd.f32 %v1435, 1.0
    %v1437 = vrcp.pop %v1436
    %v1438 = vmul.f32 1.0, %v1437
    %v1439 = vtanh.pop %v1432
    %v1440 = vxor.u32 %v1432, 2147483648
    %v1441 = vmul.f32 %v1440, 1.442695
    %v1442 = vpow.pop %v1441
    %v1443 = vadd.f32 %v1442, 1.0
    %v1444 = vrcp.pop %v1443
    %v1445 = vmul.f32 1.0, %v1444
    %v1447 = vrot.slane %v1344, 6
    %v1449 = vmul.f32 %v1438, %v1447
    %v1450 = vmul.f32 %v1438, %v1439
    %1452 = vrot.lane.b32.xlu0 %v1450, 64
    %v1453 = vpop.permute.xlu0 %1452
    %v1455 = vadd.f32 %v1449, %v1453
    %v1456 = vtanh.pop %v1455
    %v1457 = vmul.f32 %v1445, %v1456
    %1459 = vrot.lane.b32.xlu0 %v1457, 64
    %v1460 = vpop.permute.xlu0 %1459
    %1462 = vst.msk [vmem:[#allocation2] sm:$0xc] %vm444, %v1460
    %v1463 = vrot.slane %v1457, 2
    %1464 = vrot.lane.b32.xlu0 %v1463, 64
    %v1465 = vpop.permute.xlu0 %1464
    %v1466 = vsel %vm229, %v1465, 0
    %1468 = vmatprep.subr.mxu0 %v1237
    %1469 = vmatpush1.msra.mxu0 %v1236
    %1470 = vmatprep.subr.mxu0 %v1239
    %1471 = vmatpush1.msra.mxu0 %v1238
    %1472 = vmatprep.subr.mxu0 %v1241
    %1473 = vmatpush1.msra.mxu0 %v1240
    %1474 = vmatprep.subr.mxu0 %v1243
    %1475 = vmatpush1.msra.mxu0 %v1242
    %1476 = vmatprep.subr.mxu0 %v1245
    %1477 = vmatpush1.msra.mxu0 %v1244
    %1478 = vmatprep.subr.mxu0 %v1247
    %1479 = vmatpush1.msra.mxu0 %v1246
    %1480 = vmatprep.subr.mxu0 %v1249
    %1481 = vmatpush1.msra.mxu0 %v1248
    %1482 = vmatprep.subr.mxu0 %v1251
    %1483 = vmatpush1.msra.mxu0 %v1250
    %1484 = vmatprep.subr.mxu0 0.0
    %1485 = vmatpush1.msra.mxu0 0.0
    %1486 = vmatprep.subr.mxu0 0.0
    %1487 = vmatpush1.msra.mxu0 0.0
    %1488 = vmatprep.subr.mxu0 0.0
    %1489 = vmatpush1.msra.mxu0 0.0
    %1490 = vmatprep.subr.mxu0 0.0
    %1491 = vmatpush1.msra.mxu0 0.0
    %1492 = vmatprep.subr.mxu0 0.0
    %1493 = vmatpush1.msra.mxu0 0.0
    %1494 = vmatprep.subr.mxu0 0.0
    %1495 = vmatpush1.msra.mxu0 0.0
    %1496 = vmatprep.subr.mxu0 0.0
    %1497 = vmatpush1.msra.mxu0 0.0
    %1498 = vmatprep.subr.mxu0 0.0
    %1499 = vmatpush1.msra.mxu0 0.0
    %1500 = vmatprep.subr.mxu0 0.0
    %1501 = vmatpush1.msra.mxu0 0.0
    %1502 = vmatprep.subr.mxu0 0.0
    %1503 = vmatpush1.msra.mxu0 0.0
    %1504 = vmatprep.subr.mxu0 0.0
    %1505 = vmatpush1.msra.mxu0 0.0
    %1506 = vmatprep.subr.mxu0 0.0
    %1507 = vmatpush1.msra.mxu0 0.0
    %1508 = vmatprep.subr.mxu0 0.0
    %1509 = vmatpush1.msra.mxu0 0.0
    %1510 = vmatprep.subr.mxu0 0.0
    %1511 = vmatpush1.msra.mxu0 0.0
    %1512 = vmatprep.subr.mxu0 0.0
    %1513 = vmatpush1.msra.mxu0 0.0
    %1514 = vmatprep.subr.mxu0 0.0
    %1515 = vmatpush1.msra.mxu0 0.0
    %1516 = vmatprep.subr.mxu0 0.0
    %1517 = vmatpush1.msra.mxu0 0.0
    %1518 = vmatprep.subr.mxu0 0.0
    %1519 = vmatpush1.msra.mxu0 0.0
    %1520 = vmatprep.subr.mxu0 0.0
    %1521 = vmatpush1.msra.mxu0 0.0
    %1522 = vmatprep.subr.mxu0 0.0
    %1523 = vmatpush1.msra.mxu0 0.0
    %1524 = vmatprep.subr.mxu0 0.0
    %1525 = vmatpush1.msra.mxu0 0.0
    %1526 = vmatprep.subr.mxu0 0.0
    %1527 = vmatpush1.msra.mxu0 0.0
    %1528 = vmatprep.subr.mxu0 0.0
    %1529 = vmatpush1.msra.mxu0 0.0
    %1530 = vmatprep.subr.mxu0 0.0
    %1531 = vmatpush1.msra.mxu0 0.0
    %1532 = vmatprep.mubr.f32.mxu0 0.0
    %1533 = vmatmul.mubr.f32.gmra.mrb[0].mxu0 %v1466
    %v1534 = vpop.f32.mrb[0].mxu0
    %v1535 = vadd.f32 0.0, %v1534
    %v1536 = vpop.f32.mrb[0].mxu0
    %v1537 = vadd.f32 0.0, %v1536
    %1538 = vdwg.mxu0
    %v1541 = vrot.slane %v1535, 4
    %v1542 = vrot.slane %v1537, 4
    %v1545 = vadd.f32 %v1226, %v1541
    %v1546 = vadd.f32 %v1228, %v1542
    %v1547 = vxor.u32 %v1545, 2147483648
    %v1548 = vmul.f32 %v1547, 1.442695
    %v1549 = vpow.pop %v1548
    %v1550 = vadd.f32 %v1549, 1.0
    %v1551 = vrcp.pop %v1550
    %v1552 = vmul.f32 1.0, %v1551
    %v1553 = vtanh.pop %v1546
    %v1554 = vxor.u32 %v1546, 2147483648
    %v1555 = vmul.f32 %v1554, 1.442695
    %v1556 = vpow.pop %v1555
    %v1557 = vadd.f32 %v1556, 1.0
    %v1558 = vrcp.pop %v1557
    %v1559 = vmul.f32 1.0, %v1558
    %v1561 = vrot.slane %v1455, 6
    %v1563 = vmul.f32 %v1552, %v1561
    %v1564 = vmul.f32 %v1552, %v1553
    %1566 = vrot.lane.b32.xlu0 %v1564, 64
    %v1567 = vpop.permute.xlu0 %1566
    %v1569 = vadd.f32 %v1563, %v1567
    %v1570 = vtanh.pop %v1569
    %v1571 = vmul.f32 %v1559, %v1570
    %1573 = vrot.lane.b32.xlu0 %v1571, 64
    %v1574 = vpop.permute.xlu0 %1573
    %1576 = vst.msk [vmem:[#allocation2] sm:$0x30] %vm559, %v1574
    %v1577 = vrot.slane %v1571, 4
    %1578 = vrot.lane.b32.xlu0 %v1577, 64
    %v1579 = vpop.permute.xlu0 %1578
    %v1580 = vsel %vm229, %v1579, 0
    %1582 = vmatprep.subr.mxu0 %v1237
    %1583 = vmatpush1.msra.mxu0 %v1236
    %1584 = vmatprep.subr.mxu0 %v1239
    %1585 = vmatpush1.msra.mxu0 %v1238
    %1586 = vmatprep.subr.mxu0 %v1241
    %1587 = vmatpush1.msra.mxu0 %v1240
    %1588 = vmatprep.subr.mxu0 %v1243
    %1589 = vmatpush1.msra.mxu0 %v1242
    %1590 = vmatprep.subr.mxu0 %v1245
    %1591 = vmatpush1.msra.mxu0 %v1244
    %1592 = vmatprep.subr.mxu0 %v1247
    %1593 = vmatpush1.msra.mxu0 %v1246
    %1594 = vmatprep.subr.mxu0 %v1249
    %1595 = vmatpush1.msra.mxu0 %v1248
    %1596 = vmatprep.subr.mxu0 %v1251
    %1597 = vmatpush1.msra.mxu0 %v1250
    %1598 = vmatprep.subr.mxu0 0.0
    %1599 = vmatpush1.msra.mxu0 0.0
    %1600 = vmatprep.subr.mxu0 0.0
    %1601 = vmatpush1.msra.mxu0 0.0
    %1602 = vmatprep.subr.mxu0 0.0
    %1603 = vmatpush1.msra.mxu0 0.0
    %1604 = vmatprep.subr.mxu0 0.0
    %1605 = vmatpush1.msra.mxu0 0.0
    %1606 = vmatprep.subr.mxu0 0.0
    %1607 = vmatpush1.msra.mxu0 0.0
    %1608 = vmatprep.subr.mxu0 0.0
    %1609 = vmatpush1.msra.mxu0 0.0
    %1610 = vmatprep.subr.mxu0 0.0
    %1611 = vmatpush1.msra.mxu0 0.0
    %1612 = vmatprep.subr.mxu0 0.0
    %1613 = vmatpush1.msra.mxu0 0.0
    %1614 = vmatprep.subr.mxu0 0.0
    %1615 = vmatpush1.msra.mxu0 0.0
    %1616 = vmatprep.subr.mxu0 0.0
    %1617 = vmatpush1.msra.mxu0 0.0
    %1618 = vmatprep.subr.mxu0 0.0
    %1619 = vmatpush1.msra.mxu0 0.0
    %1620 = vmatprep.subr.mxu0 0.0
    %1621 = vmatpush1.msra.mxu0 0.0
    %1622 = vmatprep.subr.mxu0 0.0
    %1623 = vmatpush1.msra.mxu0 0.0
    %1624 = vmatprep.subr.mxu0 0.0
    %1625 = vmatpush1.msra.mxu0 0.0
    %1626 = vmatprep.subr.mxu0 0.0
    %1627 = vmatpush1.msra.mxu0 0.0
    %1628 = vmatprep.subr.mxu0 0.0
    %1629 = vmatpush1.msra.mxu0 0.0
    %1630 = vmatprep.subr.mxu0 0.0
    %1631 = vmatpush1.msra.mxu0 0.0
    %1632 = vmatprep.subr.mxu0 0.0
    %1633 = vmatpush1.msra.mxu0 0.0
    %1634 = vmatprep.subr.mxu0 0.0
    %1635 = vmatpush1.msra.mxu0 0.0
    %1636 = vmatprep.subr.mxu0 0.0
    %1637 = vmatpush1.msra.mxu0 0.0
    %1638 = vmatprep.subr.mxu0 0.0
    %1639 = vmatpush1.msra.mxu0 0.0
    %1640 = vmatprep.subr.mxu0 0.0
    %1641 = vmatpush1.msra.mxu0 0.0
    %1642 = vmatprep.subr.mxu0 0.0
    %1643 = vmatpush1.msra.mxu0 0.0
    %1644 = vmatprep.subr.mxu0 0.0
    %1645 = vmatpush1.msra.mxu0 0.0
    %1646 = vmatprep.mubr.f32.mxu0 0.0
    %1647 = vmatmul.mubr.f32.gmra.mrb[0].mxu0 %v1580
    %v1648 = vpop.f32.mrb[0].mxu0
    %v1649 = vadd.f32 0.0, %v1648
    %v1650 = vpop.f32.mrb[0].mxu0
    %v1651 = vadd.f32 0.0, %v1650
    %1652 = vdwg.mxu0
    %v1655 = vrot.slane %v1649, 2
    %v1656 = vrot.slane %v1651, 2
    %v1659 = vadd.f32 %v1226, %v1655
    %v1660 = vadd.f32 %v1228, %v1656
    %v1661 = vxor.u32 %v1659, 2147483648
    %v1662 = vmul.f32 %v1661, 1.442695
    %v1663 = vpow.pop %v1662
    %v1664 = vadd.f32 %v1663, 1.0
    %v1665 = vrcp.pop %v1664
    %v1666 = vmul.f32 1.0, %v1665
    %v1667 = vtanh.pop %v1660
    %v1668 = vxor.u32 %v1660, 2147483648
    %v1669 = vmul.f32 %v1668, 1.442695
    %v1670 = vpow.pop %v1669
    %v1671 = vadd.f32 %v1670, 1.0
    %v1672 = vrcp.pop %v1671
    %v1673 = vmul.f32 1.0, %v1672
    %v1675 = vrot.slane %v1569, 6
    %v1677 = vmul.f32 %v1666, %v1675
    %v1678 = vmul.f32 %v1666, %v1667
    %1680 = vrot.lane.b32.xlu0 %v1678, 64
    %v1681 = vpop.permute.xlu0 %1680
    %v1683 = vadd.f32 %v1677, %v1681
    %v1684 = vtanh.pop %v1683
    %v1685 = vmul.f32 %v1673, %v1684
    %1687 = vrot.lane.b32.xlu0 %v1685, 64
    %v1688 = vpop.permute.xlu0 %1687
    %1690 = vst.msk [vmem:[#allocation2] sm:$0xc0] %vm674, %v1688
    %v1691 = vrot.slane %v1685, 6
    %1692 = vrot.lane.b32.xlu0 %v1691, 64
    %v1693 = vpop.permute.xlu0 %1692
    %v1694 = vsel %vm229, %v1693, 0
    %1696 = vmatprep.subr.mxu0 %v1237
    %1697 = vmatpush1.msra.mxu0 %v1236
    %1698 = vmatprep.subr.mxu0 %v1239
    %1699 = vmatpush1.msra.mxu0 %v1238
    %1700 = vmatprep.subr.mxu0 %v1241
    %1701 = vmatpush1.msra.mxu0 %v1240
    %1702 = vmatprep.subr.mxu0 %v1243
    %1703 = vmatpush1.msra.mxu0 %v1242
    %1704 = vmatprep.subr.mxu0 %v1245
    %1705 = vmatpush1.msra.mxu0 %v1244
    %1706 = vmatprep.subr.mxu0 %v1247
    %1707 = vmatpush1.msra.mxu0 %v1246
    %1708 = vmatprep.subr.mxu0 %v1249
    %1709 = vmatpush1.msra.mxu0 %v1248
    %1710 = vmatprep.subr.mxu0 %v1251
    %1711 = vmatpush1.msra.mxu0 %v1250
    %1712 = vmatprep.subr.mxu0 0.0
    %1713 = vmatpush1.msra.mxu0 0.0
    %1714 = vmatprep.subr.mxu0 0.0
    %1715 = vmatpush1.msra.mxu0 0.0
    %1716 = vmatprep.subr.mxu0 0.0
    %1717 = vmatpush1.msra.mxu0 0.0
    %1718 = vmatprep.subr.mxu0 0.0
    %1719 = vmatpush1.msra.mxu0 0.0
    %1720 = vmatprep.subr.mxu0 0.0
    %1721 = vmatpush1.msra.mxu0 0.0
    %1722 = vmatprep.subr.mxu0 0.0
    %1723 = vmatpush1.msra.mxu0 0.0
    %1724 = vmatprep.subr.mxu0 0.0
    %1725 = vmatpush1.msra.mxu0 0.0
    %1726 = vmatprep.subr.mxu0 0.0
    %1727 = vmatpush1.msra.mxu0 0.0
    %1728 = vmatprep.subr.mxu0 0.0
    %1729 = vmatpush1.msra.mxu0 0.0
    %1730 = vmatprep.subr.mxu0 0.0
    %1731 = vmatpush1.msra.mxu0 0.0
    %1732 = vmatprep.subr.mxu0 0.0
    %1733 = vmatpush1.msra.mxu0 0.0
    %1734 = vmatprep.subr.mxu0 0.0
    %1735 = vmatpush1.msra.mxu0 0.0
    %1736 = vmatprep.subr.mxu0 0.0
    %1737 = vmatpush1.msra.mxu0 0.0
    %1738 = vmatprep.subr.mxu0 0.0
    %1739 = vmatpush1.msra.mxu0 0.0
    %1740 = vmatprep.subr.mxu0 0.0
    %1741 = vmatpush1.msra.mxu0 0.0
    %1742 = vmatprep.subr.mxu0 0.0
    %1743 = vmatpush1.msra.mxu0 0.0
    %1744 = vmatprep.subr.mxu0 0.0
    %1745 = vmatpush1.msra.mxu0 0.0
    %1746 = vmatprep.subr.mxu0 0.0
    %1747 = vmatpush1.msra.mxu0 0.0
    %1748 = vmatprep.subr.mxu0 0.0
    %1749 = vmatpush1.msra.mxu0 0.0
    %1750 = vmatprep.subr.mxu0 0.0
    %1751 = vmatpush1.msra.mxu0 0.0
    %1752 = vmatprep.subr.mxu0 0.0
    %1753 = vmatpush1.msra.mxu0 0.0
    %1754 = vmatprep.subr.mxu0 0.0
    %1755 = vmatpush1.msra.mxu0 0.0
    %1756 = vmatprep.subr.mxu0 0.0
    %1757 = vmatpush1.msra.mxu0 0.0
    %1758 = vmatprep.subr.mxu0 0.0
    %1759 = vmatpush1.msra.mxu0 0.0
    %1760 = vmatprep.mubr.f32.mxu0 0.0
    %1761 = vmatmul.mubr.f32.gmra.mrb[0].mxu0 %v1694
    %v1762 = vpop.f32.mrb[0].mxu0
    %v1763 = vadd.f32 0.0, %v1762
    %v1764 = vpop.f32.mrb[0].mxu0
    %v1765 = vadd.f32 0.0, %v1764
    %1766 = vdwg.mxu0
    %v1767 = vadd.f32 %v1232, %v1763
    %v1768 = vadd.f32 %v1234, %v1765
    %v1769 = vxor.u32 %v1767, 2147483648
    %v1770 = vmul.f32 %v1769, 1.442695
    %v1771 = vpow.pop %v1770
    %v1772 = vadd.f32 %v1771, 1.0
    %v1773 = vrcp.pop %v1772
    %v1774 = vmul.f32 1.0, %v1773
    %v1775 = vtanh.pop %v1768
    %v1776 = vxor.u32 %v1768, 2147483648
    %v1777 = vmul.f32 %v1776, 1.442695
    %v1778 = vpow.pop %v1777
    %v1779 = vadd.f32 %v1778, 1.0
    %v1780 = vrcp.pop %v1779
    %v1781 = vmul.f32 1.0, %v1780
    %v1783 = vrot.slane %v1683, 6
    %v1785 = vmul.f32 %v1774, %v1783
    %v1786 = vmul.f32 %v1774, %v1775
    %1788 = vrot.lane.b32.xlu0 %v1786, 64
    %v1789 = vpop.permute.xlu0 %1788
    %v1791 = vadd.f32 %v1785, %v1789
    %v1792 = vtanh.pop %v1791
    %v1793 = vmul.f32 %v1781, %v1792
    %1795 = vrot.lane.b32.xlu0 %v1793, 64
    %v1796 = vpop.permute.xlu0 %1795
    %1798 = vst.msk [vmem:[#allocation2 + $0x8] sm:$0x3] %vm332, %v1796
    %v1799 = vsel %vm229, %v1796, 0
    %1801 = vmatprep.subr.mxu0 %v1237
    %1802 = vmatpush1.msra.mxu0 %v1236
    %1803 = vmatprep.subr.mxu0 %v1239
    %1804 = vmatpush1.msra.mxu0 %v1238
    %1805 = vmatprep.subr.mxu0 %v1241
    %1806 = vmatpush1.msra.mxu0 %v1240
    %1807 = vmatprep.subr.mxu0 %v1243
    %1808 = vmatpush1.msra.mxu0 %v1242
    %1809 = vmatprep.subr.mxu0 %v1245
    %1810 = vmatpush1.msra.mxu0 %v1244
    %1811 = vmatprep.subr.mxu0 %v1247
    %1812 = vmatpush1.msra.mxu0 %v1246
    %1813 = vmatprep.subr.mxu0 %v1249
    %1814 = vmatpush1.msra.mxu0 %v1248
    %1815 = vmatprep.subr.mxu0 %v1251
    %1816 = vmatpush1.msra.mxu0 %v1250
    %1817 = vmatprep.subr.mxu0 0.0
    %1818 = vmatpush1.msra.mxu0 0.0
    %1819 = vmatprep.subr.mxu0 0.0
    %1820 = vmatpush1.msra.mxu0 0.0
    %1821 = vmatprep.subr.mxu0 0.0
    %1822 = vmatpush1.msra.mxu0 0.0
    %1823 = vmatprep.subr.mxu0 0.0
    %1824 = vmatpush1.msra.mxu0 0.0
    %1825 = vmatprep.subr.mxu0 0.0
    %1826 = vmatpush1.msra.mxu0 0.0
    %1827 = vmatprep.subr.mxu0 0.0
    %1828 = vmatpush1.msra.mxu0 0.0
    %1829 = vmatprep.subr.mxu0 0.0
    %1830 = vmatpush1.msra.mxu0 0.0
    %1831 = vmatprep.subr.mxu0 0.0
    %1832 = vmatpush1.msra.mxu0 0.0
    %1833 = vmatprep.subr.mxu0 0.0
    %1834 = vmatpush1.msra.mxu0 0.0
    %1835 = vmatprep.subr.mxu0 0.0
    %1836 = vmatpush1.msra.mxu0 0.0
    %1837 = vmatprep.subr.mxu0 0.0
    %1838 = vmatpush1.msra.mxu0 0.0
    %1839 = vmatprep.subr.mxu0 0.0
    %1840 = vmatpush1.msra.mxu0 0.0
    %1841 = vmatprep.subr.mxu0 0.0
    %1842 = vmatpush1.msra.mxu0 0.0
    %1843 = vmatprep.subr.mxu0 0.0
    %1844 = vmatpush1.msra.mxu0 0.0
    %1845 = vmatprep.subr.mxu0 0.0
    %1846 = vmatpush1.msra.mxu0 0.0
    %1847 = vmatprep.subr.mxu0 0.0
    %1848 = vmatpush1.msra.mxu0 0.0
    %1849 = vmatprep.subr.mxu0 0.0
    %1850 = vmatpush1.msra.mxu0 0.0
    %1851 = vmatprep.subr.mxu0 0.0
    %1852 = vmatpush1.msra.mxu0 0.0
    %1853 = vmatprep.subr.mxu0 0.0
    %1854 = vmatpush1.msra.mxu0 0.0
    %1855 = vmatprep.subr.mxu0 0.0
    %1856 = vmatpush1.msra.mxu0 0.0
    %1857 = vmatprep.subr.mxu0 0.0
    %1858 = vmatpush1.msra.mxu0 0.0
    %1859 = vmatprep.subr.mxu0 0.0
    %1860 = vmatpush1.msra.mxu0 0.0
    %1861 = vmatprep.subr.mxu0 0.0
    %1862 = vmatpush1.msra.mxu0 0.0
    %1863 = vmatprep.subr.mxu0 0.0
    %1864 = vmatpush1.msra.mxu0 0.0
    %1865 = vmatprep.mubr.f32.mxu0 0.0
    %1866 = vmatmul.mubr.f32.gmra.mrb[0].mxu0 %v1799
    %v1867 = vpop.f32.mrb[0].mxu0
    %v1868 = vadd.f32 0.0, %v1867
    %v1869 = vpop.f32.mrb[0].mxu0
    %v1870 = vadd.f32 0.0, %v1869
    %1871 = vdwg.mxu0
    %v1874 = vrot.slane %v1868, 6
    %v1875 = vrot.slane %v1870, 6
    %v1878 = vadd.f32 %v1232, %v1874
    %v1879 = vadd.f32 %v1234, %v1875
    %v1880 = vxor.u32 %v1878, 2147483648
    %v1881 = vmul.f32 %v1880, 1.442695
    %v1882 = vpow.pop %v1881
    %v1883 = vadd.f32 %v1882, 1.0
    %v1884 = vrcp.pop %v1883
    %v1885 = vmul.f32 1.0, %v1884
    %v1886 = vtanh.pop %v1879
    %v1887 = vxor.u32 %v1879, 2147483648
    %v1888 = vmul.f32 %v1887, 1.442695
    %v1889 = vpow.pop %v1888
    %v1890 = vadd.f32 %v1889, 1.0
    %v1891 = vrcp.pop %v1890
    %v1892 = vmul.f32 1.0, %v1891
    %v1894 = vrot.slane %v1791, 6
    %v1896 = vmul.f32 %v1885, %v1894
    %v1897 = vmul.f32 %v1885, %v1886
    %1899 = vrot.lane.b32.xlu0 %v1897, 64
    %v1900 = vpop.permute.xlu0 %1899
    %v1902 = vadd.f32 %v1896, %v1900
    %v1903 = vtanh.pop %v1902
    %v1904 = vmul.f32 %v1892, %v1903
    %1906 = vrot.lane.b32.xlu0 %v1904, 64
    %v1907 = vpop.permute.xlu0 %1906
    %1909 = vst.msk [vmem:[#allocation2 + $0x8] sm:$0xc] %vm444, %v1907
    %v1910 = vrot.slane %v1904, 2
    %1911 = vrot.lane.b32.xlu0 %v1910, 64
    %v1912 = vpop.permute.xlu0 %1911
    %v1913 = vsel %vm229, %v1912, 0
    %1915 = vmatprep.subr.mxu0 %v1237
    %1916 = vmatpush1.msra.mxu0 %v1236
    %1917 = vmatprep.subr.mxu0 %v1239
    %1918 = vmatpush1.msra.mxu0 %v1238
    %1919 = vmatprep.subr.mxu0 %v1241
    %1920 = vmatpush1.msra.mxu0 %v1240
    %1921 = vmatprep.subr.mxu0 %v1243
    %1922 = vmatpush1.msra.mxu0 %v1242
    %1923 = vmatprep.subr.mxu0 %v1245
    %1924 = vmatpush1.msra.mxu0 %v1244
    %1925 = vmatprep.subr.mxu0 %v1247
    %1926 = vmatpush1.msra.mxu0 %v1246
    %1927 = vmatprep.subr.mxu0 %v1249
    %1928 = vmatpush1.msra.mxu0 %v1248
    %1929 = vmatprep.subr.mxu0 %v1251
    %1930 = vmatpush1.msra.mxu0 %v1250
    %1931 = vmatprep.subr.mxu0 0.0
    %1932 = vmatpush1.msra.mxu0 0.0
    %1933 = vmatprep.subr.mxu0 0.0
    %1934 = vmatpush1.msra.mxu0 0.0
    %1935 = vmatprep.subr.mxu0 0.0
    %1936 = vmatpush1.msra.mxu0 0.0
    %1937 = vmatprep.subr.mxu0 0.0
    %1938 = vmatpush1.msra.mxu0 0.0
    %1939 = vmatprep.subr.mxu0 0.0
    %1940 = vmatpush1.msra.mxu0 0.0
    %1941 = vmatprep.subr.mxu0 0.0
    %1942 = vmatpush1.msra.mxu0 0.0
    %1943 = vmatprep.subr.mxu0 0.0
    %1944 = vmatpush1.msra.mxu0 0.0
    %1945 = vmatprep.subr.mxu0 0.0
    %1946 = vmatpush1.msra.mxu0 0.0
    %1947 = vmatprep.subr.mxu0 0.0
    %1948 = vmatpush1.msra.mxu0 0.0
    %1949 = vmatprep.subr.mxu0 0.0
    %1950 = vmatpush1.msra.mxu0 0.0
    %1951 = vmatprep.subr.mxu0 0.0
    %1952 = vmatpush1.msra.mxu0 0.0
    %1953 = vmatprep.subr.mxu0 0.0
    %1954 = vmatpush1.msra.mxu0 0.0
    %1955 = vmatprep.subr.mxu0 0.0
    %1956 = vmatpush1.msra.mxu0 0.0
    %1957 = vmatprep.subr.mxu0 0.0
    %1958 = vmatpush1.msra.mxu0 0.0
    %1959 = vmatprep.subr.mxu0 0.0
    %1960 = vmatpush1.msra.mxu0 0.0
    %1961 = vmatprep.subr.mxu0 0.0
    %1962 = vmatpush1.msra.mxu0 0.0
    %1963 = vmatprep.subr.mxu0 0.0
    %1964 = vmatpush1.msra.mxu0 0.0
    %1965 = vmatprep.subr.mxu0 0.0
    %1966 = vmatpush1.msra.mxu0 0.0
    %1967 = vmatprep.subr.mxu0 0.0
    %1968 = vmatpush1.msra.mxu0 0.0
    %1969 = vmatprep.subr.mxu0 0.0
    %1970 = vmatpush1.msra.mxu0 0.0
    %1971 = vmatprep.subr.mxu0 0.0
    %1972 = vmatpush1.msra.mxu0 0.0
    %1973 = vmatprep.subr.mxu0 0.0
    %1974 = vmatpush1.msra.mxu0 0.0
    %1975 = vmatprep.subr.mxu0 0.0
    %1976 = vmatpush1.msra.mxu0 0.0
    %1977 = vmatprep.subr.mxu0 0.0
    %1978 = vmatpush1.msra.mxu0 0.0
    %1979 = vmatprep.mubr.f32.mxu0 0.0
    %1980 = vmatmul.mubr.f32.gmra.mrb[0].mxu0 %v1913
    %v1981 = vpop.f32.mrb[0].mxu0
    %v1982 = vadd.f32 0.0, %v1981
    %v1983 = vpop.f32.mrb[0].mxu0
    %v1984 = vadd.f32 0.0, %v1983
    %1985 = vdwg.mxu0
    %v1988 = vrot.slane %v1982, 4
    %v1989 = vrot.slane %v1984, 4
    %v1992 = vadd.f32 %v1232, %v1988
    %v1993 = vadd.f32 %v1234, %v1989
    %v1994 = vxor.u32 %v1992, 2147483648
    %v1995 = vmul.f32 %v1994, 1.442695
    %v1996 = vpow.pop %v1995
    %v1997 = vadd.f32 %v1996, 1.0
    %v1998 = vrcp.pop %v1997
    %v1999 = vmul.f32 1.0, %v1998
    %v2000 = vtanh.pop %v1993
    %v2001 = vxor.u32 %v1993, 2147483648
    %v2002 = vmul.f32 %v2001, 1.442695
    %v2003 = vpow.pop %v2002
    %v2004 = vadd.f32 %v2003, 1.0
    %v2005 = vrcp.pop %v2004
    %v2006 = vmul.f32 1.0, %v2005
    %v2008 = vrot.slane %v1902, 6
    %v2010 = vmul.f32 %v1999, %v2008
    %v2011 = vmul.f32 %v1999, %v2000
    %2013 = vrot.lane.b32.xlu0 %v2011, 64
    %v2014 = vpop.permute.xlu0 %2013
    %v2016 = vadd.f32 %v2010, %v2014
    %v2017 = vtanh.pop %v2016
    %v2018 = vmul.f32 %v2006, %v2017
    %2020 = vrot.lane.b32.xlu0 %v2018, 64
    %v2021 = vpop.permute.xlu0 %2020
    %2023 = vst.msk [vmem:[#allocation2 + $0x8] sm:$0x30] %vm559, %v2021
    %v2024 = vrot.slane %v2018, 4
    %2025 = vrot.lane.b32.xlu0 %v2024, 64
    %v2026 = vpop.permute.xlu0 %2025
    %v2027 = vsel %vm229, %v2026, 0
    %2029 = vmatprep.subr.mxu0 %v1237
    %2030 = vmatpush1.msra.mxu0 %v1236
    %2031 = vmatprep.subr.mxu0 %v1239
    %2032 = vmatpush1.msra.mxu0 %v1238
    %2033 = vmatprep.subr.mxu0 %v1241
    %2034 = vmatpush1.msra.mxu0 %v1240
    %2035 = vmatprep.subr.mxu0 %v1243
    %2036 = vmatpush1.msra.mxu0 %v1242
    %2037 = vmatprep.subr.mxu0 %v1245
    %2038 = vmatpush1.msra.mxu0 %v1244
    %2039 = vmatprep.subr.mxu0 %v1247
    %2040 = vmatpush1.msra.mxu0 %v1246
    %2041 = vmatprep.subr.mxu0 %v1249
    %2042 = vmatpush1.msra.mxu0 %v1248
    %2043 = vmatprep.subr.mxu0 %v1251
    %2044 = vmatpush1.msra.mxu0 %v1250
    %2045 = vmatprep.subr.mxu0 0.0
    %2046 = vmatpush1.msra.mxu0 0.0
    %2047 = vmatprep.subr.mxu0 0.0
    %2048 = vmatpush1.msra.mxu0 0.0
    %2049 = vmatprep.subr.mxu0 0.0
    %2050 = vmatpush1.msra.mxu0 0.0
    %2051 = vmatprep.subr.mxu0 0.0
    %2052 = vmatpush1.msra.mxu0 0.0
    %2053 = vmatprep.subr.mxu0 0.0
    %2054 = vmatpush1.msra.mxu0 0.0
    %2055 = vmatprep.subr.mxu0 0.0
    %2056 = vmatpush1.msra.mxu0 0.0
    %2057 = vmatprep.subr.mxu0 0.0
    %2058 = vmatpush1.msra.mxu0 0.0
    %2059 = vmatprep.subr.mxu0 0.0
    %2060 = vmatpush1.msra.mxu0 0.0
    %2061 = vmatprep.subr.mxu0 0.0
    %2062 = vmatpush1.msra.mxu0 0.0
    %2063 = vmatprep.subr.mxu0 0.0
    %2064 = vmatpush1.msra.mxu0 0.0
    %2065 = vmatprep.subr.mxu0 0.0
    %2066 = vmatpush1.msra.mxu0 0.0
    %2067 = vmatprep.subr.mxu0 0.0
    %2068 = vmatpush1.msra.mxu0 0.0
    %2069 = vmatprep.subr.mxu0 0.0
    %2070 = vmatpush1.msra.mxu0 0.0
    %2071 = vmatprep.subr.mxu0 0.0
    %2072 = vmatpush1.msra.mxu0 0.0
    %2073 = vmatprep.subr.mxu0 0.0
    %2074 = vmatpush1.msra.mxu0 0.0
    %2075 = vmatprep.subr.mxu0 0.0
    %2076 = vmatpush1.msra.mxu0 0.0
    %2077 = vmatprep.subr.mxu0 0.0
    %2078 = vmatpush1.msra.mxu0 0.0
    %2079 = vmatprep.subr.mxu0 0.0
    %2080 = vmatpush1.msra.mxu0 0.0
    %2081 = vmatprep.subr.mxu0 0.0
    %2082 = vmatpush1.msra.mxu0 0.0
    %2083 = vmatprep.subr.mxu0 0.0
    %2084 = vmatpush1.msra.mxu0 0.0
    %2085 = vmatprep.subr.mxu0 0.0
    %2086 = vmatpush1.msra.mxu0 0.0
    %2087 = vmatprep.subr.mxu0 0.0
    %2088 = vmatpush1.msra.mxu0 0.0
    %2089 = vmatprep.subr.mxu0 0.0
    %2090 = vmatpush1.msra.mxu0 0.0
    %2091 = vmatprep.subr.mxu0 0.0
    %2092 = vmatpush1.msra.mxu0 0.0
    %2093 = vmatprep.mubr.f32.mxu0 0.0
    %2094 = vmatmul.mubr.f32.gmra.mrb[0].mxu0 %v2027
    %v2095 = vpop.f32.mrb[0].mxu0
    %v2096 = vadd.f32 0.0, %v2095
    %v2097 = vpop.f32.mrb[0].mxu0
    %v2098 = vadd.f32 0.0, %v2097
    %2099 = vdwg.mxu0
    %v2102 = vrot.slane %v2096, 2
    %v2103 = vrot.slane %v2098, 2
    %v2106 = vadd.f32 %v1232, %v2102
    %v2107 = vadd.f32 %v1234, %v2103
    %v2108 = vxor.u32 %v2106, 2147483648
    %v2109 = vmul.f32 %v2108, 1.442695
    %v2110 = vpow.pop %v2109
    %v2111 = vadd.f32 %v2110, 1.0
    %v2112 = vrcp.pop %v2111
    %v2113 = vmul.f32 1.0, %v2112
    %v2114 = vtanh.pop %v2107
    %v2115 = vxor.u32 %v2107, 2147483648
    %v2116 = vmul.f32 %v2115, 1.442695
    %v2117 = vpow.pop %v2116
    %v2118 = vadd.f32 %v2117, 1.0
    %v2119 = vrcp.pop %v2118
    %v2120 = vmul.f32 1.0, %v2119
    %v2122 = vrot.slane %v2016, 6
    %v2124 = vmul.f32 %v2113, %v2122
    %v2125 = vmul.f32 %v2113, %v2114
    %2127 = vrot.lane.b32.xlu0 %v2125, 64
    %v2128 = vpop.permute.xlu0 %2127
    %v2130 = vadd.f32 %v2124, %v2128
    %v2131 = vtanh.pop %v2130
    %v2132 = vmul.f32 %v2120, %v2131
    %2134 = vrot.lane.b32.xlu0 %v2132, 64
    %v2135 = vpop.permute.xlu0 %2134
    %2137 = vst.msk [vmem:[#allocation2 + $0x8] sm:$0xc0] %vm674, %v2135
    %v2138 = vld [vmem:[#allocation2] sm:$0xff]
    %v2139 = vld [vmem:[#allocation2 + $0x8] sm:$0xff]
    %v2140 = vld [vmem:[#allocation8] sm:$0xff]
    %v2141 = vld [vmem:[#allocation8 + $0x8] sm:$0xff]
    %v2142 = vld [vmem:[#allocation8 + $0x10] sm:$0xff]
    %v2143 = vld [vmem:[#allocation8 + $0x18] sm:$0xff]
    %v2144 = vld [vmem:[#allocation8 + $0x20] sm:$0xff]
    %v2145 = vld [vmem:[#allocation8 + $0x28] sm:$0xff]
    %v2146 = vld [vmem:[#allocation8 + $0x30] sm:$0xff]
    %v2147 = vld [vmem:[#allocation8 + $0x38] sm:$0xff]
    %v2148 = vld [vmem:[#allocation8 + $0x40] sm:$0xff]
    %v2149 = vld [vmem:[#allocation8 + $0x48] sm:$0xff]
    %v2150 = vld [vmem:[#allocation8 + $0x50] sm:$0xff]
    %v2151 = vld [vmem:[#allocation8 + $0x58] sm:$0xff]
    %v2152 = vld [vmem:[#allocation8 + $0x60] sm:$0xff]
    %v2153 = vld [vmem:[#allocation8 + $0x68] sm:$0xff]
    %v2154 = vld [vmem:[#allocation8 + $0x70] sm:$0xff]
    %v2155 = vld [vmem:[#allocation8 + $0x78] sm:$0xff]
    %v2156 = vld [vmem:[%s9] sm:$0x3]
    %v2158 = vlaneseq
    %v2159 = vshrl.u32 %v2158, 7
    %v2160 = vsub.s32 0, %v2159
    %v2161 = vrot.slane %v2156, %v2160
    %v2162 = vlaneseq
    %v2163 = vshrl.u32 %v2162, 7
    %v2164 = vsub.s32 1, %v2163
    %v2165 = vrot.slane %v2156, %v2164
    %v2169 = vsel %vm229, %v2138, 0
    %v2172 = vsel %vm229, %v2139, 0
    %2174 = vmatprep.subr.mxu0 %v2141
    %2175 = vmatpush1.msra.mxu0 %v2140
    %2176 = vmatprep.subr.mxu0 %v2143
    %2177 = vmatpush1.msra.mxu0 %v2142
    %2178 = vmatprep.subr.mxu0 %v2145
    %2179 = vmatpush1.msra.mxu0 %v2144
    %2180 = vmatprep.subr.mxu0 %v2147
    %2181 = vmatpush1.msra.mxu0 %v2146
    %2182 = vmatprep.subr.mxu0 %v2149
    %2183 = vmatpush1.msra.mxu0 %v2148
    %2184 = vmatprep.subr.mxu0 %v2151
    %2185 = vmatpush1.msra.mxu0 %v2150
    %2186 = vmatprep.subr.mxu0 %v2153
    %2187 = vmatpush1.msra.mxu0 %v2152
    %2188 = vmatprep.subr.mxu0 %v2155
    %2189 = vmatpush1.msra.mxu0 %v2154
    %2190 = vmatprep.subr.mxu0 0.0
    %2191 = vmatpush1.msra.mxu0 0.0
    %2192 = vmatprep.subr.mxu0 0.0
    %2193 = vmatpush1.msra.mxu0 0.0
    %2194 = vmatprep.subr.mxu0 0.0
    %2195 = vmatpush1.msra.mxu0 0.0
    %2196 = vmatprep.subr.mxu0 0.0
    %2197 = vmatpush1.msra.mxu0 0.0
    %2198 = vmatprep.subr.mxu0 0.0
    %2199 = vmatpush1.msra.mxu0 0.0
    %2200 = vmatprep.subr.mxu0 0.0
    %2201 = vmatpush1.msra.mxu0 0.0
    %2202 = vmatprep.subr.mxu0 0.0
    %2203 = vmatpush1.msra.mxu0 0.0
    %2204 = vmatprep.subr.mxu0 0.0
    %2205 = vmatpush1.msra.mxu0 0.0
    %2206 = vmatprep.subr.mxu0 0.0
    %2207 = vmatpush1.msra.mxu0 0.0
    %2208 = vmatprep.subr.mxu0 0.0
    %2209 = vmatpush1.msra.mxu0 0.0
    %2210 = vmatprep.subr.mxu0 0.0
    %2211 = vmatpush1.msra.mxu0 0.0
    %2212 = vmatprep.subr.mxu0 0.0
    %2213 = vmatpush1.msra.mxu0 0.0
    %2214 = vmatprep.subr.mxu0 0.0
    %2215 = vmatpush1.msra.mxu0 0.0
    %2216 = vmatprep.subr.mxu0 0.0
    %2217 = vmatpush1.msra.mxu0 0.0
    %2218 = vmatprep.subr.mxu0 0.0
    %2219 = vmatpush1.msra.mxu0 0.0
    %2220 = vmatprep.subr.mxu0 0.0
    %2221 = vmatpush1.msra.mxu0 0.0
    %2222 = vmatprep.subr.mxu0 0.0
    %2223 = vmatpush1.msra.mxu0 0.0
    %2224 = vmatprep.subr.mxu0 0.0
    %2225 = vmatpush1.msra.mxu0 0.0
    %2226 = vmatprep.subr.mxu0 0.0
    %2227 = vmatpush1.msra.mxu0 0.0
    %2228 = vmatprep.subr.mxu0 0.0
    %2229 = vmatpush1.msra.mxu0 0.0
    %2230 = vmatprep.subr.mxu0 0.0
    %2231 = vmatpush1.msra.mxu0 0.0
    %2232 = vmatprep.subr.mxu0 0.0
    %2233 = vmatpush1.msra.mxu0 0.0
    %2234 = vmatprep.subr.mxu0 0.0
    %2235 = vmatpush1.msra.mxu0 0.0
    %2236 = vmatprep.subr.mxu0 0.0
    %2237 = vmatpush1.msra.mxu0 0.0
    %2238 = vmatprep.mubr.f32.mxu0 0.0
    %2239 = vmatmul.mubr.f32.gmra.mrb[0].mxu0 %v2169
    %v2240 = vpop.f32.mrb[0].mxu0
    %v2241 = vadd.f32 %v2161, %v2240
    %v2242 = vpop.f32.mrb[0].mxu0
    %v2243 = vadd.f32 %v2165, %v2242
    %2244 = vmatprep.mubr.f32.mxu0 0.0
    %2245 = vmatmul.mubr.f32.gmra.mrb[0].mxu0 %v2172
    %v2246 = vpop.f32.mrb[0].mxu0
    %v2247 = vadd.f32 %v2161, %v2246
    %v2248 = vpop.f32.mrb[0].mxu0
    %v2249 = vadd.f32 %v2165, %v2248
    %2250 = vdwg.mxu0
    %v2251 = vld [vmem:[#allocation9] sm:$0xff]
    %v2252 = vld [vmem:[#allocation9 + $0x8] sm:$0xff]
    %v2253 = vld [vmem:[#allocation9 + $0x10] sm:$0xff]
    %v2254 = vld [vmem:[#allocation9 + $0x18] sm:$0xff]
    %v2255 = vld [vmem:[#allocation9 + $0x20] sm:$0xff]
    %v2256 = vld [vmem:[#allocation9 + $0x28] sm:$0xff]
    %v2257 = vld [vmem:[#allocation9 + $0x30] sm:$0xff]
    %v2258 = vld [vmem:[#allocation9 + $0x38] sm:$0xff]
    %v2259 = vld [vmem:[#allocation9 + $0x40] sm:$0xff]
    %v2260 = vld [vmem:[#allocation9 + $0x48] sm:$0xff]
    %v2261 = vld [vmem:[#allocation9 + $0x50] sm:$0xff]
    %v2262 = vld [vmem:[#allocation9 + $0x58] sm:$0xff]
    %v2263 = vld [vmem:[#allocation9 + $0x60] sm:$0xff]
    %v2264 = vld [vmem:[#allocation9 + $0x68] sm:$0xff]
    %v2265 = vld [vmem:[#allocation9 + $0x70] sm:$0xff]
    %v2266 = vld [vmem:[#allocation9 + $0x78] sm:$0xff]
    %v2267 = vld [vmem:[%s10] sm:$0xff]
    %v2268 = vld [vmem:[%s10 + $0x8] sm:$0xff]
    %v2269 = vld [vmem:[%s10 + $0x10] sm:$0xff]
    %v2270 = vld [vmem:[%s10 + $0x18] sm:$0xff]
    %v2271 = vld [vmem:[%s10 + $0x20] sm:$0xff]
    %v2272 = vld [vmem:[%s10 + $0x28] sm:$0xff]
    %v2273 = vld [vmem:[%s10 + $0x30] sm:$0xff]
    %v2274 = vld [vmem:[%s10 + $0x38] sm:$0xff]
    %v2275 = vld [vmem:[%s11] sm:$0x1]
    %v2276 = vld [vmem:[%s12] sm:$0x1]
    %2277 = vmatprep.subr.mxu0 %v2252
    %2278 = vmatpush1.msra.mxu0 %v2251
    %2279 = vmatprep.subr.mxu0 %v2254
    %2280 = vmatpush1.msra.mxu0 %v2253
    %2281 = vmatprep.subr.mxu0 %v2256
    %2282 = vmatpush1.msra.mxu0 %v2255
    %2283 = vmatprep.subr.mxu0 %v2258
    %2284 = vmatpush1.msra.mxu0 %v2257
    %2285 = vmatprep.subr.mxu0 %v2260
    %2286 = vmatpush1.msra.mxu0 %v2259
    %2287 = vmatprep.subr.mxu0 %v2262
    %2288 = vmatpush1.msra.mxu0 %v2261
    %2289 = vmatprep.subr.mxu0 %v2264
    %2290 = vmatpush1.msra.mxu0 %v2263
    %2291 = vmatprep.subr.mxu0 %v2266
    %2292 = vmatpush1.msra.mxu0 %v2265
    %2293 = vmatprep.subr.mxu0 0.0
    %2294 = vmatpush1.msra.mxu0 0.0
    %2295 = vmatprep.subr.mxu0 0.0
    %2296 = vmatpush1.msra.mxu0 0.0
    %2297 = vmatprep.subr.mxu0 0.0
    %2298 = vmatpush1.msra.mxu0 0.0
    %2299 = vmatprep.subr.mxu0 0.0
    %2300 = vmatpush1.msra.mxu0 0.0
    %2301 = vmatprep.subr.mxu0 0.0
    %2302 = vmatpush1.msra.mxu0 0.0
    %2303 = vmatprep.subr.mxu0 0.0
    %2304 = vmatpush1.msra.mxu0 0.0
    %2305 = vmatprep.subr.mxu0 0.0
    %2306 = vmatpush1.msra.mxu0 0.0
    %2307 = vmatprep.subr.mxu0 0.0
    %2308 = vmatpush1.msra.mxu0 0.0
    %2309 = vmatprep.subr.mxu0 0.0
    %2310 = vmatpush1.msra.mxu0 0.0
    %2311 = vmatprep.subr.mxu0 0.0
    %2312 = vmatpush1.msra.mxu0 0.0
    %2313 = vmatprep.subr.mxu0 0.0
    %2314 = vmatpush1.msra.mxu0 0.0
    %2315 = vmatprep.subr.mxu0 0.0
    %2316 = vmatpush1.msra.mxu0 0.0
    %2317 = vmatprep.subr.mxu0 0.0
    %2318 = vmatpush1.msra.mxu0 0.0
    %2319 = vmatprep.subr.mxu0 0.0
    %2320 = vmatpush1.msra.mxu0 0.0
    %2321 = vmatprep.subr.mxu0 0.0
    %2322 = vmatpush1.msra.mxu0 0.0
    %2323 = vmatprep.subr.mxu0 0.0
    %2324 = vmatpush1.msra.mxu0 0.0
    %2325 = vmatprep.subr.mxu0 0.0
    %2326 = vmatpush1.msra.mxu0 0.0
    %2327 = vmatprep.subr.mxu0 0.0
    %2328 = vmatpush1.msra.mxu0 0.0
    %2329 = vmatprep.subr.mxu0 0.0
    %2330 = vmatpush1.msra.mxu0 0.0
    %2331 = vmatprep.subr.mxu0 0.0
    %2332 = vmatpush1.msra.mxu0 0.0
    %2333 = vmatprep.subr.mxu0 0.0
    %2334 = vmatpush1.msra.mxu0 0.0
    %2335 = vmatprep.subr.mxu0 0.0
    %2336 = vmatpush1.msra.mxu0 0.0
    %2337 = vmatprep.subr.mxu0 0.0
    %2338 = vmatpush1.msra.mxu0 0.0
    %2339 = vmatprep.subr.mxu0 0.0
    %2340 = vmatpush1.msra.mxu0 0.0
    %2341 = vmatprep.mubr.f32.mxu0 0.0
    %2342 = vmatmul.mubr.f32.gmra.mrb[0].mxu0 %v231
    %v2343 = vpop.f32.mrb[0].mxu0
    %v2344 = vadd.f32 0.0, %v2343
    %v2345 = vpop.f32.mrb[0].mxu0
    %v2346 = vadd.f32 0.0, %v2345
    %2347 = vdwg.mxu0
    %v2348 = vadd.f32 %v2241, %v2344
    %v2349 = vadd.f32 %v2243, %v2346
    %v2350 = vxor.u32 %v2348, 2147483648
    %v2351 = vmul.f32 %v2350, 1.442695
    %v2352 = vpow.pop %v2351
    %v2353 = vadd.f32 %v2352, 1.0
    %v2354 = vrcp.pop %v2353
    %v2355 = vmul.f32 1.0, %v2354
    %v2356 = vtanh.pop %v2349
    %v2357 = vxor.u32 %v2349, 2147483648
    %v2358 = vmul.f32 %v2357, 1.442695
    %v2359 = vpow.pop %v2358
    %v2360 = vadd.f32 %v2359, 1.0
    %v2361 = vrcp.pop %v2360
    %v2362 = vmul.f32 1.0, %v2361
    %v2363 = vmul.f32 %v2355, 0.0
    %v2364 = vmul.f32 %v2355, %v2356
    %2366 = vrot.lane.b32.xlu0 %v2364, 64
    %v2367 = vpop.permute.xlu0 %2366
    %v2369 = vadd.f32 %v2363, %v2367
    %v2370 = vtanh.pop %v2369
    %v2371 = vmul.f32 %v2362, %v2370
    %v2373 = vlaneseq
    %v2374 = vshrl.u32 %v2373, 7
    %v2375 = vsub.s32 0, %v2374
    %v2376 = vrot.slane %v2275, %v2375
    %2379 = vrot.lane.b32.xlu0 %v2371, 64
    %v2380 = vpop.permute.xlu0 %2379
    %v2381 = vsel %vm229, %v2380, 0
    %2383 = vmatprep.subr.mxu0 0.0
    %2384 = vmatpush1.msra.mxu0 %v2267
    %2385 = vmatprep.subr.mxu0 0.0
    %2386 = vmatpush1.msra.mxu0 %v2268
    %2387 = vmatprep.subr.mxu0 0.0
    %2388 = vmatpush1.msra.mxu0 %v2269
    %2389 = vmatprep.subr.mxu0 0.0
    %2390 = vmatpush1.msra.mxu0 %v2270
    %2391 = vmatprep.subr.mxu0 0.0
    %2392 = vmatpush1.msra.mxu0 %v2271
    %2393 = vmatprep.subr.mxu0 0.0
    %2394 = vmatpush1.msra.mxu0 %v2272
    %2395 = vmatprep.subr.mxu0 0.0
    %2396 = vmatpush1.msra.mxu0 %v2273
    %2397 = vmatprep.subr.mxu0 0.0
    %2398 = vmatpush1.msra.mxu0 %v2274
    %2399 = vmatprep.subr.mxu0 0.0
    %2400 = vmatpush1.msra.mxu0 0.0
    %2401 = vmatprep.subr.mxu0 0.0
    %2402 = vmatpush1.msra.mxu0 0.0
    %2403 = vmatprep.subr.mxu0 0.0
    %2404 = vmatpush1.msra.mxu0 0.0
    %2405 = vmatprep.subr.mxu0 0.0
    %2406 = vmatpush1.msra.mxu0 0.0
    %2407 = vmatprep.subr.mxu0 0.0
    %2408 = vmatpush1.msra.mxu0 0.0
    %2409 = vmatprep.subr.mxu0 0.0
    %2410 = vmatpush1.msra.mxu0 0.0
    %2411 = vmatprep.subr.mxu0 0.0
    %2412 = vmatpush1.msra.mxu0 0.0
    %2413 = vmatprep.subr.mxu0 0.0
    %2414 = vmatpush1.msra.mxu0 0.0
    %2415 = vmatprep.subr.mxu0 0.0
    %2416 = vmatpush1.msra.mxu0 0.0
    %2417 = vmatprep.subr.mxu0 0.0
    %2418 = vmatpush1.msra.mxu0 0.0
    %2419 = vmatprep.subr.mxu0 0.0
    %2420 = vmatpush1.msra.mxu0 0.0
    %2421 = vmatprep.subr.mxu0 0.0
    %2422 = vmatpush1.msra.mxu0 0.0
    %2423 = vmatprep.subr.mxu0 0.0
    %2424 = vmatpush1.msra.mxu0 0.0
    %2425 = vmatprep.subr.mxu0 0.0
    %2426 = vmatpush1.msra.mxu0 0.0
    %2427 = vmatprep.subr.mxu0 0.0
    %2428 = vmatpush1.msra.mxu0 0.0
    %2429 = vmatprep.subr.mxu0 0.0
    %2430 = vmatpush1.msra.mxu0 0.0
    %2431 = vmatprep.subr.mxu0 0.0
    %2432 = vmatpush1.msra.mxu0 0.0
    %2433 = vmatprep.subr.mxu0 0.0
    %2434 = vmatpush1.msra.mxu0 0.0
    %2435 = vmatprep.subr.mxu0 0.0
    %2436 = vmatpush1.msra.mxu0 0.0
    %2437 = vmatprep.subr.mxu0 0.0
    %2438 = vmatpush1.msra.mxu0 0.0
    %2439 = vmatprep.subr.mxu0 0.0
    %2440 = vmatpush1.msra.mxu0 0.0
    %2441 = vmatprep.subr.mxu0 0.0
    %2442 = vmatpush1.msra.mxu0 0.0
    %2443 = vmatprep.subr.mxu0 0.0
    %2444 = vmatpush1.msra.mxu0 0.0
    %2445 = vmatprep.subr.mxu0 0.0
    %2446 = vmatpush1.msra.mxu0 0.0
    %2447 = vmatprep.mubr.f32.mxu0 0.0
    %2448 = vmatmul.mubr.f32.gmra.mrb[0].mxu0 %v2381
    %v2449 = vpop.f32.mrb[0].mxu0
    %v2450 = vadd.f32 %v2376, %v2449
    %v2451 = vpop.f32.mrb[0].mxu0
    %2452 = vdwg.mxu0
    %v2453 = vtanh.pop %v2450
    %v2455 = vlaneseq
    %v2456 = vshrl.u32 %v2455, 7
    %v2457 = vsub.s32 0, %v2456
    %v2458 = vrot.slane %v2276, %v2457
    %v2460 = vmul.f32 %v2453, %v2458
    %v2461 = vsel %vm332, %v2460, 0.0
    %2462 = vadd.xlane.f32.xlu0 %v2461
    %v2463 = vpop.xlane.xlu0 %2462
    %2464 = vmatprep.subr.mxu0 %v2252
    %2465 = vmatpush1.msra.mxu0 %v2251
    %2466 = vmatprep.subr.mxu0 %v2254
    %2467 = vmatpush1.msra.mxu0 %v2253
    %2468 = vmatprep.subr.mxu0 %v2256
    %2469 = vmatpush1.msra.mxu0 %v2255
    %2470 = vmatprep.subr.mxu0 %v2258
    %2471 = vmatpush1.msra.mxu0 %v2257
    %2472 = vmatprep.subr.mxu0 %v2260
    %2473 = vmatpush1.msra.mxu0 %v2259
    %2474 = vmatprep.subr.mxu0 %v2262
    %2475 = vmatpush1.msra.mxu0 %v2261
    %2476 = vmatprep.subr.mxu0 %v2264
    %2477 = vmatpush1.msra.mxu0 %v2263
    %2478 = vmatprep.subr.mxu0 %v2266
    %2479 = vmatpush1.msra.mxu0 %v2265
    %2480 = vmatprep.subr.mxu0 0.0
    %2481 = vmatpush1.msra.mxu0 0.0
    %2482 = vmatprep.subr.mxu0 0.0
    %2483 = vmatpush1.msra.mxu0 0.0
    %2484 = vmatprep.subr.mxu0 0.0
    %2485 = vmatpush1.msra.mxu0 0.0
    %2486 = vmatprep.subr.mxu0 0.0
    %2487 = vmatpush1.msra.mxu0 0.0
    %2488 = vmatprep.subr.mxu0 0.0
    %2489 = vmatpush1.msra.mxu0 0.0
    %2490 = vmatprep.subr.mxu0 0.0
    %2491 = vmatpush1.msra.mxu0 0.0
    %2492 = vmatprep.subr.mxu0 0.0
    %2493 = vmatpush1.msra.mxu0 0.0
    %2494 = vmatprep.subr.mxu0 0.0
    %2495 = vmatpush1.msra.mxu0 0.0
    %2496 = vmatprep.subr.mxu0 0.0
    %2497 = vmatpush1.msra.mxu0 0.0
    %2498 = vmatprep.subr.mxu0 0.0
    %2499 = vmatpush1.msra.mxu0 0.0
    %2500 = vmatprep.subr.mxu0 0.0
    %2501 = vmatpush1.msra.mxu0 0.0
    %2502 = vmatprep.subr.mxu0 0.0
    %2503 = vmatpush1.msra.mxu0 0.0
    %2504 = vmatprep.subr.mxu0 0.0
    %2505 = vmatpush1.msra.mxu0 0.0
    %2506 = vmatprep.subr.mxu0 0.0
    %2507 = vmatpush1.msra.mxu0 0.0
    %2508 = vmatprep.subr.mxu0 0.0
    %2509 = vmatpush1.msra.mxu0 0.0
    %2510 = vmatprep.subr.mxu0 0.0
    %2511 = vmatpush1.msra.mxu0 0.0
    %2512 = vmatprep.subr.mxu0 0.0
    %2513 = vmatpush1.msra.mxu0 0.0
    %2514 = vmatprep.subr.mxu0 0.0
    %2515 = vmatpush1.msra.mxu0 0.0
    %2516 = vmatprep.subr.mxu0 0.0
    %2517 = vmatpush1.msra.mxu0 0.0
    %2518 = vmatprep.subr.mxu0 0.0
    %2519 = vmatpush1.msra.mxu0 0.0
    %2520 = vmatprep.subr.mxu0 0.0
    %2521 = vmatpush1.msra.mxu0 0.0
    %2522 = vmatprep.subr.mxu0 0.0
    %2523 = vmatpush1.msra.mxu0 0.0
    %2524 = vmatprep.subr.mxu0 0.0
    %2525 = vmatpush1.msra.mxu0 0.0
    %2526 = vmatprep.subr.mxu0 0.0
    %2527 = vmatpush1.msra.mxu0 0.0
    %2528 = vmatprep.mubr.f32.mxu0 0.0
    %2529 = vmatmul.mubr.f32.gmra.mrb[0].mxu0 %v2381
    %v2530 = vpop.f32.mrb[0].mxu0
    %v2531 = vadd.f32 0.0, %v2530
    %v2532 = vpop.f32.mrb[0].mxu0
    %v2533 = vadd.f32 0.0, %v2532
    %2534 = vdwg.mxu0
    %v2537 = vrot.slane %v2531, 6
    %v2538 = vrot.slane %v2533, 6
    %v2541 = vadd.f32 %v2241, %v2537
    %v2542 = vadd.f32 %v2243, %v2538
    %v2543 = vxor.u32 %v2541, 2147483648
    %v2544 = vmul.f32 %v2543, 1.442695
    %v2545 = vpow.pop %v2544
    %v2546 = vadd.f32 %v2545, 1.0
    %v2547 = vrcp.pop %v2546
    %v2548 = vmul.f32 1.0, %v2547
    %v2549 = vtanh.pop %v2542
    %v2550 = vxor.u32 %v2542, 2147483648
    %v2551 = vmul.f32 %v2550, 1.442695
    %v2552 = vpow.pop %v2551
    %v2553 = vadd.f32 %v2552, 1.0
    %v2554 = vrcp.pop %v2553
    %v2555 = vmul.f32 1.0, %v2554
    %v2557 = vrot.slane %v2369, 6
    %v2559 = vmul.f32 %v2548, %v2557
    %v2560 = vmul.f32 %v2548, %v2549
    %2562 = vrot.lane.b32.xlu0 %v2560, 64
    %v2563 = vpop.permute.xlu0 %2562
    %v2565 = vadd.f32 %v2559, %v2563
    %v2566 = vtanh.pop %v2565
    %v2567 = vmul.f32 %v2555, %v2566
    %v2569 = vrot.slane %v2567, 2
    %2570 = vrot.lane.b32.xlu0 %v2569, 64
    %v2571 = vpop.permute.xlu0 %2570
    %v2572 = vsel %vm229, %v2571, 0
    %2574 = vmatprep.subr.mxu0 0.0
    %2575 = vmatpush1.msra.mxu0 %v2267
    %2576 = vmatprep.subr.mxu0 0.0
    %2577 = vmatpush1.msra.mxu0 %v2268
    %2578 = vmatprep.subr.mxu0 0.0
    %2579 = vmatpush1.msra.mxu0 %v2269
    %2580 = vmatprep.subr.mxu0 0.0
    %2581 = vmatpush1.msra.mxu0 %v2270
    %2582 = vmatprep.subr.mxu0 0.0
    %2583 = vmatpush1.msra.mxu0 %v2271
    %2584 = vmatprep.subr.mxu0 0.0
    %2585 = vmatpush1.msra.mxu0 %v2272
    %2586 = vmatprep.subr.mxu0 0.0
    %2587 = vmatpush1.msra.mxu0 %v2273
    %2588 = vmatprep.subr.mxu0 0.0
    %2589 = vmatpush1.msra.mxu0 %v2274
    %2590 = vmatprep.subr.mxu0 0.0
    %2591 = vmatpush1.msra.mxu0 0.0
    %2592 = vmatprep.subr.mxu0 0.0
    %2593 = vmatpush1.msra.mxu0 0.0
    %2594 = vmatprep.subr.mxu0 0.0
    %2595 = vmatpush1.msra.mxu0 0.0
    %2596 = vmatprep.subr.mxu0 0.0
    %2597 = vmatpush1.msra.mxu0 0.0
    %2598 = vmatprep.subr.mxu0 0.0
    %2599 = vmatpush1.msra.mxu0 0.0
    %2600 = vmatprep.subr.mxu0 0.0
    %2601 = vmatpush1.msra.mxu0 0.0
    %2602 = vmatprep.subr.mxu0 0.0
    %2603 = vmatpush1.msra.mxu0 0.0
    %2604 = vmatprep.subr.mxu0 0.0
    %2605 = vmatpush1.msra.mxu0 0.0
    %2606 = vmatprep.subr.mxu0 0.0
    %2607 = vmatpush1.msra.mxu0 0.0
    %2608 = vmatprep.subr.mxu0 0.0
    %2609 = vmatpush1.msra.mxu0 0.0
    %2610 = vmatprep.subr.mxu0 0.0
    %2611 = vmatpush1.msra.mxu0 0.0
    %2612 = vmatprep.subr.mxu0 0.0
    %2613 = vmatpush1.msra.mxu0 0.0
    %2614 = vmatprep.subr.mxu0 0.0
    %2615 = vmatpush1.msra.mxu0 0.0
    %2616 = vmatprep.subr.mxu0 0.0
    %2617 = vmatpush1.msra.mxu0 0.0
    %2618 = vmatprep.subr.mxu0 0.0
    %2619 = vmatpush1.msra.mxu0 0.0
    %2620 = vmatprep.subr.mxu0 0.0
    %2621 = vmatpush1.msra.mxu0 0.0
    %2622 = vmatprep.subr.mxu0 0.0
    %2623 = vmatpush1.msra.mxu0 0.0
    %2624 = vmatprep.subr.mxu0 0.0
    %2625 = vmatpush1.msra.mxu0 0.0
    %2626 = vmatprep.subr.mxu0 0.0
    %2627 = vmatpush1.msra.mxu0 0.0
    %2628 = vmatprep.subr.mxu0 0.0
    %2629 = vmatpush1.msra.mxu0 0.0
    %2630 = vmatprep.subr.mxu0 0.0
    %2631 = vmatpush1.msra.mxu0 0.0
    %2632 = vmatprep.subr.mxu0 0.0
    %2633 = vmatpush1.msra.mxu0 0.0
    %2634 = vmatprep.subr.mxu0 0.0
    %2635 = vmatpush1.msra.mxu0 0.0
    %2636 = vmatprep.subr.mxu0 0.0
    %2637 = vmatpush1.msra.mxu0 0.0
    %2638 = vmatprep.mubr.f32.mxu0 0.0
    %2639 = vmatmul.mubr.f32.gmra.mrb[0].mxu0 %v2572
    %v2640 = vpop.f32.mrb[0].mxu0
    %v2641 = vadd.f32 %v2376, %v2640
    %v2642 = vpop.f32.mrb[0].mxu0
    %2643 = vdwg.mxu0
    %v2644 = vtanh.pop %v2641
    %v2645 = vmul.f32 %v2644, %v2458
    %v2646 = vsel %vm332, %v2645, 0.0
    %2647 = vadd.xlane.f32.xlu0 %v2646
    %v2648 = vpop.xlane.xlu0 %2647
    %2649 = vmatprep.subr.mxu0 %v2252
    %2650 = vmatpush1.msra.mxu0 %v2251
    %2651 = vmatprep.subr.mxu0 %v2254
    %2652 = vmatpush1.msra.mxu0 %v2253
    %2653 = vmatprep.subr.mxu0 %v2256
    %2654 = vmatpush1.msra.mxu0 %v2255
    %2655 = vmatprep.subr.mxu0 %v2258
    %2656 = vmatpush1.msra.mxu0 %v2257
    %2657 = vmatprep.subr.mxu0 %v2260
    %2658 = vmatpush1.msra.mxu0 %v2259
    %2659 = vmatprep.subr.mxu0 %v2262
    %2660 = vmatpush1.msra.mxu0 %v2261
    %2661 = vmatprep.subr.mxu0 %v2264
    %2662 = vmatpush1.msra.mxu0 %v2263
    %2663 = vmatprep.subr.mxu0 %v2266
    %2664 = vmatpush1.msra.mxu0 %v2265
    %2665 = vmatprep.subr.mxu0 0.0
    %2666 = vmatpush1.msra.mxu0 0.0
    %2667 = vmatprep.subr.mxu0 0.0
    %2668 = vmatpush1.msra.mxu0 0.0
    %2669 = vmatprep.subr.mxu0 0.0
    %2670 = vmatpush1.msra.mxu0 0.0
    %2671 = vmatprep.subr.mxu0 0.0
    %2672 = vmatpush1.msra.mxu0 0.0
    %2673 = vmatprep.subr.mxu0 0.0
    %2674 = vmatpush1.msra.mxu0 0.0
    %2675 = vmatprep.subr.mxu0 0.0
    %2676 = vmatpush1.msra.mxu0 0.0
    %2677 = vmatprep.subr.mxu0 0.0
    %2678 = vmatpush1.msra.mxu0 0.0
    %2679 = vmatprep.subr.mxu0 0.0
    %2680 = vmatpush1.msra.mxu0 0.0
    %2681 = vmatprep.subr.mxu0 0.0
    %2682 = vmatpush1.msra.mxu0 0.0
    %2683 = vmatprep.subr.mxu0 0.0
    %2684 = vmatpush1.msra.mxu0 0.0
    %2685 = vmatprep.subr.mxu0 0.0
    %2686 = vmatpush1.msra.mxu0 0.0
    %2687 = vmatprep.subr.mxu0 0.0
    %2688 = vmatpush1.msra.mxu0 0.0
    %2689 = vmatprep.subr.mxu0 0.0
    %2690 = vmatpush1.msra.mxu0 0.0
    %2691 = vmatprep.subr.mxu0 0.0
    %2692 = vmatpush1.msra.mxu0 0.0
    %2693 = vmatprep.subr.mxu0 0.0
    %2694 = vmatpush1.msra.mxu0 0.0
    %2695 = vmatprep.subr.mxu0 0.0
    %2696 = vmatpush1.msra.mxu0 0.0
    %2697 = vmatprep.subr.mxu0 0.0
    %2698 = vmatpush1.msra.mxu0 0.0
    %2699 = vmatprep.subr.mxu0 0.0
    %2700 = vmatpush1.msra.mxu0 0.0
    %2701 = vmatprep.subr.mxu0 0.0
    %2702 = vmatpush1.msra.mxu0 0.0
    %2703 = vmatprep.subr.mxu0 0.0
    %2704 = vmatpush1.msra.mxu0 0.0
    %2705 = vmatprep.subr.mxu0 0.0
    %2706 = vmatpush1.msra.mxu0 0.0
    %2707 = vmatprep.subr.mxu0 0.0
    %2708 = vmatpush1.msra.mxu0 0.0
    %2709 = vmatprep.subr.mxu0 0.0
    %2710 = vmatpush1.msra.mxu0 0.0
    %2711 = vmatprep.subr.mxu0 0.0
    %2712 = vmatpush1.msra.mxu0 0.0
    %2713 = vmatprep.mubr.f32.mxu0 0.0
    %2714 = vmatmul.mubr.f32.gmra.mrb[0].mxu0 %v2572
    %v2715 = vpop.f32.mrb[0].mxu0
    %v2716 = vadd.f32 0.0, %v2715
    %v2717 = vpop.f32.mrb[0].mxu0
    %v2718 = vadd.f32 0.0, %v2717
    %2719 = vdwg.mxu0
    %v2722 = vrot.slane %v2716, 4
    %v2723 = vrot.slane %v2718, 4
    %v2726 = vadd.f32 %v2241, %v2722
    %v2727 = vadd.f32 %v2243, %v2723
    %v2728 = vxor.u32 %v2726, 2147483648
    %v2729 = vmul.f32 %v2728, 1.442695
    %v2730 = vpow.pop %v2729
    %v2731 = vadd.f32 %v2730, 1.0
    %v2732 = vrcp.pop %v2731
    %v2733 = vmul.f32 1.0, %v2732
    %v2734 = vtanh.pop %v2727
    %v2735 = vxor.u32 %v2727, 2147483648
    %v2736 = vmul.f32 %v2735, 1.442695
    %v2737 = vpow.pop %v2736
    %v2738 = vadd.f32 %v2737, 1.0
    %v2739 = vrcp.pop %v2738
    %v2740 = vmul.f32 1.0, %v2739
    %v2742 = vrot.slane %v2565, 6
    %v2744 = vmul.f32 %v2733, %v2742
    %v2745 = vmul.f32 %v2733, %v2734
    %2747 = vrot.lane.b32.xlu0 %v2745, 64
    %v2748 = vpop.permute.xlu0 %2747
    %v2750 = vadd.f32 %v2744, %v2748
    %v2751 = vtanh.pop %v2750
    %v2752 = vmul.f32 %v2740, %v2751
    %v2754 = vrot.slane %v2752, 4
    %2755 = vrot.lane.b32.xlu0 %v2754, 64
    %v2756 = vpop.permute.xlu0 %2755
    %v2757 = vsel %vm229, %v2756, 0
    %2759 = vmatprep.subr.mxu0 0.0
    %2760 = vmatpush1.msra.mxu0 %v2267
    %2761 = vmatprep.subr.mxu0 0.0
    %2762 = vmatpush1.msra.mxu0 %v2268
    %2763 = vmatprep.subr.mxu0 0.0
    %2764 = vmatpush1.msra.mxu0 %v2269
    %2765 = vmatprep.subr.mxu0 0.0
    %2766 = vmatpush1.msra.mxu0 %v2270
    %2767 = vmatprep.subr.mxu0 0.0
    %2768 = vmatpush1.msra.mxu0 %v2271
    %2769 = vmatprep.subr.mxu0 0.0
    %2770 = vmatpush1.msra.mxu0 %v2272
    %2771 = vmatprep.subr.mxu0 0.0
    %2772 = vmatpush1.msra.mxu0 %v2273
    %2773 = vmatprep.subr.mxu0 0.0
    %2774 = vmatpush1.msra.mxu0 %v2274
    %2775 = vmatprep.subr.mxu0 0.0
    %2776 = vmatpush1.msra.mxu0 0.0
    %2777 = vmatprep.subr.mxu0 0.0
    %2778 = vmatpush1.msra.mxu0 0.0
    %2779 = vmatprep.subr.mxu0 0.0
    %2780 = vmatpush1.msra.mxu0 0.0
    %2781 = vmatprep.subr.mxu0 0.0
    %2782 = vmatpush1.msra.mxu0 0.0
    %2783 = vmatprep.subr.mxu0 0.0
    %2784 = vmatpush1.msra.mxu0 0.0
    %2785 = vmatprep.subr.mxu0 0.0
    %2786 = vmatpush1.msra.mxu0 0.0
    %2787 = vmatprep.subr.mxu0 0.0
    %2788 = vmatpush1.msra.mxu0 0.0
    %2789 = vmatprep.subr.mxu0 0.0
    %2790 = vmatpush1.msra.mxu0 0.0
    %2791 = vmatprep.subr.mxu0 0.0
    %2792 = vmatpush1.msra.mxu0 0.0
    %2793 = vmatprep.subr.mxu0 0.0
    %2794 = vmatpush1.msra.mxu0 0.0
    %2795 = vmatprep.subr.mxu0 0.0
    %2796 = vmatpush1.msra.mxu0 0.0
    %2797 = vmatprep.subr.mxu0 0.0
    %2798 = vmatpush1.msra.mxu0 0.0
    %2799 = vmatprep.subr.mxu0 0.0
    %2800 = vmatpush1.msra.mxu0 0.0
    %2801 = vmatprep.subr.mxu0 0.0
    %2802 = vmatpush1.msra.mxu0 0.0
    %2803 = vmatprep.subr.mxu0 0.0
    %2804 = vmatpush1.msra.mxu0 0.0
    %2805 = vmatprep.subr.mxu0 0.0
    %2806 = vmatpush1.msra.mxu0 0.0
    %2807 = vmatprep.subr.mxu0 0.0
    %2808 = vmatpush1.msra.mxu0 0.0
    %2809 = vmatprep.subr.mxu0 0.0
    %2810 = vmatpush1.msra.mxu0 0.0
    %2811 = vmatprep.subr.mxu0 0.0
    %2812 = vmatpush1.msra.mxu0 0.0
    %2813 = vmatprep.subr.mxu0 0.0
    %2814 = vmatpush1.msra.mxu0 0.0
    %2815 = vmatprep.subr.mxu0 0.0
    %2816 = vmatpush1.msra.mxu0 0.0
    %2817 = vmatprep.subr.mxu0 0.0
    %2818 = vmatpush1.msra.mxu0 0.0
    %2819 = vmatprep.subr.mxu0 0.0
    %2820 = vmatpush1.msra.mxu0 0.0
    %2821 = vmatprep.subr.mxu0 0.0
    %2822 = vmatpush1.msra.mxu0 0.0
    %2823 = vmatprep.mubr.f32.mxu0 0.0
    %2824 = vmatmul.mubr.f32.gmra.mrb[0].mxu0 %v2757
    %v2825 = vpop.f32.mrb[0].mxu0
    %v2826 = vadd.f32 %v2376, %v2825
    %v2827 = vpop.f32.mrb[0].mxu0
    %2828 = vdwg.mxu0
    %v2829 = vtanh.pop %v2826
    %v2830 = vmul.f32 %v2829, %v2458
    %v2831 = vsel %vm332, %v2830, 0.0
    %2832 = vadd.xlane.f32.xlu0 %v2831
    %v2833 = vpop.xlane.xlu0 %2832
    %2834 = vmatprep.subr.mxu0 %v2252
    %2835 = vmatpush1.msra.mxu0 %v2251
    %2836 = vmatprep.subr.mxu0 %v2254
    %2837 = vmatpush1.msra.mxu0 %v2253
    %2838 = vmatprep.subr.mxu0 %v2256
    %2839 = vmatpush1.msra.mxu0 %v2255
    %2840 = vmatprep.subr.mxu0 %v2258
    %2841 = vmatpush1.msra.mxu0 %v2257
    %2842 = vmatprep.subr.mxu0 %v2260
    %2843 = vmatpush1.msra.mxu0 %v2259
    %2844 = vmatprep.subr.mxu0 %v2262
    %2845 = vmatpush1.msra.mxu0 %v2261
    %2846 = vmatprep.subr.mxu0 %v2264
    %2847 = vmatpush1.msra.mxu0 %v2263
    %2848 = vmatprep.subr.mxu0 %v2266
    %2849 = vmatpush1.msra.mxu0 %v2265
    %2850 = vmatprep.subr.mxu0 0.0
    %2851 = vmatpush1.msra.mxu0 0.0
    %2852 = vmatprep.subr.mxu0 0.0
    %2853 = vmatpush1.msra.mxu0 0.0
    %2854 = vmatprep.subr.mxu0 0.0
    %2855 = vmatpush1.msra.mxu0 0.0
    %2856 = vmatprep.subr.mxu0 0.0
    %2857 = vmatpush1.msra.mxu0 0.0
    %2858 = vmatprep.subr.mxu0 0.0
    %2859 = vmatpush1.msra.mxu0 0.0
    %2860 = vmatprep.subr.mxu0 0.0
    %2861 = vmatpush1.msra.mxu0 0.0
    %2862 = vmatprep.subr.mxu0 0.0
    %2863 = vmatpush1.msra.mxu0 0.0
    %2864 = vmatprep.subr.mxu0 0.0
    %2865 = vmatpush1.msra.mxu0 0.0
    %2866 = vmatprep.subr.mxu0 0.0
    %2867 = vmatpush1.msra.mxu0 0.0
    %2868 = vmatprep.subr.mxu0 0.0
    %2869 = vmatpush1.msra.mxu0 0.0
    %2870 = vmatprep.subr.mxu0 0.0
    %2871 = vmatpush1.msra.mxu0 0.0
    %2872 = vmatprep.subr.mxu0 0.0
    %2873 = vmatpush1.msra.mxu0 0.0
    %2874 = vmatprep.subr.mxu0 0.0
    %2875 = vmatpush1.msra.mxu0 0.0
    %2876 = vmatprep.subr.mxu0 0.0
    %2877 = vmatpush1.msra.mxu0 0.0
    %2878 = vmatprep.subr.mxu0 0.0
    %2879 = vmatpush1.msra.mxu0 0.0
    %2880 = vmatprep.subr.mxu0 0.0
    %2881 = vmatpush1.msra.mxu0 0.0
    %2882 = vmatprep.subr.mxu0 0.0
    %2883 = vmatpush1.msra.mxu0 0.0
    %2884 = vmatprep.subr.mxu0 0.0
    %2885 = vmatpush1.msra.mxu0 0.0
    %2886 = vmatprep.subr.mxu0 0.0
    %2887 = vmatpush1.msra.mxu0 0.0
    %2888 = vmatprep.subr.mxu0 0.0
    %2889 = vmatpush1.msra.mxu0 0.0
    %2890 = vmatprep.subr.mxu0 0.0
    %2891 = vmatpush1.msra.mxu0 0.0
    %2892 = vmatprep.subr.mxu0 0.0
    %2893 = vmatpush1.msra.mxu0 0.0
    %2894 = vmatprep.subr.mxu0 0.0
    %2895 = vmatpush1.msra.mxu0 0.0
    %2896 = vmatprep.subr.mxu0 0.0
    %2897 = vmatpush1.msra.mxu0 0.0
    %2898 = vmatprep.mubr.f32.mxu0 0.0
    %2899 = vmatmul.mubr.f32.gmra.mrb[0].mxu0 %v2757
    %v2900 = vpop.f32.mrb[0].mxu0
    %v2901 = vadd.f32 0.0, %v2900
    %v2902 = vpop.f32.mrb[0].mxu0
    %v2903 = vadd.f32 0.0, %v2902
    %2904 = vdwg.mxu0
    %v2907 = vrot.slane %v2901, 2
    %v2908 = vrot.slane %v2903, 2
    %v2911 = vadd.f32 %v2241, %v2907
    %v2912 = vadd.f32 %v2243, %v2908
    %v2913 = vxor.u32 %v2911, 2147483648
    %v2914 = vmul.f32 %v2913, 1.442695
    %v2915 = vpow.pop %v2914
    %v2916 = vadd.f32 %v2915, 1.0
    %v2917 = vrcp.pop %v2916
    %v2918 = vmul.f32 1.0, %v2917
    %v2919 = vtanh.pop %v2912
    %v2920 = vxor.u32 %v2912, 2147483648
    %v2921 = vmul.f32 %v2920, 1.442695
    %v2922 = vpow.pop %v2921
    %v2923 = vadd.f32 %v2922, 1.0
    %v2924 = vrcp.pop %v2923
    %v2925 = vmul.f32 1.0, %v2924
    %v2927 = vrot.slane %v2750, 6
    %v2929 = vmul.f32 %v2918, %v2927
    %v2930 = vmul.f32 %v2918, %v2919
    %2932 = vrot.lane.b32.xlu0 %v2930, 64
    %v2933 = vpop.permute.xlu0 %2932
    %v2935 = vadd.f32 %v2929, %v2933
    %v2936 = vtanh.pop %v2935
    %v2937 = vmul.f32 %v2925, %v2936
    %v2939 = vrot.slane %v2937, 6
    %2940 = vrot.lane.b32.xlu0 %v2939, 64
    %v2941 = vpop.permute.xlu0 %2940
    %v2942 = vsel %vm229, %v2941, 0
    %2944 = vmatprep.subr.mxu0 0.0
    %2945 = vmatpush1.msra.mxu0 %v2267
    %2946 = vmatprep.subr.mxu0 0.0
    %2947 = vmatpush1.msra.mxu0 %v2268
    %2948 = vmatprep.subr.mxu0 0.0
    %2949 = vmatpush1.msra.mxu0 %v2269
    %2950 = vmatprep.subr.mxu0 0.0
    %2951 = vmatpush1.msra.mxu0 %v2270
    %2952 = vmatprep.subr.mxu0 0.0
    %2953 = vmatpush1.msra.mxu0 %v2271
    %2954 = vmatprep.subr.mxu0 0.0
    %2955 = vmatpush1.msra.mxu0 %v2272
    %2956 = vmatprep.subr.mxu0 0.0
    %2957 = vmatpush1.msra.mxu0 %v2273
    %2958 = vmatprep.subr.mxu0 0.0
    %2959 = vmatpush1.msra.mxu0 %v2274
    %2960 = vmatprep.subr.mxu0 0.0
    %2961 = vmatpush1.msra.mxu0 0.0
    %2962 = vmatprep.subr.mxu0 0.0
    %2963 = vmatpush1.msra.mxu0 0.0
    %2964 = vmatprep.subr.mxu0 0.0
    %2965 = vmatpush1.msra.mxu0 0.0
    %2966 = vmatprep.subr.mxu0 0.0
    %2967 = vmatpush1.msra.mxu0 0.0
    %2968 = vmatprep.subr.mxu0 0.0
    %2969 = vmatpush1.msra.mxu0 0.0
    %2970 = vmatprep.subr.mxu0 0.0
    %2971 = vmatpush1.msra.mxu0 0.0
    %2972 = vmatprep.subr.mxu0 0.0
    %2973 = vmatpush1.msra.mxu0 0.0
    %2974 = vmatprep.subr.mxu0 0.0
    %2975 = vmatpush1.msra.mxu0 0.0
    %2976 = vmatprep.subr.mxu0 0.0
    %2977 = vmatpush1.msra.mxu0 0.0
    %2978 = vmatprep.subr.mxu0 0.0
    %2979 = vmatpush1.msra.mxu0 0.0
    %2980 = vmatprep.subr.mxu0 0.0
    %2981 = vmatpush1.msra.mxu0 0.0
    %2982 = vmatprep.subr.mxu0 0.0
    %2983 = vmatpush1.msra.mxu0 0.0
    %2984 = vmatprep.subr.mxu0 0.0
    %2985 = vmatpush1.msra.mxu0 0.0
    %2986 = vmatprep.subr.mxu0 0.0
    %2987 = vmatpush1.msra.mxu0 0.0
    %2988 = vmatprep.subr.mxu0 0.0
    %2989 = vmatpush1.msra.mxu0 0.0
    %2990 = vmatprep.subr.mxu0 0.0
    %2991 = vmatpush1.msra.mxu0 0.0
    %2992 = vmatprep.subr.mxu0 0.0
    %2993 = vmatpush1.msra.mxu0 0.0
    %2994 = vmatprep.subr.mxu0 0.0
    %2995 = vmatpush1.msra.mxu0 0.0
    %2996 = vmatprep.subr.mxu0 0.0
    %2997 = vmatpush1.msra.mxu0 0.0
    %2998 = vmatprep.subr.mxu0 0.0
    %2999 = vmatpush1.msra.mxu0 0.0
    %3000 = vmatprep.subr.mxu0 0.0
    %3001 = vmatpush1.msra.mxu0 0.0
    %3002 = vmatprep.subr.mxu0 0.0
    %3003 = vmatpush1.msra.mxu0 0.0
    %3004 = vmatprep.subr.mxu0 0.0
    %3005 = vmatpush1.msra.mxu0 0.0
    %3006 = vmatprep.subr.mxu0 0.0
    %3007 = vmatpush1.msra.mxu0 0.0
    %3008 = vmatprep.mubr.f32.mxu0 0.0
    %3009 = vmatmul.mubr.f32.gmra.mrb[0].mxu0 %v2942
    %v3010 = vpop.f32.mrb[0].mxu0
    %v3011 = vadd.f32 %v2376, %v3010
    %v3012 = vpop.f32.mrb[0].mxu0
    %3013 = vdwg.mxu0
    %v3014 = vtanh.pop %v3011
    %v3015 = vmul.f32 %v3014, %v2458
    %v3016 = vsel %vm332, %v3015, 0.0
    %3017 = vadd.xlane.f32.xlu0 %v3016
    %v3018 = vpop.xlane.xlu0 %3017
    %3019 = vmatprep.subr.mxu0 %v2252
    %3020 = vmatpush1.msra.mxu0 %v2251
    %3021 = vmatprep.subr.mxu0 %v2254
    %3022 = vmatpush1.msra.mxu0 %v2253
    %3023 = vmatprep.subr.mxu0 %v2256
    %3024 = vmatpush1.msra.mxu0 %v2255
    %3025 = vmatprep.subr.mxu0 %v2258
    %3026 = vmatpush1.msra.mxu0 %v2257
    %3027 = vmatprep.subr.mxu0 %v2260
    %3028 = vmatpush1.msra.mxu0 %v2259
    %3029 = vmatprep.subr.mxu0 %v2262
    %3030 = vmatpush1.msra.mxu0 %v2261
    %3031 = vmatprep.subr.mxu0 %v2264
    %3032 = vmatpush1.msra.mxu0 %v2263
    %3033 = vmatprep.subr.mxu0 %v2266
    %3034 = vmatpush1.msra.mxu0 %v2265
    %3035 = vmatprep.subr.mxu0 0.0
    %3036 = vmatpush1.msra.mxu0 0.0
    %3037 = vmatprep.subr.mxu0 0.0
    %3038 = vmatpush1.msra.mxu0 0.0
    %3039 = vmatprep.subr.mxu0 0.0
    %3040 = vmatpush1.msra.mxu0 0.0
    %3041 = vmatprep.subr.mxu0 0.0
    %3042 = vmatpush1.msra.mxu0 0.0
    %3043 = vmatprep.subr.mxu0 0.0
    %3044 = vmatpush1.msra.mxu0 0.0
    %3045 = vmatprep.subr.mxu0 0.0
    %3046 = vmatpush1.msra.mxu0 0.0
    %3047 = vmatprep.subr.mxu0 0.0
    %3048 = vmatpush1.msra.mxu0 0.0
    %3049 = vmatprep.subr.mxu0 0.0
    %3050 = vmatpush1.msra.mxu0 0.0
    %3051 = vmatprep.subr.mxu0 0.0
    %3052 = vmatpush1.msra.mxu0 0.0
    %3053 = vmatprep.subr.mxu0 0.0
    %3054 = vmatpush1.msra.mxu0 0.0
    %3055 = vmatprep.subr.mxu0 0.0
    %3056 = vmatpush1.msra.mxu0 0.0
    %3057 = vmatprep.subr.mxu0 0.0
    %3058 = vmatpush1.msra.mxu0 0.0
    %3059 = vmatprep.subr.mxu0 0.0
    %3060 = vmatpush1.msra.mxu0 0.0
    %3061 = vmatprep.subr.mxu0 0.0
    %3062 = vmatpush1.msra.mxu0 0.0
    %3063 = vmatprep.subr.mxu0 0.0
    %3064 = vmatpush1.msra.mxu0 0.0
    %3065 = vmatprep.subr.mxu0 0.0
    %3066 = vmatpush1.msra.mxu0 0.0
    %3067 = vmatprep.subr.mxu0 0.0
    %3068 = vmatpush1.msra.mxu0 0.0
    %3069 = vmatprep.subr.mxu0 0.0
    %3070 = vmatpush1.msra.mxu0 0.0
    %3071 = vmatprep.subr.mxu0 0.0
    %3072 = vmatpush1.msra.mxu0 0.0
    %3073 = vmatprep.subr.mxu0 0.0
    %3074 = vmatpush1.msra.mxu0 0.0
    %3075 = vmatprep.subr.mxu0 0.0
    %3076 = vmatpush1.msra.mxu0 0.0
    %3077 = vmatprep.subr.mxu0 0.0
    %3078 = vmatpush1.msra.mxu0 0.0
    %3079 = vmatprep.subr.mxu0 0.0
    %3080 = vmatpush1.msra.mxu0 0.0
    %3081 = vmatprep.subr.mxu0 0.0
    %3082 = vmatpush1.msra.mxu0 0.0
    %3083 = vmatprep.mubr.f32.mxu0 0.0
    %3084 = vmatmul.mubr.f32.gmra.mrb[0].mxu0 %v2942
    %v3085 = vpop.f32.mrb[0].mxu0
    %v3086 = vadd.f32 0.0, %v3085
    %v3087 = vpop.f32.mrb[0].mxu0
    %v3088 = vadd.f32 0.0, %v3087
    %3089 = vdwg.mxu0
    %v3090 = vadd.f32 %v2247, %v3086
    %v3091 = vadd.f32 %v2249, %v3088
    %v3092 = vxor.u32 %v3090, 2147483648
    %v3093 = vmul.f32 %v3092, 1.442695
    %v3094 = vpow.pop %v3093
    %v3095 = vadd.f32 %v3094, 1.0
    %v3096 = vrcp.pop %v3095
    %v3097 = vmul.f32 1.0, %v3096
    %v3098 = vtanh.pop %v3091
    %v3099 = vxor.u32 %v3091, 2147483648
    %v3100 = vmul.f32 %v3099, 1.442695
    %v3101 = vpow.pop %v3100
    %v3102 = vadd.f32 %v3101, 1.0
    %v3103 = vrcp.pop %v3102
    %v3104 = vmul.f32 1.0, %v3103
    %v3106 = vrot.slane %v2935, 6
    %v3108 = vmul.f32 %v3097, %v3106
    %v3109 = vmul.f32 %v3097, %v3098
    %3111 = vrot.lane.b32.xlu0 %v3109, 64
    %v3112 = vpop.permute.xlu0 %3111
    %v3114 = vadd.f32 %v3108, %v3112
    %v3115 = vtanh.pop %v3114
    %v3116 = vmul.f32 %v3104, %v3115
    %3118 = vrot.lane.b32.xlu0 %v3116, 64
    %v3119 = vpop.permute.xlu0 %3118
    %v3120 = vsel %vm229, %v3119, 0
    %3122 = vmatprep.subr.mxu0 0.0
    %3123 = vmatpush1.msra.mxu0 %v2267
    %3124 = vmatprep.subr.mxu0 0.0
    %3125 = vmatpush1.msra.mxu0 %v2268
    %3126 = vmatprep.subr.mxu0 0.0
    %3127 = vmatpush1.msra.mxu0 %v2269
    %3128 = vmatprep.subr.mxu0 0.0
    %3129 = vmatpush1.msra.mxu0 %v2270
    %3130 = vmatprep.subr.mxu0 0.0
    %3131 = vmatpush1.msra.mxu0 %v2271
    %3132 = vmatprep.subr.mxu0 0.0
    %3133 = vmatpush1.msra.mxu0 %v2272
    %3134 = vmatprep.subr.mxu0 0.0
    %3135 = vmatpush1.msra.mxu0 %v2273
    %3136 = vmatprep.subr.mxu0 0.0
    %3137 = vmatpush1.msra.mxu0 %v2274
    %3138 = vmatprep.subr.mxu0 0.0
    %3139 = vmatpush1.msra.mxu0 0.0
    %3140 = vmatprep.subr.mxu0 0.0
    %3141 = vmatpush1.msra.mxu0 0.0
    %3142 = vmatprep.subr.mxu0 0.0
    %3143 = vmatpush1.msra.mxu0 0.0
    %3144 = vmatprep.subr.mxu0 0.0
    %3145 = vmatpush1.msra.mxu0 0.0
    %3146 = vmatprep.subr.mxu0 0.0
    %3147 = vmatpush1.msra.mxu0 0.0
    %3148 = vmatprep.subr.mxu0 0.0
    %3149 = vmatpush1.msra.mxu0 0.0
    %3150 = vmatprep.subr.mxu0 0.0
    %3151 = vmatpush1.msra.mxu0 0.0
    %3152 = vmatprep.subr.mxu0 0.0
    %3153 = vmatpush1.msra.mxu0 0.0
    %3154 = vmatprep.subr.mxu0 0.0
    %3155 = vmatpush1.msra.mxu0 0.0
    %3156 = vmatprep.subr.mxu0 0.0
    %3157 = vmatpush1.msra.mxu0 0.0
    %3158 = vmatprep.subr.mxu0 0.0
    %3159 = vmatpush1.msra.mxu0 0.0
    %3160 = vmatprep.subr.mxu0 0.0
    %3161 = vmatpush1.msra.mxu0 0.0
    %3162 = vmatprep.subr.mxu0 0.0
    %3163 = vmatpush1.msra.mxu0 0.0
    %3164 = vmatprep.subr.mxu0 0.0
    %3165 = vmatpush1.msra.mxu0 0.0
    %3166 = vmatprep.subr.mxu0 0.0
    %3167 = vmatpush1.msra.mxu0 0.0
    %3168 = vmatprep.subr.mxu0 0.0
    %3169 = vmatpush1.msra.mxu0 0.0
    %3170 = vmatprep.subr.mxu0 0.0
    %3171 = vmatpush1.msra.mxu0 0.0
    %3172 = vmatprep.subr.mxu0 0.0
    %3173 = vmatpush1.msra.mxu0 0.0
    %3174 = vmatprep.subr.mxu0 0.0
    %3175 = vmatpush1.msra.mxu0 0.0
    %3176 = vmatprep.subr.mxu0 0.0
    %3177 = vmatpush1.msra.mxu0 0.0
    %3178 = vmatprep.subr.mxu0 0.0
    %3179 = vmatpush1.msra.mxu0 0.0
    %3180 = vmatprep.subr.mxu0 0.0
    %3181 = vmatpush1.msra.mxu0 0.0
    %3182 = vmatprep.subr.mxu0 0.0
    %3183 = vmatpush1.msra.mxu0 0.0
    %3184 = vmatprep.subr.mxu0 0.0
    %3185 = vmatpush1.msra.mxu0 0.0
    %3186 = vmatprep.mubr.f32.mxu0 0.0
    %3187 = vmatmul.mubr.f32.gmra.mrb[0].mxu0 %v3120
    %v3188 = vpop.f32.mrb[0].mxu0
    %v3189 = vadd.f32 %v2376, %v3188
    %v3190 = vpop.f32.mrb[0].mxu0
    %3191 = vdwg.mxu0
    %v3192 = vtanh.pop %v3189
    %v3193 = vmul.f32 %v3192, %v2458
    %v3194 = vsel %vm332, %v3193, 0.0
    %3195 = vadd.xlane.f32.xlu0 %v3194
    %v3196 = vpop.xlane.xlu0 %3195
    %3197 = vmatprep.subr.mxu0 %v2252
    %3198 = vmatpush1.msra.mxu0 %v2251
    %3199 = vmatprep.subr.mxu0 %v2254
    %3200 = vmatpush1.msra.mxu0 %v2253
    %3201 = vmatprep.subr.mxu0 %v2256
    %3202 = vmatpush1.msra.mxu0 %v2255
    %3203 = vmatprep.subr.mxu0 %v2258
    %3204 = vmatpush1.msra.mxu0 %v2257
    %3205 = vmatprep.subr.mxu0 %v2260
    %3206 = vmatpush1.msra.mxu0 %v2259
    %3207 = vmatprep.subr.mxu0 %v2262
    %3208 = vmatpush1.msra.mxu0 %v2261
    %3209 = vmatprep.subr.mxu0 %v2264
    %3210 = vmatpush1.msra.mxu0 %v2263
    %3211 = vmatprep.subr.mxu0 %v2266
    %3212 = vmatpush1.msra.mxu0 %v2265
    %3213 = vmatprep.subr.mxu0 0.0
    %3214 = vmatpush1.msra.mxu0 0.0
    %3215 = vmatprep.subr.mxu0 0.0
    %3216 = vmatpush1.msra.mxu0 0.0
    %3217 = vmatprep.subr.mxu0 0.0
    %3218 = vmatpush1.msra.mxu0 0.0
    %3219 = vmatprep.subr.mxu0 0.0
    %3220 = vmatpush1.msra.mxu0 0.0
    %3221 = vmatprep.subr.mxu0 0.0
    %3222 = vmatpush1.msra.mxu0 0.0
    %3223 = vmatprep.subr.mxu0 0.0
    %3224 = vmatpush1.msra.mxu0 0.0
    %3225 = vmatprep.subr.mxu0 0.0
    %3226 = vmatpush1.msra.mxu0 0.0
    %3227 = vmatprep.subr.mxu0 0.0
    %3228 = vmatpush1.msra.mxu0 0.0
    %3229 = vmatprep.subr.mxu0 0.0
    %3230 = vmatpush1.msra.mxu0 0.0
    %3231 = vmatprep.subr.mxu0 0.0
    %3232 = vmatpush1.msra.mxu0 0.0
    %3233 = vmatprep.subr.mxu0 0.0
    %3234 = vmatpush1.msra.mxu0 0.0
    %3235 = vmatprep.subr.mxu0 0.0
    %3236 = vmatpush1.msra.mxu0 0.0
    %3237 = vmatprep.subr.mxu0 0.0
    %3238 = vmatpush1.msra.mxu0 0.0
    %3239 = vmatprep.subr.mxu0 0.0
    %3240 = vmatpush1.msra.mxu0 0.0
    %3241 = vmatprep.subr.mxu0 0.0
    %3242 = vmatpush1.msra.mxu0 0.0
    %3243 = vmatprep.subr.mxu0 0.0
    %3244 = vmatpush1.msra.mxu0 0.0
    %3245 = vmatprep.subr.mxu0 0.0
    %3246 = vmatpush1.msra.mxu0 0.0
    %3247 = vmatprep.subr.mxu0 0.0
    %3248 = vmatpush1.msra.mxu0 0.0
    %3249 = vmatprep.subr.mxu0 0.0
    %3250 = vmatpush1.msra.mxu0 0.0
    %3251 = vmatprep.subr.mxu0 0.0
    %3252 = vmatpush1.msra.mxu0 0.0
    %3253 = vmatprep.subr.mxu0 0.0
    %3254 = vmatpush1.msra.mxu0 0.0
    %3255 = vmatprep.subr.mxu0 0.0
    %3256 = vmatpush1.msra.mxu0 0.0
    %3257 = vmatprep.subr.mxu0 0.0
    %3258 = vmatpush1.msra.mxu0 0.0
    %3259 = vmatprep.subr.mxu0 0.0
    %3260 = vmatpush1.msra.mxu0 0.0
    %3261 = vmatprep.mubr.f32.mxu0 0.0
    %3262 = vmatmul.mubr.f32.gmra.mrb[0].mxu0 %v3120
    %v3263 = vpop.f32.mrb[0].mxu0
    %v3264 = vadd.f32 0.0, %v3263
    %v3265 = vpop.f32.mrb[0].mxu0
    %v3266 = vadd.f32 0.0, %v3265
    %3267 = vdwg.mxu0
    %v3270 = vrot.slane %v3264, 6
    %v3271 = vrot.slane %v3266, 6
    %v3274 = vadd.f32 %v2247, %v3270
    %v3275 = vadd.f32 %v2249, %v3271
    %v3276 = vxor.u32 %v3274, 2147483648
    %v3277 = vmul.f32 %v3276, 1.442695
    %v3278 = vpow.pop %v3277
    %v3279 = vadd.f32 %v3278, 1.0
    %v3280 = vrcp.pop %v3279
    %v3281 = vmul.f32 1.0, %v3280
    %v3282 = vtanh.pop %v3275
    %v3283 = vxor.u32 %v3275, 2147483648
    %v3284 = vmul.f32 %v3283, 1.442695
    %v3285 = vpow.pop %v3284
    %v3286 = vadd.f32 %v3285, 1.0
    %v3287 = vrcp.pop %v3286
    %v3288 = vmul.f32 1.0, %v3287
    %v3290 = vrot.slane %v3114, 6
    %v3292 = vmul.f32 %v3281, %v3290
    %v3293 = vmul.f32 %v3281, %v3282
    %3295 = vrot.lane.b32.xlu0 %v3293, 64
    %v3296 = vpop.permute.xlu0 %3295
    %v3298 = vadd.f32 %v3292, %v3296
    %v3299 = vtanh.pop %v3298
    %v3300 = vmul.f32 %v3288, %v3299
    %v3302 = vrot.slane %v3300, 2
    %3303 = vrot.lane.b32.xlu0 %v3302, 64
    %v3304 = vpop.permute.xlu0 %3303
    %v3305 = vsel %vm229, %v3304, 0
    %3307 = vmatprep.subr.mxu0 0.0
    %3308 = vmatpush1.msra.mxu0 %v2267
    %3309 = vmatprep.subr.mxu0 0.0
    %3310 = vmatpush1.msra.mxu0 %v2268
    %3311 = vmatprep.subr.mxu0 0.0
    %3312 = vmatpush1.msra.mxu0 %v2269
    %3313 = vmatprep.subr.mxu0 0.0
    %3314 = vmatpush1.msra.mxu0 %v2270
    %3315 = vmatprep.subr.mxu0 0.0
    %3316 = vmatpush1.msra.mxu0 %v2271
    %3317 = vmatprep.subr.mxu0 0.0
    %3318 = vmatpush1.msra.mxu0 %v2272
    %3319 = vmatprep.subr.mxu0 0.0
    %3320 = vmatpush1.msra.mxu0 %v2273
    %3321 = vmatprep.subr.mxu0 0.0
    %3322 = vmatpush1.msra.mxu0 %v2274
    %3323 = vmatprep.subr.mxu0 0.0
    %3324 = vmatpush1.msra.mxu0 0.0
    %3325 = vmatprep.subr.mxu0 0.0
    %3326 = vmatpush1.msra.mxu0 0.0
    %3327 = vmatprep.subr.mxu0 0.0
    %3328 = vmatpush1.msra.mxu0 0.0
    %3329 = vmatprep.subr.mxu0 0.0
    %3330 = vmatpush1.msra.mxu0 0.0
    %3331 = vmatprep.subr.mxu0 0.0
    %3332 = vmatpush1.msra.mxu0 0.0
    %3333 = vmatprep.subr.mxu0 0.0
    %3334 = vmatpush1.msra.mxu0 0.0
    %3335 = vmatprep.subr.mxu0 0.0
    %3336 = vmatpush1.msra.mxu0 0.0
    %3337 = vmatprep.subr.mxu0 0.0
    %3338 = vmatpush1.msra.mxu0 0.0
    %3339 = vmatprep.subr.mxu0 0.0
    %3340 = vmatpush1.msra.mxu0 0.0
    %3341 = vmatprep.subr.mxu0 0.0
    %3342 = vmatpush1.msra.mxu0 0.0
    %3343 = vmatprep.subr.mxu0 0.0
    %3344 = vmatpush1.msra.mxu0 0.0
    %3345 = vmatprep.subr.mxu0 0.0
    %3346 = vmatpush1.msra.mxu0 0.0
    %3347 = vmatprep.subr.mxu0 0.0
    %3348 = vmatpush1.msra.mxu0 0.0
    %3349 = vmatprep.subr.mxu0 0.0
    %3350 = vmatpush1.msra.mxu0 0.0
    %3351 = vmatprep.subr.mxu0 0.0
    %3352 = vmatpush1.msra.mxu0 0.0
    %3353 = vmatprep.subr.mxu0 0.0
    %3354 = vmatpush1.msra.mxu0 0.0
    %3355 = vmatprep.subr.mxu0 0.0
    %3356 = vmatpush1.msra.mxu0 0.0
    %3357 = vmatprep.subr.mxu0 0.0
    %3358 = vmatpush1.msra.mxu0 0.0
    %3359 = vmatprep.subr.mxu0 0.0
    %3360 = vmatpush1.msra.mxu0 0.0
    %3361 = vmatprep.subr.mxu0 0.0
    %3362 = vmatpush1.msra.mxu0 0.0
    %3363 = vmatprep.subr.mxu0 0.0
    %3364 = vmatpush1.msra.mxu0 0.0
    %3365 = vmatprep.subr.mxu0 0.0
    %3366 = vmatpush1.msra.mxu0 0.0
    %3367 = vmatprep.subr.mxu0 0.0
    %3368 = vmatpush1.msra.mxu0 0.0
    %3369 = vmatprep.subr.mxu0 0.0
    %3370 = vmatpush1.msra.mxu0 0.0
    %3371 = vmatprep.mubr.f32.mxu0 0.0
    %3372 = vmatmul.mubr.f32.gmra.mrb[0].mxu0 %v3305
    %v3373 = vpop.f32.mrb[0].mxu0
    %v3374 = vadd.f32 %v2376, %v3373
    %v3375 = vpop.f32.mrb[0].mxu0
    %3376 = vdwg.mxu0
    %v3377 = vtanh.pop %v3374
    %v3378 = vmul.f32 %v3377, %v2458
    %v3379 = vsel %vm332, %v3378, 0.0
    %3380 = vadd.xlane.f32.xlu0 %v3379
    %v3381 = vpop.xlane.xlu0 %3380
    %3382 = vmatprep.subr.mxu0 %v2252
    %3383 = vmatpush1.msra.mxu0 %v2251
    %3384 = vmatprep.subr.mxu0 %v2254
    %3385 = vmatpush1.msra.mxu0 %v2253
    %3386 = vmatprep.subr.mxu0 %v2256
    %3387 = vmatpush1.msra.mxu0 %v2255
    %3388 = vmatprep.subr.mxu0 %v2258
    %3389 = vmatpush1.msra.mxu0 %v2257
    %3390 = vmatprep.subr.mxu0 %v2260
    %3391 = vmatpush1.msra.mxu0 %v2259
    %3392 = vmatprep.subr.mxu0 %v2262
    %3393 = vmatpush1.msra.mxu0 %v2261
    %3394 = vmatprep.subr.mxu0 %v2264
    %3395 = vmatpush1.msra.mxu0 %v2263
    %3396 = vmatprep.subr.mxu0 %v2266
    %3397 = vmatpush1.msra.mxu0 %v2265
    %3398 = vmatprep.subr.mxu0 0.0
    %3399 = vmatpush1.msra.mxu0 0.0
    %3400 = vmatprep.subr.mxu0 0.0
    %3401 = vmatpush1.msra.mxu0 0.0
    %3402 = vmatprep.subr.mxu0 0.0
    %3403 = vmatpush1.msra.mxu0 0.0
    %3404 = vmatprep.subr.mxu0 0.0
    %3405 = vmatpush1.msra.mxu0 0.0
    %3406 = vmatprep.subr.mxu0 0.0
    %3407 = vmatpush1.msra.mxu0 0.0
    %3408 = vmatprep.subr.mxu0 0.0
    %3409 = vmatpush1.msra.mxu0 0.0
    %3410 = vmatprep.subr.mxu0 0.0
    %3411 = vmatpush1.msra.mxu0 0.0
    %3412 = vmatprep.subr.mxu0 0.0
    %3413 = vmatpush1.msra.mxu0 0.0
    %3414 = vmatprep.subr.mxu0 0.0
    %3415 = vmatpush1.msra.mxu0 0.0
    %3416 = vmatprep.subr.mxu0 0.0
    %3417 = vmatpush1.msra.mxu0 0.0
    %3418 = vmatprep.subr.mxu0 0.0
    %3419 = vmatpush1.msra.mxu0 0.0
    %3420 = vmatprep.subr.mxu0 0.0
    %3421 = vmatpush1.msra.mxu0 0.0
    %3422 = vmatprep.subr.mxu0 0.0
    %3423 = vmatpush1.msra.mxu0 0.0
    %3424 = vmatprep.subr.mxu0 0.0
    %3425 = vmatpush1.msra.mxu0 0.0
    %3426 = vmatprep.subr.mxu0 0.0
    %3427 = vmatpush1.msra.mxu0 0.0
    %3428 = vmatprep.subr.mxu0 0.0
    %3429 = vmatpush1.msra.mxu0 0.0
    %3430 = vmatprep.subr.mxu0 0.0
    %3431 = vmatpush1.msra.mxu0 0.0
    %3432 = vmatprep.subr.mxu0 0.0
    %3433 = vmatpush1.msra.mxu0 0.0
    %3434 = vmatprep.subr.mxu0 0.0
    %3435 = vmatpush1.msra.mxu0 0.0
    %3436 = vmatprep.subr.mxu0 0.0
    %3437 = vmatpush1.msra.mxu0 0.0
    %3438 = vmatprep.subr.mxu0 0.0
    %3439 = vmatpush1.msra.mxu0 0.0
    %3440 = vmatprep.subr.mxu0 0.0
    %3441 = vmatpush1.msra.mxu0 0.0
    %3442 = vmatprep.subr.mxu0 0.0
    %3443 = vmatpush1.msra.mxu0 0.0
    %3444 = vmatprep.subr.mxu0 0.0
    %3445 = vmatpush1.msra.mxu0 0.0
    %3446 = vmatprep.mubr.f32.mxu0 0.0
    %3447 = vmatmul.mubr.f32.gmra.mrb[0].mxu0 %v3305
    %v3448 = vpop.f32.mrb[0].mxu0
    %v3449 = vadd.f32 0.0, %v3448
    %v3450 = vpop.f32.mrb[0].mxu0
    %v3451 = vadd.f32 0.0, %v3450
    %3452 = vdwg.mxu0
    %v3455 = vrot.slane %v3449, 4
    %v3456 = vrot.slane %v3451, 4
    %v3459 = vadd.f32 %v2247, %v3455
    %v3460 = vadd.f32 %v2249, %v3456
    %v3461 = vxor.u32 %v3459, 2147483648
    %v3462 = vmul.f32 %v3461, 1.442695
    %v3463 = vpow.pop %v3462
    %v3464 = vadd.f32 %v3463, 1.0
    %v3465 = vrcp.pop %v3464
    %v3466 = vmul.f32 1.0, %v3465
    %v3467 = vtanh.pop %v3460
    %v3468 = vxor.u32 %v3460, 2147483648
    %v3469 = vmul.f32 %v3468, 1.442695
    %v3470 = vpow.pop %v3469
    %v3471 = vadd.f32 %v3470, 1.0
    %v3472 = vrcp.pop %v3471
    %v3473 = vmul.f32 1.0, %v3472
    %v3475 = vrot.slane %v3298, 6
    %v3477 = vmul.f32 %v3466, %v3475
    %v3478 = vmul.f32 %v3466, %v3467
    %3480 = vrot.lane.b32.xlu0 %v3478, 64
    %v3481 = vpop.permute.xlu0 %3480
    %v3483 = vadd.f32 %v3477, %v3481
    %v3484 = vtanh.pop %v3483
    %v3485 = vmul.f32 %v3473, %v3484
    %v3487 = vrot.slane %v3485, 4
    %3488 = vrot.lane.b32.xlu0 %v3487, 64
    %v3489 = vpop.permute.xlu0 %3488
    %v3490 = vsel %vm229, %v3489, 0
    %3492 = vmatprep.subr.mxu0 0.0
    %3493 = vmatpush1.msra.mxu0 %v2267
    %3494 = vmatprep.subr.mxu0 0.0
    %3495 = vmatpush1.msra.mxu0 %v2268
    %3496 = vmatprep.subr.mxu0 0.0
    %3497 = vmatpush1.msra.mxu0 %v2269
    %3498 = vmatprep.subr.mxu0 0.0
    %3499 = vmatpush1.msra.mxu0 %v2270
    %3500 = vmatprep.subr.mxu0 0.0
    %3501 = vmatpush1.msra.mxu0 %v2271
    %3502 = vmatprep.subr.mxu0 0.0
    %3503 = vmatpush1.msra.mxu0 %v2272
    %3504 = vmatprep.subr.mxu0 0.0
    %3505 = vmatpush1.msra.mxu0 %v2273
    %3506 = vmatprep.subr.mxu0 0.0
    %3507 = vmatpush1.msra.mxu0 %v2274
    %3508 = vmatprep.subr.mxu0 0.0
    %3509 = vmatpush1.msra.mxu0 0.0
    %3510 = vmatprep.subr.mxu0 0.0
    %3511 = vmatpush1.msra.mxu0 0.0
    %3512 = vmatprep.subr.mxu0 0.0
    %3513 = vmatpush1.msra.mxu0 0.0
    %3514 = vmatprep.subr.mxu0 0.0
    %3515 = vmatpush1.msra.mxu0 0.0
    %3516 = vmatprep.subr.mxu0 0.0
    %3517 = vmatpush1.msra.mxu0 0.0
    %3518 = vmatprep.subr.mxu0 0.0
    %3519 = vmatpush1.msra.mxu0 0.0
    %3520 = vmatprep.subr.mxu0 0.0
    %3521 = vmatpush1.msra.mxu0 0.0
    %3522 = vmatprep.subr.mxu0 0.0
    %3523 = vmatpush1.msra.mxu0 0.0
    %3524 = vmatprep.subr.mxu0 0.0
    %3525 = vmatpush1.msra.mxu0 0.0
    %3526 = vmatprep.subr.mxu0 0.0
    %3527 = vmatpush1.msra.mxu0 0.0
    %3528 = vmatprep.subr.mxu0 0.0
    %3529 = vmatpush1.msra.mxu0 0.0
    %3530 = vmatprep.subr.mxu0 0.0
    %3531 = vmatpush1.msra.mxu0 0.0
    %3532 = vmatprep.subr.mxu0 0.0
    %3533 = vmatpush1.msra.mxu0 0.0
    %3534 = vmatprep.subr.mxu0 0.0
    %3535 = vmatpush1.msra.mxu0 0.0
    %3536 = vmatprep.subr.mxu0 0.0
    %3537 = vmatpush1.msra.mxu0 0.0
    %3538 = vmatprep.subr.mxu0 0.0
    %3539 = vmatpush1.msra.mxu0 0.0
    %3540 = vmatprep.subr.mxu0 0.0
    %3541 = vmatpush1.msra.mxu0 0.0
    %3542 = vmatprep.subr.mxu0 0.0
    %3543 = vmatpush1.msra.mxu0 0.0
    %3544 = vmatprep.subr.mxu0 0.0
    %3545 = vmatpush1.msra.mxu0 0.0
    %3546 = vmatprep.subr.mxu0 0.0
    %3547 = vmatpush1.msra.mxu0 0.0
    %3548 = vmatprep.subr.mxu0 0.0
    %3549 = vmatpush1.msra.mxu0 0.0
    %3550 = vmatprep.subr.mxu0 0.0
    %3551 = vmatpush1.msra.mxu0 0.0
    %3552 = vmatprep.subr.mxu0 0.0
    %3553 = vmatpush1.msra.mxu0 0.0
    %3554 = vmatprep.subr.mxu0 0.0
    %3555 = vmatpush1.msra.mxu0 0.0
    %3556 = vmatprep.mubr.f32.mxu0 0.0
    %3557 = vmatmul.mubr.f32.gmra.mrb[0].mxu0 %v3490
    %v3558 = vpop.f32.mrb[0].mxu0
    %v3559 = vadd.f32 %v2376, %v3558
    %v3560 = vpop.f32.mrb[0].mxu0
    %3561 = vdwg.mxu0
    %v3562 = vtanh.pop %v3559
    %v3563 = vmul.f32 %v3562, %v2458
    %v3564 = vsel %vm332, %v3563, 0.0
    %3565 = vadd.xlane.f32.xlu0 %v3564
    %v3566 = vpop.xlane.xlu0 %3565
    %3567 = vmatprep.subr.mxu0 %v2252
    %3568 = vmatpush1.msra.mxu0 %v2251
    %3569 = vmatprep.subr.mxu0 %v2254
    %3570 = vmatpush1.msra.mxu0 %v2253
    %3571 = vmatprep.subr.mxu0 %v2256
    %3572 = vmatpush1.msra.mxu0 %v2255
    %3573 = vmatprep.subr.mxu0 %v2258
    %3574 = vmatpush1.msra.mxu0 %v2257
    %3575 = vmatprep.subr.mxu0 %v2260
    %3576 = vmatpush1.msra.mxu0 %v2259
    %3577 = vmatprep.subr.mxu0 %v2262
    %3578 = vmatpush1.msra.mxu0 %v2261
    %3579 = vmatprep.subr.mxu0 %v2264
    %3580 = vmatpush1.msra.mxu0 %v2263
    %3581 = vmatprep.subr.mxu0 %v2266
    %3582 = vmatpush1.msra.mxu0 %v2265
    %3583 = vmatprep.subr.mxu0 0.0
    %3584 = vmatpush1.msra.mxu0 0.0
    %3585 = vmatprep.subr.mxu0 0.0
    %3586 = vmatpush1.msra.mxu0 0.0
    %3587 = vmatprep.subr.mxu0 0.0
    %3588 = vmatpush1.msra.mxu0 0.0
    %3589 = vmatprep.subr.mxu0 0.0
    %3590 = vmatpush1.msra.mxu0 0.0
    %3591 = vmatprep.subr.mxu0 0.0
    %3592 = vmatpush1.msra.mxu0 0.0
    %3593 = vmatprep.subr.mxu0 0.0
    %3594 = vmatpush1.msra.mxu0 0.0
    %3595 = vmatprep.subr.mxu0 0.0
    %3596 = vmatpush1.msra.mxu0 0.0
    %3597 = vmatprep.subr.mxu0 0.0
    %3598 = vmatpush1.msra.mxu0 0.0
    %3599 = vmatprep.subr.mxu0 0.0
    %3600 = vmatpush1.msra.mxu0 0.0
    %3601 = vmatprep.subr.mxu0 0.0
    %3602 = vmatpush1.msra.mxu0 0.0
    %3603 = vmatprep.subr.mxu0 0.0
    %3604 = vmatpush1.msra.mxu0 0.0
    %3605 = vmatprep.subr.mxu0 0.0
    %3606 = vmatpush1.msra.mxu0 0.0
    %3607 = vmatprep.subr.mxu0 0.0
    %3608 = vmatpush1.msra.mxu0 0.0
    %3609 = vmatprep.subr.mxu0 0.0
    %3610 = vmatpush1.msra.mxu0 0.0
    %3611 = vmatprep.subr.mxu0 0.0
    %3612 = vmatpush1.msra.mxu0 0.0
    %3613 = vmatprep.subr.mxu0 0.0
    %3614 = vmatpush1.msra.mxu0 0.0
    %3615 = vmatprep.subr.mxu0 0.0
    %3616 = vmatpush1.msra.mxu0 0.0
    %3617 = vmatprep.subr.mxu0 0.0
    %3618 = vmatpush1.msra.mxu0 0.0
    %3619 = vmatprep.subr.mxu0 0.0
    %3620 = vmatpush1.msra.mxu0 0.0
    %3621 = vmatprep.subr.mxu0 0.0
    %3622 = vmatpush1.msra.mxu0 0.0
    %3623 = vmatprep.subr.mxu0 0.0
    %3624 = vmatpush1.msra.mxu0 0.0
    %3625 = vmatprep.subr.mxu0 0.0
    %3626 = vmatpush1.msra.mxu0 0.0
    %3627 = vmatprep.subr.mxu0 0.0
    %3628 = vmatpush1.msra.mxu0 0.0
    %3629 = vmatprep.subr.mxu0 0.0
    %3630 = vmatpush1.msra.mxu0 0.0
    %3631 = vmatprep.mubr.f32.mxu0 0.0
    %3632 = vmatmul.mubr.f32.gmra.mrb[0].mxu0 %v3490
    %v3633 = vpop.f32.mrb[0].mxu0
    %v3634 = vadd.f32 0.0, %v3633
    %v3635 = vpop.f32.mrb[0].mxu0
    %v3636 = vadd.f32 0.0, %v3635
    %3637 = vdwg.mxu0
    %v3640 = vrot.slane %v3634, 2
    %v3641 = vrot.slane %v3636, 2
    %v3644 = vadd.f32 %v2247, %v3640
    %v3645 = vadd.f32 %v2249, %v3641
    %v3646 = vxor.u32 %v3644, 2147483648
    %v3647 = vmul.f32 %v3646, 1.442695
    %v3648 = vpow.pop %v3647
    %v3649 = vadd.f32 %v3648, 1.0
    %v3650 = vrcp.pop %v3649
    %v3651 = vmul.f32 1.0, %v3650
    %v3652 = vtanh.pop %v3645
    %v3653 = vxor.u32 %v3645, 2147483648
    %v3654 = vmul.f32 %v3653, 1.442695
    %v3655 = vpow.pop %v3654
    %v3656 = vadd.f32 %v3655, 1.0
    %v3657 = vrcp.pop %v3656
    %v3658 = vmul.f32 1.0, %v3657
    %v3660 = vrot.slane %v3483, 6
    %v3662 = vmul.f32 %v3651, %v3660
    %v3663 = vmul.f32 %v3651, %v3652
    %3665 = vrot.lane.b32.xlu0 %v3663, 64
    %v3666 = vpop.permute.xlu0 %3665
    %v3668 = vadd.f32 %v3662, %v3666
    %v3669 = vtanh.pop %v3668
    %v3670 = vmul.f32 %v3658, %v3669
    %v3672 = vrot.slane %v3670, 6
    %3673 = vrot.lane.b32.xlu0 %v3672, 64
    %v3674 = vpop.permute.xlu0 %3673
    %v3675 = vsel %vm229, %v3674, 0
    %3677 = vmatprep.subr.mxu0 0.0
    %3678 = vmatpush1.msra.mxu0 %v2267
    %3679 = vmatprep.subr.mxu0 0.0
    %3680 = vmatpush1.msra.mxu0 %v2268
    %3681 = vmatprep.subr.mxu0 0.0
    %3682 = vmatpush1.msra.mxu0 %v2269
    %3683 = vmatprep.subr.mxu0 0.0
    %3684 = vmatpush1.msra.mxu0 %v2270
    %3685 = vmatprep.subr.mxu0 0.0
    %3686 = vmatpush1.msra.mxu0 %v2271
    %3687 = vmatprep.subr.mxu0 0.0
    %3688 = vmatpush1.msra.mxu0 %v2272
    %3689 = vmatprep.subr.mxu0 0.0
    %3690 = vmatpush1.msra.mxu0 %v2273
    %3691 = vmatprep.subr.mxu0 0.0
    %3692 = vmatpush1.msra.mxu0 %v2274
    %3693 = vmatprep.subr.mxu0 0.0
    %3694 = vmatpush1.msra.mxu0 0.0
    %3695 = vmatprep.subr.mxu0 0.0
    %3696 = vmatpush1.msra.mxu0 0.0
    %3697 = vmatprep.subr.mxu0 0.0
    %3698 = vmatpush1.msra.mxu0 0.0
    %3699 = vmatprep.subr.mxu0 0.0
    %3700 = vmatpush1.msra.mxu0 0.0
    %3701 = vmatprep.subr.mxu0 0.0
    %3702 = vmatpush1.msra.mxu0 0.0
    %3703 = vmatprep.subr.mxu0 0.0
    %3704 = vmatpush1.msra.mxu0 0.0
    %3705 = vmatprep.subr.mxu0 0.0
    %3706 = vmatpush1.msra.mxu0 0.0
    %3707 = vmatprep.subr.mxu0 0.0
    %3708 = vmatpush1.msra.mxu0 0.0
    %3709 = vmatprep.subr.mxu0 0.0
    %3710 = vmatpush1.msra.mxu0 0.0
    %3711 = vmatprep.subr.mxu0 0.0
    %3712 = vmatpush1.msra.mxu0 0.0
    %3713 = vmatprep.subr.mxu0 0.0
    %3714 = vmatpush1.msra.mxu0 0.0
    %3715 = vmatprep.subr.mxu0 0.0
    %3716 = vmatpush1.msra.mxu0 0.0
    %3717 = vmatprep.subr.mxu0 0.0
    %3718 = vmatpush1.msra.mxu0 0.0
    %3719 = vmatprep.subr.mxu0 0.0
    %3720 = vmatpush1.msra.mxu0 0.0
    %3721 = vmatprep.subr.mxu0 0.0
    %3722 = vmatpush1.msra.mxu0 0.0
    %3723 = vmatprep.subr.mxu0 0.0
    %3724 = vmatpush1.msra.mxu0 0.0
    %3725 = vmatprep.subr.mxu0 0.0
    %3726 = vmatpush1.msra.mxu0 0.0
    %3727 = vmatprep.subr.mxu0 0.0
    %3728 = vmatpush1.msra.mxu0 0.0
    %3729 = vmatprep.subr.mxu0 0.0
    %3730 = vmatpush1.msra.mxu0 0.0
    %3731 = vmatprep.subr.mxu0 0.0
    %3732 = vmatpush1.msra.mxu0 0.0
    %3733 = vmatprep.subr.mxu0 0.0
    %3734 = vmatpush1.msra.mxu0 0.0
    %3735 = vmatprep.subr.mxu0 0.0
    %3736 = vmatpush1.msra.mxu0 0.0
    %3737 = vmatprep.subr.mxu0 0.0
    %3738 = vmatpush1.msra.mxu0 0.0
    %3739 = vmatprep.subr.mxu0 0.0
    %3740 = vmatpush1.msra.mxu0 0.0
    %3741 = vmatprep.mubr.f32.mxu0 0.0
    %3742 = vmatmul.mubr.f32.gmra.mrb[0].mxu0 %v3675
    %v3743 = vpop.f32.mrb[0].mxu0
    %v3744 = vadd.f32 %v2376, %v3743
    %v3745 = vpop.f32.mrb[0].mxu0
    %3746 = vdwg.mxu0
    %v3747 = vtanh.pop %v3744
    %v3748 = vmul.f32 %v3747, %v2458
    %v3749 = vsel %vm332, %v3748, 0.0
    %3750 = vadd.xlane.f32.xlu0 %v3749
    %v3751 = vpop.xlane.xlu0 %3750
    %v3752 = vmax.f32 %v2463, %v2648
    %v3753 = vmax.f32 %v3752, %v2833
    %v3754 = vmax.f32 %v3753, %v3018
    %v3755 = vmax.f32 %v3754, %v3196
    %v3756 = vmax.f32 %v3755, %v3381
    %v3757 = vmax.f32 %v3756, %v3566
    %v3758 = vmax.f32 %v3757, %v3751
    %v3759 = vsub.f32 %v2463, %v3758
    %v3760 = vmul.f32 %v3759, 1.442695
    %v3761 = vpow.pop %v3760
    %v3762 = vadd.f32 %v3761, 0.0
    %v3763 = vmul.f32 %v3761, %v2371
    %v3764 = vadd.f32 %v3763, 0.0
    %v3765 = vsub.f32 %v2648, %v3758
    %v3766 = vmul.f32 %v3765, 1.442695
    %v3767 = vpow.pop %v3766
    %v3768 = vadd.f32 %v3762, %v3767
    %v3770 = vmul.f32 %v3767, %v2571
    %3772 = vrot.lane.b32.xlu0 %v3770, 64
    %v3773 = vpop.permute.xlu0 %3772
    %v3775 = vadd.f32 %v3764, %v3773
    %v3776 = vsub.f32 %v2833, %v3758
    %v3777 = vmul.f32 %v3776, 1.442695
    %v3778 = vpow.pop %v3777
    %v3779 = vadd.f32 %v3768, %v3778
    %v3781 = vmul.f32 %v3778, %v2756
    %3783 = vrot.lane.b32.xlu0 %v3781, 64
    %v3784 = vpop.permute.xlu0 %3783
    %v3786 = vadd.f32 %v3775, %v3784
    %v3787 = vsub.f32 %v3018, %v3758
    %v3788 = vmul.f32 %v3787, 1.442695
    %v3789 = vpow.pop %v3788
    %v3790 = vadd.f32 %v3779, %v3789
    %v3792 = vmul.f32 %v3789, %v2941
    %3794 = vrot.lane.b32.xlu0 %v3792, 64
    %v3795 = vpop.permute.xlu0 %3794
    %v3797 = vadd.f32 %v3786, %v3795
    %v3798 = vsub.f32 %v3196, %v3758
    %v3799 = vmul.f32 %v3798, 1.442695
    %v3800 = vpow.pop %v3799
    %v3801 = vadd.f32 %v3790, %v3800
    %v3802 = vmul.f32 %v3800, %v3116
    %v3803 = vadd.f32 %v3797, %v3802
    %v3804 = vsub.f32 %v3381, %v3758
    %v3805 = vmul.f32 %v3804, 1.442695
    %v3806 = vpow.pop %v3805
    %v3807 = vadd.f32 %v3801, %v3806
    %v3809 = vmul.f32 %v3806, %v3304
    %3811 = vrot.lane.b32.xlu0 %v3809, 64
    %v3812 = vpop.permute.xlu0 %3811
    %v3814 = vadd.f32 %v3803, %v3812
    %v3815 = vsub.f32 %v3566, %v3758
    %v3816 = vmul.f32 %v3815, 1.442695
    %v3817 = vpow.pop %v3816
    %v3818 = vadd.f32 %v3807, %v3817
    %v3820 = vmul.f32 %v3817, %v3489
    %3822 = vrot.lane.b32.xlu0 %v3820, 64
    %v3823 = vpop.permute.xlu0 %3822
    %v3825 = vadd.f32 %v3814, %v3823
    %v3826 = vsub.f32 %v3751, %v3758
    %v3827 = vmul.f32 %v3826, 1.442695
    %v3828 = vpow.pop %v3827
    %v3829 = vadd.f32 %v3818, %v3828
    %v3831 = vmul.f32 %v3828, %v3674
    %3833 = vrot.lane.b32.xlu0 %v3831, 64
    %v3834 = vpop.permute.xlu0 %3833
    %v3836 = vadd.f32 %v3825, %v3834
    %v3837 = vrcp.pop %v3829
    %v3838 = vmul.f32 %v3836, %v3837
    %v3839 = vld [vmem:[%s13] sm:$0xff]
    %v3840 = vld [vmem:[%s13 + $0x8] sm:$0xff]
    %v3841 = vld [vmem:[%s13 + $0x10] sm:$0xff]
    %v3842 = vld [vmem:[%s13 + $0x18] sm:$0xff]
    %v3843 = vld [vmem:[%s13 + $0x20] sm:$0xff]
    %v3844 = vld [vmem:[%s13 + $0x28] sm:$0xff]
    %v3845 = vld [vmem:[%s13 + $0x30] sm:$0xff]
    %v3846 = vld [vmem:[%s13 + $0x38] sm:$0xff]
    %v3847 = vld [vmem:[%s14] sm:$0x1]
    %v3849 = vlaneseq
    %v3850 = vshrl.u32 %v3849, 7
    %v3851 = vsub.s32 0, %v3850
    %v3852 = vrot.slane %v3847, %v3851
    %3855 = vrot.lane.b32.xlu0 %v3838, 64
    %v3856 = vpop.permute.xlu0 %3855
    %v3857 = vsel %vm229, %v3856, 0
    %3859 = vmatprep.subr.mxu0 0.0
    %3860 = vmatpush1.msra.mxu0 %v3839
    %3861 = vmatprep.subr.mxu0 0.0
    %3862 = vmatpush1.msra.mxu0 %v3840
    %3863 = vmatprep.subr.mxu0 0.0
    %3864 = vmatpush1.msra.mxu0 %v3841
    %3865 = vmatprep.subr.mxu0 0.0
    %3866 = vmatpush1.msra.mxu0 %v3842
    %3867 = vmatprep.subr.mxu0 0.0
    %3868 = vmatpush1.msra.mxu0 %v3843
    %3869 = vmatprep.subr.mxu0 0.0
    %3870 = vmatpush1.msra.mxu0 %v3844
    %3871 = vmatprep.subr.mxu0 0.0
    %3872 = vmatpush1.msra.mxu0 %v3845
    %3873 = vmatprep.subr.mxu0 0.0
    %3874 = vmatpush1.msra.mxu0 %v3846
    %3875 = vmatprep.subr.mxu0 0.0
    %3876 = vmatpush1.msra.mxu0 0.0
    %3877 = vmatprep.subr.mxu0 0.0
    %3878 = vmatpush1.msra.mxu0 0.0
    %3879 = vmatprep.subr.mxu0 0.0
    %3880 = vmatpush1.msra.mxu0 0.0
    %3881 = vmatprep.subr.mxu0 0.0
    %3882 = vmatpush1.msra.mxu0 0.0
    %3883 = vmatprep.subr.mxu0 0.0
    %3884 = vmatpush1.msra.mxu0 0.0
    %3885 = vmatprep.subr.mxu0 0.0
    %3886 = vmatpush1.msra.mxu0 0.0
    %3887 = vmatprep.subr.mxu0 0.0
    %3888 = vmatpush1.msra.mxu0 0.0
    %3889 = vmatprep.subr.mxu0 0.0
    %3890 = vmatpush1.msra.mxu0 0.0
    %3891 = vmatprep.subr.mxu0 0.0
    %3892 = vmatpush1.msra.mxu0 0.0
    %3893 = vmatprep.subr.mxu0 0.0
    %3894 = vmatpush1.msra.mxu0 0.0
    %3895 = vmatprep.subr.mxu0 0.0
    %3896 = vmatpush1.msra.mxu0 0.0
    %3897 = vmatprep.subr.mxu0 0.0
    %3898 = vmatpush1.msra.mxu0 0.0
    %3899 = vmatprep.subr.mxu0 0.0
    %3900 = vmatpush1.msra.mxu0 0.0
    %3901 = vmatprep.subr.mxu0 0.0
    %3902 = vmatpush1.msra.mxu0 0.0
    %3903 = vmatprep.subr.mxu0 0.0
    %3904 = vmatpush1.msra.mxu0 0.0
    %3905 = vmatprep.subr.mxu0 0.0
    %3906 = vmatpush1.msra.mxu0 0.0
    %3907 = vmatprep.subr.mxu0 0.0
    %3908 = vmatpush1.msra.mxu0 0.0
    %3909 = vmatprep.subr.mxu0 0.0
    %3910 = vmatpush1.msra.mxu0 0.0
    %3911 = vmatprep.subr.mxu0 0.0
    %3912 = vmatpush1.msra.mxu0 0.0
    %3913 = vmatprep.subr.mxu0 0.0
    %3914 = vmatpush1.msra.mxu0 0.0
    %3915 = vmatprep.subr.mxu0 0.0
    %3916 = vmatpush1.msra.mxu0 0.0
    %3917 = vmatprep.subr.mxu0 0.0
    %3918 = vmatpush1.msra.mxu0 0.0
    %3919 = vmatprep.subr.mxu0 0.0
    %3920 = vmatpush1.msra.mxu0 0.0
    %3921 = vmatprep.subr.mxu0 0.0
    %3922 = vmatpush1.msra.mxu0 0.0
    %3923 = vmatprep.mubr.f32.mxu0 0.0
    %3924 = vmatmul.mubr.f32.gmra.mrb[0].mxu0 %v3857
    %v3925 = vpop.f32.mrb[0].mxu0
    %v3926 = vadd.f32 %v3852, %v3925
    %v3927 = vpop.f32.mrb[0].mxu0
    %3928 = vdwg.mxu0
    %v3929 = vmax.f32 %v3926, 0.0
    %v3930 = vld [vmem:[%s15] sm:$0xff]
    %v3931 = vld [vmem:[%s15 + $0x8] sm:$0xff]
    %v3932 = vld [vmem:[%s15 + $0x10] sm:$0xff]
    %v3933 = vld [vmem:[%s15 + $0x18] sm:$0xff]
    %v3934 = vld [vmem:[#allocation3] sm:$0x1]
    %v3936 = vlaneseq
    %v3937 = vshrl.u32 %v3936, 7
    %v3938 = vsub.s32 0, %v3937
    %v3939 = vrot.slane %v3934, %v3938
    %vm3941 = vcmask 261120
    %v3943 = vsel %vm3941, %v3929, 0
    %3945 = vmatprep.subr.mxu0 0.0
    %3946 = vmatpush1.msra.mxu0 %v3930
    %3947 = vmatprep.subr.mxu0 0.0
    %3948 = vmatpush1.msra.mxu0 %v3931
    %3949 = vmatprep.subr.mxu0 0.0
    %3950 = vmatpush1.msra.mxu0 %v3932
    %3951 = vmatprep.subr.mxu0 0.0
    %3952 = vmatpush1.msra.mxu0 %v3933
    %3953 = vmatprep.subr.mxu0 0.0
    %3954 = vmatpush1.msra.mxu0 0.0
    %3955 = vmatprep.subr.mxu0 0.0
    %3956 = vmatpush1.msra.mxu0 0.0
    %3957 = vmatprep.subr.mxu0 0.0
    %3958 = vmatpush1.msra.mxu0 0.0
    %3959 = vmatprep.subr.mxu0 0.0
    %3960 = vmatpush1.msra.mxu0 0.0
    %3961 = vmatprep.subr.mxu0 0.0
    %3962 = vmatpush1.msra.mxu0 0.0
    %3963 = vmatprep.subr.mxu0 0.0
    %3964 = vmatpush1.msra.mxu0 0.0
    %3965 = vmatprep.subr.mxu0 0.0
    %3966 = vmatpush1.msra.mxu0 0.0
    %3967 = vmatprep.subr.mxu0 0.0
    %3968 = vmatpush1.msra.mxu0 0.0
    %3969 = vmatprep.subr.mxu0 0.0
    %3970 = vmatpush1.msra.mxu0 0.0
    %3971 = vmatprep.subr.mxu0 0.0
    %3972 = vmatpush1.msra.mxu0 0.0
    %3973 = vmatprep.subr.mxu0 0.0
    %3974 = vmatpush1.msra.mxu0 0.0
    %3975 = vmatprep.subr.mxu0 0.0
    %3976 = vmatpush1.msra.mxu0 0.0
    %3977 = vmatprep.subr.mxu0 0.0
    %3978 = vmatpush1.msra.mxu0 0.0
    %3979 = vmatprep.subr.mxu0 0.0
    %3980 = vmatpush1.msra.mxu0 0.0
    %3981 = vmatprep.subr.mxu0 0.0
    %3982 = vmatpush1.msra.mxu0 0.0
    %3983 = vmatprep.subr.mxu0 0.0
    %3984 = vmatpush1.msra.mxu0 0.0
    %3985 = vmatprep.subr.mxu0 0.0
    %3986 = vmatpush1.msra.mxu0 0.0
    %3987 = vmatprep.subr.mxu0 0.0
    %3988 = vmatpush1.msra.mxu0 0.0
    %3989 = vmatprep.subr.mxu0 0.0
    %3990 = vmatpush1.msra.mxu0 0.0
    %3991 = vmatprep.subr.mxu0 0.0
    %3992 = vmatpush1.msra.mxu0 0.0
    %3993 = vmatprep.subr.mxu0 0.0
    %3994 = vmatpush1.msra.mxu0 0.0
    %3995 = vmatprep.subr.mxu0 0.0
    %3996 = vmatpush1.msra.mxu0 0.0
    %3997 = vmatprep.subr.mxu0 0.0
    %3998 = vmatpush1.msra.mxu0 0.0
    %3999 = vmatprep.subr.mxu0 0.0
    %4000 = vmatpush1.msra.mxu0 0.0
    %4001 = vmatprep.subr.mxu0 0.0
    %4002 = vmatpush1.msra.mxu0 0.0
    %4003 = vmatprep.subr.mxu0 0.0
    %4004 = vmatpush1.msra.mxu0 0.0
    %4005 = vmatprep.subr.mxu0 0.0
    %4006 = vmatpush1.msra.mxu0 0.0
    %4007 = vmatprep.subr.mxu0 0.0
    %4008 = vmatpush1.msra.mxu0 0.0
    %4009 = vmatprep.mubr.f32.mxu0 0.0
    %4010 = vmatmul.mubr.f32.gmra.mrb[0].mxu0 %v3943
    %v4011 = vpop.f32.mrb[0].mxu0
    %v4012 = vadd.f32 %v3939, %v4011
    %v4013 = vpop.f32.mrb[0].mxu0
    %4014 = vdwg.mxu0
    %vm4015 = vcmask 1024
    %4016 = vst.msk [vmem:[%s17] sm:$0x3] %vm4015, %v4012
    // Predicated region
    $region86: #{rnn_forward.1} parent=1 // pred_check
      _
    $region87: #{rnn_forward.1} parent=1 // pred_check_branch
      %4018 = sbr.rel (0) target = $region89
    $region88: #{rnn_forward.1} parent=1 // pred_region
      _
    $region89: #{rnn_forward.1} parent=1 // pred_fallthru
      _
    // Predicated region
    $region90: #{rnn_forward.1} parent=1 // pred_check
      _
    $region91: #{rnn_forward.1} parent=1 // pred_check_branch
      %4020 = sbr.rel (0) target = $region93
    $region92: #{rnn_forward.1} parent=1 // pred_region
      _
    $region93: #{rnn_forward.1} parent=1 // pred_fallthru
      _
    %4021 = vsyncpa [#allocation5], 1
    %4022 = vsyncpa [#allocation7], 1
    %4023 = vsyncpa [#allocation10], 1

</llo_original>
